<compile_context>
chip_gen: v6e
topology: v6e:2x2x1
jax: 0.10.0
libtpu: 0.0.40
codegen_flags: <defaults>
</compile_context>

<pallas_src>
import functools
import math

import jax
import jax.numpy as jnp
from jax import lax
from jax.experimental import pallas as pl
from jax.experimental.pallas import tpu as pltpu


def _round_up(x, m):
    return ((x + m - 1) // m) * m


# -----------------------------------------------------------------------------
# Fused Pallas kernel (per batch b, per pixel tile t):
#   * bilinear grid_sample (align_corners=False, padding='zeros') expressed as a
#     lane-dense one-hot weight matrix (HW, TP) built with 4 select-adds and
#     contracted on the MXU against the bf16 texture (C=6, HW) -> (6, TP), f32 acc.
#   * SH lighting: 9 scalar-broadcast FMAs per colour channel, 27 pre-scaled
#     coefficients read from SMEM (no lane-sparse (9,3) block, no K=9 matmul).
#   * outputs: images = albedo * shading * alpha, albedo_images,
#              mask_images = (mask_sample * alpha > 0) as f32.
# -----------------------------------------------------------------------------
def _render_fused_kernel(coeff_ref, grid_ref, tex_ref, n_ref, alpha_ref,
                         img_ref, alb_ref, mskthr_ref, *, hin, win):
    b = pl.program_id(0)
    tp = grid_ref.shape[2]
    hw = hin * win

    # ---- bilinear gather weights (everything (1, TP): P on lanes) ----
    gx = grid_ref[0, 0:1, :]                        # normalized x in [-1, 1]
    gy = grid_ref[0, 1:2, :]                        # normalized y in [-1, 1]
    ix = ((gx + 1.0) * win - 1.0) * 0.5             # align_corners=False unnormalize
    iy = ((gy + 1.0) * hin - 1.0) * 0.5
    ix0 = jnp.floor(ix)
    iy0 = jnp.floor(iy)

    col = lax.broadcasted_iota(jnp.int32, (hw, tp), 0)   # flat texel index per row
    wmat = None
    for dy in (0, 1):
        for dx in (0, 1):
            xc = ix0 + dx
            yc = iy0 + dy
            w = (1.0 - jnp.abs(ix - xc)) * (1.0 - jnp.abs(iy - yc))        # (1, TP)
            valid = (xc >= 0) & (xc <= win - 1) & (yc >= 0) & (yc <= hin - 1)
            w = jnp.where(valid, w, 0.0)                                    # zeros pad
            xi = jnp.clip(xc, 0, win - 1).astype(jnp.int32)
            yi = jnp.clip(yc, 0, hin - 1).astype(jnp.int32)
            idx = yi * win + xi                                             # (1, TP)
            tap = jnp.where(col == idx, w, 0.0)                             # (HW, TP)
            wmat = tap if wmat is None else wmat + tap
    # TODO(synk): for very large textures a separable (Hin,P)/(Win,P) formulation
    # would shrink the resident weights from P*HW to P*(Hin+Win) (v7x VMEM).

    # ---- MXU gather: (6, HW) @ (HW, TP) -> (6, TP), bf16 in / f32 accumulate ----
    tex = tex_ref[0]                                                        # bf16
    sampled = lax.dot_general(tex, wmat.astype(jnp.bfloat16),
                              dimension_numbers=(((1,), (0,)), ((), ())),
                              preferred_element_type=jnp.float32)           # (6, TP)
    albedo = sampled[0:3, :]
    mask_s = sampled[3:6, :]

    # ---- SH lighting (coefficients from SMEM) + composite + threshold ----
    n0 = n_ref[0, 0:1, :]
    n1 = n_ref[0, 1:2, :]
    n2 = n_ref[0, 2:3, :]
    basis = (jnp.ones_like(n0), n0, n1, n2, n0 * n1, n0 * n2, n1 * n2,
             n0 * n0 - n1 * n1, 3.0 * n2 * n2 - 1.0)
    alpha = alpha_ref[0]                                                    # (1, TP)
    for c in range(3):
        sh = basis[0] * coeff_ref[b, c]
        for k in range(1, 9):
            sh = sh + basis[k] * coeff_ref[b, k * 3 + c]
        img_ref[0, c:c + 1, :] = albedo[c:c + 1, :] * sh * alpha
    alb_ref[0] = albedo
    mskthr_ref[0] = ((mask_s * alpha) > 0).astype(jnp.float32)


def pallas_sample_shade_compose(tex6, grid2, normals, alpha, coeff27, *,
                                hin, win, tile_p=512):
    """tex6: (B, 6, Hin*Win) bf16 (albedo||mask); grid2: (B, 2, P); normals: (B, 3, P);
       alpha: (B, 1, P); coeff27: (B, 27) f32 (SH coeffs pre-scaled by constant_factor)."""
    B, C6, HW = tex6.shape
    P = grid2.shape[2]

    tp = min(_round_up(tile_p, 128), _round_up(P, 128))   # pixel tile, multiple of 128
    p_pad = _round_up(P, tp)
    if p_pad != P:
        pad = p_pad - P
        grid2 = jnp.pad(grid2, ((0, 0), (0, 0), (0, pad)), constant_values=-2.0)
        normals = jnp.pad(normals, ((0, 0), (0, 0), (0, pad)))
        alpha = jnp.pad(alpha, ((0, 0), (0, 0), (0, pad)))
    n_tiles = p_pad // tp

    out_sds = jax.ShapeDtypeStruct((B, 3, p_pad), jnp.float32)

    def px_spec(c):
        return pl.BlockSpec((1, c, tp), lambda b, t: (b, 0, t))

    img, alb, msk = pl.pallas_call(
        functools.partial(_render_fused_kernel, hin=hin, win=win),
        out_shape=(out_sds, out_sds, out_sds),
        grid=(B, n_tiles),
        in_specs=[
            pl.BlockSpec(memory_space=pltpu.SMEM),               # coeff27, whole array
            px_spec(2),                                          # grid (lane-dense)
            pl.BlockSpec((1, C6, HW), lambda b, t: (b, 0, 0)),   # texture, resident/batch
            px_spec(3),                                          # normals
            px_spec(1),                                          # alpha
        ],
        out_specs=(px_spec(3), px_spec(3), px_spec(3)),
        compiler_params=pltpu.CompilerParams(
            dimension_semantics=("parallel", "parallel"),
            vmem_limit_bytes=64 * 1024 * 1024),
    )(coeff27, grid2, tex6, normals, alpha)
    return img[:, :, :P], alb[:, :, :P], msk[:, :, :P]


# -----------------------------------------------------------------------------
# Renderer forward pass. Rasterization (pytorch3d) is replaced by a deterministic
# stand-in; everything downstream (grid_sample, SH shading, compositing, mask
# threshold) runs in the fused Pallas kernel; the trivial (x > 0) thresholds of
# already-rasterized masks are left to XLA fusion (no extra HBM round-trip).
# -----------------------------------------------------------------------------
class RendererPallas:
    def __init__(self, image_size, uv_size=32):
        self.image_size = image_size
        self.uv_size = uv_size
        pi = math.pi
        self.constant_factor = jnp.array(
            [1.0 / math.sqrt(4 * pi),
             2 * pi / 3 * math.sqrt(3 / (4 * pi)),
             2 * pi / 3 * math.sqrt(3 / (4 * pi)),
             2 * pi / 3 * math.sqrt(3 / (4 * pi)),
             pi / 4 * 3 * math.sqrt(5 / (12 * pi)),
             pi / 4 * 3 * math.sqrt(5 / (12 * pi)),
             pi / 4 * 3 * math.sqrt(5 / (12 * pi)),
             pi / 4 * (3 / 2) * math.sqrt(5 / (12 * pi)),
             pi / 4 * (1 / 2) * math.sqrt(5 / (4 * pi))], dtype=jnp.float32)
        # TODO(synk): obj mesh loading + uv_mask_eyes.png (2048^2) have no in-script
        # equivalent; a deterministic synthetic eye-mask texture at uv_size stands in
        # (same resolution as the albedo so both share one fused gather).
        ys = jnp.linspace(-1.0, 1.0, uv_size)
        xs = jnp.linspace(-1.0, 1.0, uv_size)
        yy, xx = jnp.meshgrid(ys, xs, indexing="ij")
        m = (jnp.sqrt(xx ** 2 + yy ** 2) < 0.75).astype(jnp.float32)
        self.mask = jnp.broadcast_to(m[None], (3, uv_size, uv_size))

    def _rasterize_standin(self, vertices_world):
        # TODO(synk): pytorch3d Meshes / TrackerRasterizer (camera transform +
        # z-buffered triangle rasterization) has no clean Pallas equivalent; this
        # deterministic stand-in produces the 28-channel attribute image + zbuffer.
        H = W = self.image_size
        ys = jnp.linspace(-1.0, 1.0, H)
        xs = jnp.linspace(-1.0, 1.0, W)
        yy, xx = jnp.meshgrid(ys, xs, indexing="ij")
        off = jnp.tanh(jnp.mean(vertices_world, axis=1))        # (B, 3)

        def per_batch(o):
            u = jnp.clip(xx + 0.1 * o[0], -1.0, 1.0)
            v = jnp.clip(yy + 0.1 * o[1], -1.0, 1.0)
            depth = 0.5 + 0.25 * (xx ** 2 + yy ** 2) + 0.05 * o[2]
            uvc = jnp.stack([u, -v, jnp.ones_like(u)], 0)
            ndc = jnp.stack([xx, yy, depth], 0)
            nrm = jnp.stack([0.3 * xx, 0.3 * yy, jnp.ones_like(xx)], 0)
            nrm = nrm / jnp.sqrt(jnp.sum(nrm ** 2, axis=0, keepdims=True))
            r = jnp.sqrt(xx ** 2 + yy ** 2)
            circ = lambda t: jnp.broadcast_to(
                (r < t).astype(jnp.float32)[None], (3, H, W))
            face_mask = circ(0.9)
            render_mask = circ(0.95)
            depth_mask = circ(0.85)
            eyes_region_mask = circ(0.4)
            eyes_mask = circ(0.25)
            view = jnp.stack([2.0 * xx, 2.0 * yy, 4.0 * depth], 0)
            alpha = (r < 1.0).astype(jnp.float32)[None]
            rendering = jnp.concatenate(
                [uvc, ndc, nrm, face_mask, view, render_mask, depth_mask,
                 eyes_region_mask, eyes_mask, alpha], 0)          # (28, H, W)
            zbuf = depth[None] * alpha                             # (1, H, W)
            return rendering, zbuf

        return jax.vmap(per_batch)(off)

    def __call__(self, vertices_world, albedos, lights, cameras=None):
        B = vertices_world.shape[0]
        rendering, zbuffer = self._rasterize_standin(vertices_world)

        uvcoords_images = rendering[:, 0:3]
        ndc_vertices_images = rendering[:, 3:6]
        normal_images = rendering[:, 6:9]
        mask_images_mesh = rendering[:, 9:12]
        view_vertices_images = rendering[:, 12:15]
        mask_images_rendering = rendering[:, 15:18]
        mask_images_depth = rendering[:, 18:21]
        mask_images_eyes_region = rendering[:, 21:24]
        mask_images_eyes = rendering[:, 24:27]
        alpha_images = rendering[:, -1:, :, :]

        H = W = self.image_size
        P = H * W
        Hin = Win = self.uv_size

        # One fused bilinear gather for both textures (identical grid): C = 6, bf16 MXU.
        mask_tex = jnp.broadcast_to(self.mask[None], (B, 3, Hin, Win))
        tex6 = jnp.concatenate([albedos.astype(jnp.float32), mask_tex], axis=1)
        tex6 = tex6.reshape(B, 6, Hin * Win).astype(jnp.bfloat16)

        grid2 = uvcoords_images[:, 0:2].reshape(B, 2, P).astype(jnp.float32)
        normals_f = normal_images.reshape(B, 3, P).astype(jnp.float32)
        alpha_f = alpha_images.reshape(B, 1, P).astype(jnp.float32)
        scaled_coeff = (lights.astype(jnp.float32)
                        * self.constant_factor[None, :, None]).reshape(B, 27)

        images_p, albedo_p, maskthr_p = pallas_sample_shade_compose(
            tex6, grid2, normals_f, alpha_f, scaled_coeff, hin=Hin, win=Win)

        images = images_p.reshape(B, 3, H, W)
        albedo_images = albedo_p.reshape(B, 3, H, W)
        mask_images = maskthr_p.reshape(B, 3, H, W)

        grid = jnp.transpose(uvcoords_images, (0, 2, 3, 1))[..., :2]

        # Trivial (x > 0) thresholds of already-rasterized masks: plain jnp (XLA fuses);
        # a dedicated pallas_call here would only add an HBM round-trip.
        thr = lambda x: (x > 0).astype(jnp.float32)

        outputs = {
            "grid": grid,
            "images": images,
            "albedo_images": albedo_images,
            "alpha_images": alpha_images,
            "mask_images": mask_images,
            "mask_images_mesh": thr(mask_images_mesh),
            "mask_images_rendering": thr(mask_images_rendering),
            "mask_images_depth": thr(mask_images_depth),
            "mask_images_eyes_region": thr(mask_images_eyes_region),
            "mask_images_eyes": thr(mask_images_eyes),
            "position_images": ndc_vertices_images,
            "position_view_images": view_vertices_images,
            "zbuffer": zbuffer,
        }
        return outputs


if __name__ == "__main__":
    key = jax.random.PRNGKey(0)
    k1, k2, k3 = jax.random.split(key, 3)
    B, V = 2, 64
    image_size = 16
    tex_size = 32

    vertices_world = jax.random.normal(k1, (B, V, 3), jnp.float32)
    albedos = jax.random.uniform(k2, (B, 3, tex_size, tex_size), jnp.float32)
    lights = 0.3 * jax.random.normal(k3, (B, 9, 3), jnp.float32)

    renderer = RendererPallas(image_size, uv_size=tex_size)
    outputs = renderer(vertices_world, albedos, lights)
    jax.block_until_ready(outputs)

    assert outputs["images"].shape == (B, 3, image_size, image_size)
    assert outputs["albedo_images"].shape == (B, 3, image_size, image_size)
    assert outputs["mask_images"].shape == (B, 3, image_size, image_size)
    assert outputs["alpha_images"].shape == (B, 1, image_size, image_size)
    assert outputs["grid"].shape == (B, image_size, image_size, 2)
    assert bool(jnp.all(jnp.isfinite(outputs["images"])))
    assert bool(jnp.all(jnp.isfinite(outputs["mask_images"])))
    print("KERNEL_OK")
</pallas_src>

<mosaic_0001>
module attributes {stable_mosaic.version = 11 : i64} {
  func.func @_render_fused_kernel(%arg0: i32, %arg1: i32, %arg2: memref<2x27xf32, #tpu.memory_space<smem>>, %arg3: memref<1x2x256xf32, #tpu.memory_space<vmem>>, %arg4: memref<1x6x1024xbf16, #tpu.memory_space<vmem>>, %arg5: memref<1x3x256xf32, #tpu.memory_space<vmem>>, %arg6: memref<1x1x256xf32, #tpu.memory_space<vmem>>, %arg7: memref<1x3x256xf32, #tpu.memory_space<vmem>>, %arg8: memref<1x3x256xf32, #tpu.memory_space<vmem>>, %arg9: memref<1x3x256xf32, #tpu.memory_space<vmem>>) attributes {dimension_semantics = [#tpu.dimension_semantics<parallel>, #tpu.dimension_semantics<parallel>], iteration_bounds = array<i64: 2, 1>, scalar_prefetch = 0 : i64, scratch_operands = 0 : i64, tpu.core_type = #tpu.core_type<tc>, window_params = [{transform_indices = @transform_0, window_bounds = array<i64: 2, 27>}, {transform_indices = @transform_1, window_bounds = array<i64: 1, 2, 256>}, {transform_indices = @transform_2, window_bounds = array<i64: 1, 6, 1024>}, {transform_indices = @transform_3, window_bounds = array<i64: 1, 3, 256>}, {transform_indices = @transform_4, window_bounds = array<i64: 1, 1, 256>}, {transform_indices = @transform_5, window_bounds = array<i64: 1, 3, 256>}, {transform_indices = @transform_6, window_bounds = array<i64: 1, 3, 256>}, {transform_indices = @transform_7, window_bounds = array<i64: 1, 3, 256>}]} {
    %c0 = arith.constant 0 : index
    %c0_0 = arith.constant 0 : index
    %c0_1 = arith.constant 0 : index
    %0 = vector.load %arg3[%c0, %c0_0, %c0_1] : memref<1x2x256xf32, #tpu.memory_space<vmem>>, vector<1x1x256xf32>
    %1 = vector.shape_cast %0 : vector<1x1x256xf32> to vector<1x256xf32>
    %c0_2 = arith.constant 0 : index
    %c1 = arith.constant 1 : index
    %c0_3 = arith.constant 0 : index
    %2 = vector.load %arg3[%c0_2, %c1, %c0_3] : memref<1x2x256xf32, #tpu.memory_space<vmem>>, vector<1x1x256xf32>
    %3 = vector.shape_cast %2 : vector<1x1x256xf32> to vector<1x256xf32>
    %cst = arith.constant 1.000000e+00 : f32
    %4 = vector.broadcast %cst : f32 to vector<1x256xf32>
    %5 = arith.addf %1, %4 : vector<1x256xf32>
    %cst_4 = arith.constant 3.200000e+01 : f32
    %6 = vector.broadcast %cst_4 : f32 to vector<1x256xf32>
    %7 = arith.mulf %5, %6 : vector<1x256xf32>
    %cst_5 = arith.constant 1.000000e+00 : f32
    %8 = vector.broadcast %cst_5 : f32 to vector<1x256xf32>
    %9 = arith.subf %7, %8 : vector<1x256xf32>
    %cst_6 = arith.constant 5.000000e-01 : f32
    %10 = vector.broadcast %cst_6 : f32 to vector<1x256xf32>
    %11 = arith.mulf %9, %10 : vector<1x256xf32>
    %cst_7 = arith.constant 1.000000e+00 : f32
    %12 = vector.broadcast %cst_7 : f32 to vector<1x256xf32>
    %13 = arith.addf %3, %12 : vector<1x256xf32>
    %cst_8 = arith.constant 3.200000e+01 : f32
    %14 = vector.broadcast %cst_8 : f32 to vector<1x256xf32>
    %15 = arith.mulf %13, %14 : vector<1x256xf32>
    %cst_9 = arith.constant 1.000000e+00 : f32
    %16 = vector.broadcast %cst_9 : f32 to vector<1x256xf32>
    %17 = arith.subf %15, %16 : vector<1x256xf32>
    %cst_10 = arith.constant 5.000000e-01 : f32
    %18 = vector.broadcast %cst_10 : f32 to vector<1x256xf32>
    %19 = arith.mulf %17, %18 : vector<1x256xf32>
    %20 = math.floor %11 : vector<1x256xf32>
    %21 = math.floor %19 : vector<1x256xf32>
    %22 = tpu.iota {dimensions = array<i32: 0>} : vector<1024x256xi32>
    %cst_11 = arith.constant 0.000000e+00 : f32
    %23 = vector.broadcast %cst_11 : f32 to vector<1x256xf32>
    %24 = arith.addf %20, %23 : vector<1x256xf32>
    %cst_12 = arith.constant 0.000000e+00 : f32
    %25 = vector.broadcast %cst_12 : f32 to vector<1x256xf32>
    %26 = arith.addf %21, %25 : vector<1x256xf32>
    %27 = arith.subf %11, %24 : vector<1x256xf32>
    %28 = math.absf %27 : vector<1x256xf32>
    %cst_13 = arith.constant 1.000000e+00 : f32
    %29 = vector.broadcast %cst_13 : f32 to vector<1x256xf32>
    %30 = arith.subf %29, %28 : vector<1x256xf32>
    %31 = arith.subf %19, %26 : vector<1x256xf32>
    %32 = math.absf %31 : vector<1x256xf32>
    %cst_14 = arith.constant 1.000000e+00 : f32
    %33 = vector.broadcast %cst_14 : f32 to vector<1x256xf32>
    %34 = arith.subf %33, %32 : vector<1x256xf32>
    %35 = arith.mulf %30, %34 : vector<1x256xf32>
    %cst_15 = arith.constant 0.000000e+00 : f32
    %36 = vector.broadcast %cst_15 : f32 to vector<1x256xf32>
    %37 = arith.cmpf oge, %24, %36 : vector<1x256xf32>
    %cst_16 = arith.constant 3.100000e+01 : f32
    %38 = vector.broadcast %cst_16 : f32 to vector<1x256xf32>
    %39 = arith.cmpf ole, %24, %38 : vector<1x256xf32>
    %40 = arith.andi %37, %39 : vector<1x256xi1>
    %cst_17 = arith.constant 0.000000e+00 : f32
    %41 = vector.broadcast %cst_17 : f32 to vector<1x256xf32>
    %42 = arith.cmpf oge, %26, %41 : vector<1x256xf32>
    %43 = arith.andi %40, %42 : vector<1x256xi1>
    %cst_18 = arith.constant 3.100000e+01 : f32
    %44 = vector.broadcast %cst_18 : f32 to vector<1x256xf32>
    %45 = arith.cmpf ole, %26, %44 : vector<1x256xf32>
    %46 = arith.andi %43, %45 : vector<1x256xi1>
    %cst_19 = arith.constant 0.000000e+00 : f32
    %47 = vector.broadcast %cst_19 : f32 to vector<1x256xf32>
    %48 = arith.select %46, %35, %47 : vector<1x256xi1>, vector<1x256xf32>
    %c0_i32 = arith.constant 0 : i32
    %c31_i32 = arith.constant 31 : i32
    %49 = arith.sitofp %c0_i32 : i32 to f32
    %50 = vector.broadcast %49 : f32 to vector<1x256xf32>
    %51 = arith.maximumf %50, %24 : vector<1x256xf32>
    %52 = arith.sitofp %c31_i32 : i32 to f32
    %53 = vector.broadcast %52 : f32 to vector<1x256xf32>
    %54 = arith.minimumf %53, %51 : vector<1x256xf32>
    %55 = arith.fptosi %54 : vector<1x256xf32> to vector<1x256xi32>
    %c0_i32_20 = arith.constant 0 : i32
    %c31_i32_21 = arith.constant 31 : i32
    %56 = arith.sitofp %c0_i32_20 : i32 to f32
    %57 = vector.broadcast %56 : f32 to vector<1x256xf32>
    %58 = arith.maximumf %57, %26 : vector<1x256xf32>
    %59 = arith.sitofp %c31_i32_21 : i32 to f32
    %60 = vector.broadcast %59 : f32 to vector<1x256xf32>
    %61 = arith.minimumf %60, %58 : vector<1x256xf32>
    %62 = arith.fptosi %61 : vector<1x256xf32> to vector<1x256xi32>
    %c32_i32 = arith.constant 32 : i32
    %63 = vector.broadcast %c32_i32 : i32 to vector<1x256xi32>
    %64 = arith.muli %62, %63 : vector<1x256xi32>
    %65 = arith.addi %64, %55 : vector<1x256xi32>
    %66 = vector.broadcast %65 : vector<1x256xi32> to vector<1024x256xi32>
    %67 = arith.cmpi eq, %22, %66 : vector<1024x256xi32>
    %cst_22 = arith.constant 0.000000e+00 : f32
    %68 = vector.shape_cast %48 : vector<1x256xf32> to vector<1x256xf32>
    %69 = vector.broadcast %68 : vector<1x256xf32> to vector<1024x256xf32>
    %70 = vector.broadcast %cst_22 : f32 to vector<1024x256xf32>
    %71 = arith.select %67, %69, %70 : vector<1024x256xi1>, vector<1024x256xf32>
    %cst_23 = arith.constant 1.000000e+00 : f32
    %72 = vector.broadcast %cst_23 : f32 to vector<1x256xf32>
    %73 = arith.addf %20, %72 : vector<1x256xf32>
    %cst_24 = arith.constant 0.000000e+00 : f32
    %74 = vector.broadcast %cst_24 : f32 to vector<1x256xf32>
    %75 = arith.addf %21, %74 : vector<1x256xf32>
    %76 = arith.subf %11, %73 : vector<1x256xf32>
    %77 = math.absf %76 : vector<1x256xf32>
    %cst_25 = arith.constant 1.000000e+00 : f32
    %78 = vector.broadcast %cst_25 : f32 to vector<1x256xf32>
    %79 = arith.subf %78, %77 : vector<1x256xf32>
    %80 = arith.subf %19, %75 : vector<1x256xf32>
    %81 = math.absf %80 : vector<1x256xf32>
    %cst_26 = arith.constant 1.000000e+00 : f32
    %82 = vector.broadcast %cst_26 : f32 to vector<1x256xf32>
    %83 = arith.subf %82, %81 : vector<1x256xf32>
    %84 = arith.mulf %79, %83 : vector<1x256xf32>
    %cst_27 = arith.constant 0.000000e+00 : f32
    %85 = vector.broadcast %cst_27 : f32 to vector<1x256xf32>
    %86 = arith.cmpf oge, %73, %85 : vector<1x256xf32>
    %cst_28 = arith.constant 3.100000e+01 : f32
    %87 = vector.broadcast %cst_28 : f32 to vector<1x256xf32>
    %88 = arith.cmpf ole, %73, %87 : vector<1x256xf32>
    %89 = arith.andi %86, %88 : vector<1x256xi1>
    %cst_29 = arith.constant 0.000000e+00 : f32
    %90 = vector.broadcast %cst_29 : f32 to vector<1x256xf32>
    %91 = arith.cmpf oge, %75, %90 : vector<1x256xf32>
    %92 = arith.andi %89, %91 : vector<1x256xi1>
    %cst_30 = arith.constant 3.100000e+01 : f32
    %93 = vector.broadcast %cst_30 : f32 to vector<1x256xf32>
    %94 = arith.cmpf ole, %75, %93 : vector<1x256xf32>
    %95 = arith.andi %92, %94 : vector<1x256xi1>
    %cst_31 = arith.constant 0.000000e+00 : f32
    %96 = vector.broadcast %cst_31 : f32 to vector<1x256xf32>
    %97 = arith.select %95, %84, %96 : vector<1x256xi1>, vector<1x256xf32>
    %c0_i32_32 = arith.constant 0 : i32
    %c31_i32_33 = arith.constant 31 : i32
    %98 = arith.sitofp %c0_i32_32 : i32 to f32
    %99 = vector.broadcast %98 : f32 to vector<1x256xf32>
    %100 = arith.maximumf %99, %73 : vector<1x256xf32>
    %101 = arith.sitofp %c31_i32_33 : i32 to f32
    %102 = vector.broadcast %101 : f32 to vector<1x256xf32>
    %103 = arith.minimumf %102, %100 : vector<1x256xf32>
    %104 = arith.fptosi %103 : vector<1x256xf32> to vector<1x256xi32>
    %c0_i32_34 = arith.constant 0 : i32
    %c31_i32_35 = arith.constant 31 : i32
    %105 = arith.sitofp %c0_i32_34 : i32 to f32
    %106 = vector.broadcast %105 : f32 to vector<1x256xf32>
    %107 = arith.maximumf %106, %75 : vector<1x256xf32>
    %108 = arith.sitofp %c31_i32_35 : i32 to f32
    %109 = vector.broadcast %108 : f32 to vector<1x256xf32>
    %110 = arith.minimumf %109, %107 : vector<1x256xf32>
    %111 = arith.fptosi %110 : vector<1x256xf32> to vector<1x256xi32>
    %c32_i32_36 = arith.constant 32 : i32
    %112 = vector.broadcast %c32_i32_36 : i32 to vector<1x256xi32>
    %113 = arith.muli %111, %112 : vector<1x256xi32>
    %114 = arith.addi %113, %104 : vector<1x256xi32>
    %115 = vector.broadcast %114 : vector<1x256xi32> to vector<1024x256xi32>
    %116 = arith.cmpi eq, %22, %115 : vector<1024x256xi32>
    %cst_37 = arith.constant 0.000000e+00 : f32
    %117 = vector.shape_cast %97 : vector<1x256xf32> to vector<1x256xf32>
    %118 = vector.broadcast %117 : vector<1x256xf32> to vector<1024x256xf32>
    %119 = vector.broadcast %cst_37 : f32 to vector<1024x256xf32>
    %120 = arith.select %116, %118, %119 : vector<1024x256xi1>, vector<1024x256xf32>
    %121 = arith.addf %71, %120 : vector<1024x256xf32>
    %cst_38 = arith.constant 0.000000e+00 : f32
    %122 = vector.broadcast %cst_38 : f32 to vector<1x256xf32>
    %123 = arith.addf %20, %122 : vector<1x256xf32>
    %cst_39 = arith.constant 1.000000e+00 : f32
    %124 = vector.broadcast %cst_39 : f32 to vector<1x256xf32>
    %125 = arith.addf %21, %124 : vector<1x256xf32>
    %126 = arith.subf %11, %123 : vector<1x256xf32>
    %127 = math.absf %126 : vector<1x256xf32>
    %cst_40 = arith.constant 1.000000e+00 : f32
    %128 = vector.broadcast %cst_40 : f32 to vector<1x256xf32>
    %129 = arith.subf %128, %127 : vector<1x256xf32>
    %130 = arith.subf %19, %125 : vector<1x256xf32>
    %131 = math.absf %130 : vector<1x256xf32>
    %cst_41 = arith.constant 1.000000e+00 : f32
    %132 = vector.broadcast %cst_41 : f32 to vector<1x256xf32>
    %133 = arith.subf %132, %131 : vector<1x256xf32>
    %134 = arith.mulf %129, %133 : vector<1x256xf32>
    %cst_42 = arith.constant 0.000000e+00 : f32
    %135 = vector.broadcast %cst_42 : f32 to vector<1x256xf32>
    %136 = arith.cmpf oge, %123, %135 : vector<1x256xf32>
    %cst_43 = arith.constant 3.100000e+01 : f32
    %137 = vector.broadcast %cst_43 : f32 to vector<1x256xf32>
    %138 = arith.cmpf ole, %123, %137 : vector<1x256xf32>
    %139 = arith.andi %136, %138 : vector<1x256xi1>
    %cst_44 = arith.constant 0.000000e+00 : f32
    %140 = vector.broadcast %cst_44 : f32 to vector<1x256xf32>
    %141 = arith.cmpf oge, %125, %140 : vector<1x256xf32>
    %142 = arith.andi %139, %141 : vector<1x256xi1>
    %cst_45 = arith.constant 3.100000e+01 : f32
    %143 = vector.broadcast %cst_45 : f32 to vector<1x256xf32>
    %144 = arith.cmpf ole, %125, %143 : vector<1x256xf32>
    %145 = arith.andi %142, %144 : vector<1x256xi1>
    %cst_46 = arith.constant 0.000000e+00 : f32
    %146 = vector.broadcast %cst_46 : f32 to vector<1x256xf32>
    %147 = arith.select %145, %134, %146 : vector<1x256xi1>, vector<1x256xf32>
    %c0_i32_47 = arith.constant 0 : i32
    %c31_i32_48 = arith.constant 31 : i32
    %148 = arith.sitofp %c0_i32_47 : i32 to f32
    %149 = vector.broadcast %148 : f32 to vector<1x256xf32>
    %150 = arith.maximumf %149, %123 : vector<1x256xf32>
    %151 = arith.sitofp %c31_i32_48 : i32 to f32
    %152 = vector.broadcast %151 : f32 to vector<1x256xf32>
    %153 = arith.minimumf %152, %150 : vector<1x256xf32>
    %154 = arith.fptosi %153 : vector<1x256xf32> to vector<1x256xi32>
    %c0_i32_49 = arith.constant 0 : i32
    %c31_i32_50 = arith.constant 31 : i32
    %155 = arith.sitofp %c0_i32_49 : i32 to f32
    %156 = vector.broadcast %155 : f32 to vector<1x256xf32>
    %157 = arith.maximumf %156, %125 : vector<1x256xf32>
    %158 = arith.sitofp %c31_i32_50 : i32 to f32
    %159 = vector.broadcast %158 : f32 to vector<1x256xf32>
    %160 = arith.minimumf %159, %157 : vector<1x256xf32>
    %161 = arith.fptosi %160 : vector<1x256xf32> to vector<1x256xi32>
    %c32_i32_51 = arith.constant 32 : i32
    %162 = vector.broadcast %c32_i32_51 : i32 to vector<1x256xi32>
    %163 = arith.muli %161, %162 : vector<1x256xi32>
    %164 = arith.addi %163, %154 : vector<1x256xi32>
    %165 = vector.broadcast %164 : vector<1x256xi32> to vector<1024x256xi32>
    %166 = arith.cmpi eq, %22, %165 : vector<1024x256xi32>
    %cst_52 = arith.constant 0.000000e+00 : f32
    %167 = vector.shape_cast %147 : vector<1x256xf32> to vector<1x256xf32>
    %168 = vector.broadcast %167 : vector<1x256xf32> to vector<1024x256xf32>
    %169 = vector.broadcast %cst_52 : f32 to vector<1024x256xf32>
    %170 = arith.select %166, %168, %169 : vector<1024x256xi1>, vector<1024x256xf32>
    %171 = arith.addf %121, %170 : vector<1024x256xf32>
    %cst_53 = arith.constant 1.000000e+00 : f32
    %172 = vector.broadcast %cst_53 : f32 to vector<1x256xf32>
    %173 = arith.addf %20, %172 : vector<1x256xf32>
    %cst_54 = arith.constant 1.000000e+00 : f32
    %174 = vector.broadcast %cst_54 : f32 to vector<1x256xf32>
    %175 = arith.addf %21, %174 : vector<1x256xf32>
    %176 = arith.subf %11, %173 : vector<1x256xf32>
    %177 = math.absf %176 : vector<1x256xf32>
    %cst_55 = arith.constant 1.000000e+00 : f32
    %178 = vector.broadcast %cst_55 : f32 to vector<1x256xf32>
    %179 = arith.subf %178, %177 : vector<1x256xf32>
    %180 = arith.subf %19, %175 : vector<1x256xf32>
    %181 = math.absf %180 : vector<1x256xf32>
    %cst_56 = arith.constant 1.000000e+00 : f32
    %182 = vector.broadcast %cst_56 : f32 to vector<1x256xf32>
    %183 = arith.subf %182, %181 : vector<1x256xf32>
    %184 = arith.mulf %179, %183 : vector<1x256xf32>
    %cst_57 = arith.constant 0.000000e+00 : f32
    %185 = vector.broadcast %cst_57 : f32 to vector<1x256xf32>
    %186 = arith.cmpf oge, %173, %185 : vector<1x256xf32>
    %cst_58 = arith.constant 3.100000e+01 : f32
    %187 = vector.broadcast %cst_58 : f32 to vector<1x256xf32>
    %188 = arith.cmpf ole, %173, %187 : vector<1x256xf32>
    %189 = arith.andi %186, %188 : vector<1x256xi1>
    %cst_59 = arith.constant 0.000000e+00 : f32
    %190 = vector.broadcast %cst_59 : f32 to vector<1x256xf32>
    %191 = arith.cmpf oge, %175, %190 : vector<1x256xf32>
    %192 = arith.andi %189, %191 : vector<1x256xi1>
    %cst_60 = arith.constant 3.100000e+01 : f32
    %193 = vector.broadcast %cst_60 : f32 to vector<1x256xf32>
    %194 = arith.cmpf ole, %175, %193 : vector<1x256xf32>
    %195 = arith.andi %192, %194 : vector<1x256xi1>
    %cst_61 = arith.constant 0.000000e+00 : f32
    %196 = vector.broadcast %cst_61 : f32 to vector<1x256xf32>
    %197 = arith.select %195, %184, %196 : vector<1x256xi1>, vector<1x256xf32>
    %c0_i32_62 = arith.constant 0 : i32
    %c31_i32_63 = arith.constant 31 : i32
    %198 = arith.sitofp %c0_i32_62 : i32 to f32
    %199 = vector.broadcast %198 : f32 to vector<1x256xf32>
    %200 = arith.maximumf %199, %173 : vector<1x256xf32>
    %201 = arith.sitofp %c31_i32_63 : i32 to f32
    %202 = vector.broadcast %201 : f32 to vector<1x256xf32>
    %203 = arith.minimumf %202, %200 : vector<1x256xf32>
    %204 = arith.fptosi %203 : vector<1x256xf32> to vector<1x256xi32>
    %c0_i32_64 = arith.constant 0 : i32
    %c31_i32_65 = arith.constant 31 : i32
    %205 = arith.sitofp %c0_i32_64 : i32 to f32
    %206 = vector.broadcast %205 : f32 to vector<1x256xf32>
    %207 = arith.maximumf %206, %175 : vector<1x256xf32>
    %208 = arith.sitofp %c31_i32_65 : i32 to f32
    %209 = vector.broadcast %208 : f32 to vector<1x256xf32>
    %210 = arith.minimumf %209, %207 : vector<1x256xf32>
    %211 = arith.fptosi %210 : vector<1x256xf32> to vector<1x256xi32>
    %c32_i32_66 = arith.constant 32 : i32
    %212 = vector.broadcast %c32_i32_66 : i32 to vector<1x256xi32>
    %213 = arith.muli %211, %212 : vector<1x256xi32>
    %214 = arith.addi %213, %204 : vector<1x256xi32>
    %215 = vector.broadcast %214 : vector<1x256xi32> to vector<1024x256xi32>
    %216 = arith.cmpi eq, %22, %215 : vector<1024x256xi32>
    %cst_67 = arith.constant 0.000000e+00 : f32
    %217 = vector.shape_cast %197 : vector<1x256xf32> to vector<1x256xf32>
    %218 = vector.broadcast %217 : vector<1x256xf32> to vector<1024x256xf32>
    %219 = vector.broadcast %cst_67 : f32 to vector<1024x256xf32>
    %220 = arith.select %216, %218, %219 : vector<1024x256xi1>, vector<1024x256xf32>
    %221 = arith.addf %171, %220 : vector<1024x256xf32>
    %c0_68 = arith.constant 0 : index
    %c0_69 = arith.constant 0 : index
    %c0_70 = arith.constant 0 : index
    %222 = vector.load %arg4[%c0_68, %c0_69, %c0_70] : memref<1x6x1024xbf16, #tpu.memory_space<vmem>>, vector<1x6x1024xbf16>
    %223 = vector.shape_cast %222 : vector<1x6x1024xbf16> to vector<6x1024xbf16>
    %224 = arith.truncf %221 : vector<1024x256xf32> to vector<1024x256xbf16>
    %cst_71 = arith.constant dense<0.000000e+00> : vector<6x256xf32>
    %225 = tpu.matmul %223, %224, %cst_71 {dimension_numbers = #tpu.dot_dimension_numbers<[1], [0], [0], [1], [0, 0, 1, 1], [], []>} : vector<6x1024xbf16>, vector<1024x256xbf16>, vector<6x256xf32> -> vector<6x256xf32>
    %226 = vector.extract_strided_slice %225 {offsets = [0, 0], sizes = [3, 256], strides = [1, 1]} : vector<6x256xf32> to vector<3x256xf32>
    %227 = vector.extract_strided_slice %225 {offsets = [3, 0], sizes = [3, 256], strides = [1, 1]} : vector<6x256xf32> to vector<3x256xf32>
    %c0_72 = arith.constant 0 : index
    %c0_73 = arith.constant 0 : index
    %c0_74 = arith.constant 0 : index
    %228 = vector.load %arg5[%c0_72, %c0_73, %c0_74] : memref<1x3x256xf32, #tpu.memory_space<vmem>>, vector<1x1x256xf32>
    %229 = vector.shape_cast %228 : vector<1x1x256xf32> to vector<1x256xf32>
    %c0_75 = arith.constant 0 : index
    %c1_76 = arith.constant 1 : index
    %c0_77 = arith.constant 0 : index
    %230 = vector.load %arg5[%c0_75, %c1_76, %c0_77] : memref<1x3x256xf32, #tpu.memory_space<vmem>>, vector<1x1x256xf32>
    %231 = vector.shape_cast %230 : vector<1x1x256xf32> to vector<1x256xf32>
    %c0_78 = arith.constant 0 : index
    %c2 = arith.constant 2 : index
    %c0_79 = arith.constant 0 : index
    %232 = vector.load %arg5[%c0_78, %c2, %c0_79] : memref<1x3x256xf32, #tpu.memory_space<vmem>>, vector<1x1x256xf32>
    %233 = vector.shape_cast %232 : vector<1x1x256xf32> to vector<1x256xf32>
    %cst_80 = arith.constant 1.000000e+00 : f32
    %234 = vector.broadcast %cst_80 : f32 to vector<1x256xf32>
    %235 = arith.mulf %229, %231 : vector<1x256xf32>
    %236 = arith.mulf %229, %233 : vector<1x256xf32>
    %237 = arith.mulf %231, %233 : vector<1x256xf32>
    %238 = arith.mulf %229, %229 : vector<1x256xf32>
    %239 = arith.mulf %231, %231 : vector<1x256xf32>
    %240 = arith.subf %238, %239 : vector<1x256xf32>
    %cst_81 = arith.constant 3.000000e+00 : f32
    %241 = vector.broadcast %cst_81 : f32 to vector<1x256xf32>
    %242 = arith.mulf %241, %233 : vector<1x256xf32>
    %243 = arith.mulf %242, %233 : vector<1x256xf32>
    %cst_82 = arith.constant 1.000000e+00 : f32
    %244 = vector.broadcast %cst_82 : f32 to vector<1x256xf32>
    %245 = arith.subf %243, %244 : vector<1x256xf32>
    %c0_83 = arith.constant 0 : index
    %c0_84 = arith.constant 0 : index
    %c0_85 = arith.constant 0 : index
    %246 = vector.load %arg6[%c0_83, %c0_84, %c0_85] : memref<1x1x256xf32, #tpu.memory_space<vmem>>, vector<1x1x256xf32>
    %247 = vector.shape_cast %246 : vector<1x1x256xf32> to vector<1x256xf32>
    %248 = arith.index_cast %arg0 : i32 to index
    %c0_86 = arith.constant 0 : index
    %249 = memref.load %arg2[%248, %c0_86] : memref<2x27xf32, #tpu.memory_space<smem>>
    %250 = vector.broadcast %249 : f32 to vector<1x256xf32>
    %251 = arith.mulf %234, %250 : vector<1x256xf32>
    %252 = arith.index_cast %arg0 : i32 to index
    %c3 = arith.constant 3 : index
    %253 = memref.load %arg2[%252, %c3] : memref<2x27xf32, #tpu.memory_space<smem>>
    %254 = vector.broadcast %253 : f32 to vector<1x256xf32>
    %255 = arith.mulf %229, %254 : vector<1x256xf32>
    %256 = arith.addf %251, %255 : vector<1x256xf32>
    %257 = arith.index_cast %arg0 : i32 to index
    %c6 = arith.constant 6 : index
    %258 = memref.load %arg2[%257, %c6] : memref<2x27xf32, #tpu.memory_space<smem>>
    %259 = vector.broadcast %258 : f32 to vector<1x256xf32>
    %260 = arith.mulf %231, %259 : vector<1x256xf32>
    %261 = arith.addf %256, %260 : vector<1x256xf32>
    %262 = arith.index_cast %arg0 : i32 to index
    %c9 = arith.constant 9 : index
    %263 = memref.load %arg2[%262, %c9] : memref<2x27xf32, #tpu.memory_space<smem>>
    %264 = vector.broadcast %263 : f32 to vector<1x256xf32>
    %265 = arith.mulf %233, %264 : vector<1x256xf32>
    %266 = arith.addf %261, %265 : vector<1x256xf32>
    %267 = arith.index_cast %arg0 : i32 to index
    %c12 = arith.constant 12 : index
    %268 = memref.load %arg2[%267, %c12] : memref<2x27xf32, #tpu.memory_space<smem>>
    %269 = vector.broadcast %268 : f32 to vector<1x256xf32>
    %270 = arith.mulf %235, %269 : vector<1x256xf32>
    %271 = arith.addf %266, %270 : vector<1x256xf32>
    %272 = arith.index_cast %arg0 : i32 to index
    %c15 = arith.constant 15 : index
    %273 = memref.load %arg2[%272, %c15] : memref<2x27xf32, #tpu.memory_space<smem>>
    %274 = vector.broadcast %273 : f32 to vector<1x256xf32>
    %275 = arith.mulf %236, %274 : vector<1x256xf32>
    %276 = arith.addf %271, %275 : vector<1x256xf32>
    %277 = arith.index_cast %arg0 : i32 to index
    %c18 = arith.constant 18 : index
    %278 = memref.load %arg2[%277, %c18] : memref<2x27xf32, #tpu.memory_space<smem>>
    %279 = vector.broadcast %278 : f32 to vector<1x256xf32>
    %280 = arith.mulf %237, %279 : vector<1x256xf32>
    %281 = arith.addf %276, %280 : vector<1x256xf32>
    %282 = arith.index_cast %arg0 : i32 to index
    %c21 = arith.constant 21 : index
    %283 = memref.load %arg2[%282, %c21] : memref<2x27xf32, #tpu.memory_space<smem>>
    %284 = vector.broadcast %283 : f32 to vector<1x256xf32>
    %285 = arith.mulf %240, %284 : vector<1x256xf32>
    %286 = arith.addf %281, %285 : vector<1x256xf32>
    %287 = arith.index_cast %arg0 : i32 to index
    %c24 = arith.constant 24 : index
    %288 = memref.load %arg2[%287, %c24] : memref<2x27xf32, #tpu.memory_space<smem>>
    %289 = vector.broadcast %288 : f32 to vector<1x256xf32>
    %290 = arith.mulf %245, %289 : vector<1x256xf32>
    %291 = arith.addf %286, %290 : vector<1x256xf32>
    %292 = vector.extract_strided_slice %226 {offsets = [0, 0], sizes = [1, 256], strides = [1, 1]} : vector<3x256xf32> to vector<1x256xf32>
    %293 = arith.mulf %292, %291 : vector<1x256xf32>
    %294 = arith.mulf %293, %247 : vector<1x256xf32>
    %c0_87 = arith.constant 0 : index
    %c0_88 = arith.constant 0 : index
    %c0_89 = arith.constant 0 : index
    %295 = vector.load %arg7[%c0_87, %c0_88, %c0_89] : memref<1x3x256xf32, #tpu.memory_space<vmem>>, vector<1x1x256xf32>
    %296 = vector.shape_cast %295 : vector<1x1x256xf32> to vector<1x256xf32>
    %297 = vector.shape_cast %294 : vector<1x256xf32> to vector<1x1x256xf32>
    tpu.vector_store %arg7[%c0_87, %c0_88, %c0_89], %297 {strides = array<i32>} : memref<1x3x256xf32, #tpu.memory_space<vmem>>, vector<1x1x256xf32>,
    %298 = arith.index_cast %arg0 : i32 to index
    %c1_90 = arith.constant 1 : index
    %299 = memref.load %arg2[%298, %c1_90] : memref<2x27xf32, #tpu.memory_space<smem>>
    %300 = vector.broadcast %299 : f32 to vector<1x256xf32>
    %301 = arith.mulf %234, %300 : vector<1x256xf32>
    %302 = arith.index_cast %arg0 : i32 to index
    %c4 = arith.constant 4 : index
    %303 = memref.load %arg2[%302, %c4] : memref<2x27xf32, #tpu.memory_space<smem>>
    %304 = vector.broadcast %303 : f32 to vector<1x256xf32>
    %305 = arith.mulf %229, %304 : vector<1x256xf32>
    %306 = arith.addf %301, %305 : vector<1x256xf32>
    %307 = arith.index_cast %arg0 : i32 to index
    %c7 = arith.constant 7 : index
    %308 = memref.load %arg2[%307, %c7] : memref<2x27xf32, #tpu.memory_space<smem>>
    %309 = vector.broadcast %308 : f32 to vector<1x256xf32>
    %310 = arith.mulf %231, %309 : vector<1x256xf32>
    %311 = arith.addf %306, %310 : vector<1x256xf32>
    %312 = arith.index_cast %arg0 : i32 to index
    %c10 = arith.constant 10 : index
    %313 = memref.load %arg2[%312, %c10] : memref<2x27xf32, #tpu.memory_space<smem>>
    %314 = vector.broadcast %313 : f32 to vector<1x256xf32>
    %315 = arith.mulf %233, %314 : vector<1x256xf32>
    %316 = arith.addf %311, %315 : vector<1x256xf32>
    %317 = arith.index_cast %arg0 : i32 to index
    %c13 = arith.constant 13 : index
    %318 = memref.load %arg2[%317, %c13] : memref<2x27xf32, #tpu.memory_space<smem>>
    %319 = vector.broadcast %318 : f32 to vector<1x256xf32>
    %320 = arith.mulf %235, %319 : vector<1x256xf32>
    %321 = arith.addf %316, %320 : vector<1x256xf32>
    %322 = arith.index_cast %arg0 : i32 to index
    %c16 = arith.constant 16 : index
    %323 = memref.load %arg2[%322, %c16] : memref<2x27xf32, #tpu.memory_space<smem>>
    %324 = vector.broadcast %323 : f32 to vector<1x256xf32>
    %325 = arith.mulf %236, %324 : vector<1x256xf32>
    %326 = arith.addf %321, %325 : vector<1x256xf32>
    %327 = arith.index_cast %arg0 : i32 to index
    %c19 = arith.constant 19 : index
    %328 = memref.load %arg2[%327, %c19] : memref<2x27xf32, #tpu.memory_space<smem>>
    %329 = vector.broadcast %328 : f32 to vector<1x256xf32>
    %330 = arith.mulf %237, %329 : vector<1x256xf32>
    %331 = arith.addf %326, %330 : vector<1x256xf32>
    %332 = arith.index_cast %arg0 : i32 to index
    %c22 = arith.constant 22 : index
    %333 = memref.load %arg2[%332, %c22] : memref<2x27xf32, #tpu.memory_space<smem>>
    %334 = vector.broadcast %333 : f32 to vector<1x256xf32>
    %335 = arith.mulf %240, %334 : vector<1x256xf32>
    %336 = arith.addf %331, %335 : vector<1x256xf32>
    %337 = arith.index_cast %arg0 : i32 to index
    %c25 = arith.constant 25 : index
    %338 = memref.load %arg2[%337, %c25] : memref<2x27xf32, #tpu.memory_space<smem>>
    %339 = vector.broadcast %338 : f32 to vector<1x256xf32>
    %340 = arith.mulf %245, %339 : vector<1x256xf32>
    %341 = arith.addf %336, %340 : vector<1x256xf32>
    %342 = vector.extract_strided_slice %226 {offsets = [1, 0], sizes = [1, 256], strides = [1, 1]} : vector<3x256xf32> to vector<1x256xf32>
    %343 = arith.mulf %342, %341 : vector<1x256xf32>
    %344 = arith.mulf %343, %247 : vector<1x256xf32>
    %c0_91 = arith.constant 0 : index
    %c1_92 = arith.constant 1 : index
    %c0_93 = arith.constant 0 : index
    %345 = vector.load %arg7[%c0_91, %c1_92, %c0_93] : memref<1x3x256xf32, #tpu.memory_space<vmem>>, vector<1x1x256xf32>
    %346 = vector.shape_cast %345 : vector<1x1x256xf32> to vector<1x256xf32>
    %347 = vector.shape_cast %344 : vector<1x256xf32> to vector<1x1x256xf32>
    tpu.vector_store %arg7[%c0_91, %c1_92, %c0_93], %347 {strides = array<i32>} : memref<1x3x256xf32, #tpu.memory_space<vmem>>, vector<1x1x256xf32>,
    %348 = arith.index_cast %arg0 : i32 to index
    %c2_94 = arith.constant 2 : index
    %349 = memref.load %arg2[%348, %c2_94] : memref<2x27xf32, #tpu.memory_space<smem>>
    %350 = vector.broadcast %349 : f32 to vector<1x256xf32>
    %351 = arith.mulf %234, %350 : vector<1x256xf32>
    %352 = arith.index_cast %arg0 : i32 to index
    %c5 = arith.constant 5 : index
    %353 = memref.load %arg2[%352, %c5] : memref<2x27xf32, #tpu.memory_space<smem>>
    %354 = vector.broadcast %353 : f32 to vector<1x256xf32>
    %355 = arith.mulf %229, %354 : vector<1x256xf32>
    %356 = arith.addf %351, %355 : vector<1x256xf32>
    %357 = arith.index_cast %arg0 : i32 to index
    %c8 = arith.constant 8 : index
    %358 = memref.load %arg2[%357, %c8] : memref<2x27xf32, #tpu.memory_space<smem>>
    %359 = vector.broadcast %358 : f32 to vector<1x256xf32>
    %360 = arith.mulf %231, %359 : vector<1x256xf32>
    %361 = arith.addf %356, %360 : vector<1x256xf32>
    %362 = arith.index_cast %arg0 : i32 to index
    %c11 = arith.constant 11 : index
    %363 = memref.load %arg2[%362, %c11] : memref<2x27xf32, #tpu.memory_space<smem>>
    %364 = vector.broadcast %363 : f32 to vector<1x256xf32>
    %365 = arith.mulf %233, %364 : vector<1x256xf32>
    %366 = arith.addf %361, %365 : vector<1x256xf32>
    %367 = arith.index_cast %arg0 : i32 to index
    %c14 = arith.constant 14 : index
    %368 = memref.load %arg2[%367, %c14] : memref<2x27xf32, #tpu.memory_space<smem>>
    %369 = vector.broadcast %368 : f32 to vector<1x256xf32>
    %370 = arith.mulf %235, %369 : vector<1x256xf32>
    %371 = arith.addf %366, %370 : vector<1x256xf32>
    %372 = arith.index_cast %arg0 : i32 to index
    %c17 = arith.constant 17 : index
    %373 = memref.load %arg2[%372, %c17] : memref<2x27xf32, #tpu.memory_space<smem>>
    %374 = vector.broadcast %373 : f32 to vector<1x256xf32>
    %375 = arith.mulf %236, %374 : vector<1x256xf32>
    %376 = arith.addf %371, %375 : vector<1x256xf32>
    %377 = arith.index_cast %arg0 : i32 to index
    %c20 = arith.constant 20 : index
    %378 = memref.load %arg2[%377, %c20] : memref<2x27xf32, #tpu.memory_space<smem>>
    %379 = vector.broadcast %378 : f32 to vector<1x256xf32>
    %380 = arith.mulf %237, %379 : vector<1x256xf32>
    %381 = arith.addf %376, %380 : vector<1x256xf32>
    %382 = arith.index_cast %arg0 : i32 to index
    %c23 = arith.constant 23 : index
    %383 = memref.load %arg2[%382, %c23] : memref<2x27xf32, #tpu.memory_space<smem>>
    %384 = vector.broadcast %383 : f32 to vector<1x256xf32>
    %385 = arith.mulf %240, %384 : vector<1x256xf32>
    %386 = arith.addf %381, %385 : vector<1x256xf32>
    %387 = arith.index_cast %arg0 : i32 to index
    %c26 = arith.constant 26 : index
    %388 = memref.load %arg2[%387, %c26] : memref<2x27xf32, #tpu.memory_space<smem>>
    %389 = vector.broadcast %388 : f32 to vector<1x256xf32>
    %390 = arith.mulf %245, %389 : vector<1x256xf32>
    %391 = arith.addf %386, %390 : vector<1x256xf32>
    %392 = vector.extract_strided_slice %226 {offsets = [2, 0], sizes = [1, 256], strides = [1, 1]} : vector<3x256xf32> to vector<1x256xf32>
    %393 = arith.mulf %392, %391 : vector<1x256xf32>
    %394 = arith.mulf %393, %247 : vector<1x256xf32>
    %c0_95 = arith.constant 0 : index
    %c2_96 = arith.constant 2 : index
    %c0_97 = arith.constant 0 : index
    %395 = vector.load %arg7[%c0_95, %c2_96, %c0_97] : memref<1x3x256xf32, #tpu.memory_space<vmem>>, vector<1x1x256xf32>
    %396 = vector.shape_cast %395 : vector<1x1x256xf32> to vector<1x256xf32>
    %397 = vector.shape_cast %394 : vector<1x256xf32> to vector<1x1x256xf32>
    tpu.vector_store %arg7[%c0_95, %c2_96, %c0_97], %397 {strides = array<i32>} : memref<1x3x256xf32, #tpu.memory_space<vmem>>, vector<1x1x256xf32>,
    %c0_98 = arith.constant 0 : index
    %c0_99 = arith.constant 0 : index
    %c0_100 = arith.constant 0 : index
    %398 = vector.load %arg8[%c0_98, %c0_99, %c0_100] : memref<1x3x256xf32, #tpu.memory_space<vmem>>, vector<1x3x256xf32>
    %399 = vector.shape_cast %398 : vector<1x3x256xf32> to vector<3x256xf32>
    %400 = vector.shape_cast %226 : vector<3x256xf32> to vector<1x3x256xf32>
    tpu.vector_store %arg8[%c0_98, %c0_99, %c0_100], %400 {strides = array<i32>} : memref<1x3x256xf32, #tpu.memory_space<vmem>>, vector<1x3x256xf32>,
    %401 = vector.broadcast %247 : vector<1x256xf32> to vector<3x256xf32>
    %402 = arith.mulf %227, %401 : vector<3x256xf32>
    %cst_101 = arith.constant 0.000000e+00 : f32
    %403 = vector.broadcast %cst_101 : f32 to vector<3x256xf32>
    %404 = arith.cmpf ogt, %402, %403 : vector<3x256xf32>
    %405 = arith.extui %404 : vector<3x256xi1> to vector<3x256xi32>
    %406 = arith.sitofp %405 : vector<3x256xi32> to vector<3x256xf32>
    %c0_102 = arith.constant 0 : index
    %c0_103 = arith.constant 0 : index
    %c0_104 = arith.constant 0 : index
    %407 = vector.load %arg9[%c0_102, %c0_103, %c0_104] : memref<1x3x256xf32, #tpu.memory_space<vmem>>, vector<1x3x256xf32>
    %408 = vector.shape_cast %407 : vector<1x3x256xf32> to vector<3x256xf32>
    %409 = vector.shape_cast %406 : vector<3x256xf32> to vector<1x3x256xf32>
    tpu.vector_store %arg9[%c0_102, %c0_103, %c0_104], %409 {strides = array<i32>} : memref<1x3x256xf32, #tpu.memory_space<vmem>>, vector<1x3x256xf32>,
    return
  }
  func.func @transform_0(%arg0: i32, %arg1: i32) -> (i32, i32) {
    %c0_i32 = arith.constant 0 : i32
    %c0_i32_0 = arith.constant 0 : i32
    %c0_i32_1 = arith.constant 0 : i32
    return %c0_i32, %c0_i32_0 : i32, i32
  }
  func.func @transform_1(%arg0: i32, %arg1: i32) -> (i32, i32, i32) {
    %c0_i32 = arith.constant 0 : i32
    %c0_i32_0 = arith.constant 0 : i32
    return %arg0, %c0_i32, %arg1 : i32, i32, i32
  }
  func.func @transform_2(%arg0: i32, %arg1: i32) -> (i32, i32, i32) {
    %c0_i32 = arith.constant 0 : i32
    %c0_i32_0 = arith.constant 0 : i32
    %c0_i32_1 = arith.constant 0 : i32
    return %arg0, %c0_i32, %c0_i32_0 : i32, i32, i32
  }
  func.func @transform_3(%arg0: i32, %arg1: i32) -> (i32, i32, i32) {
    %c0_i32 = arith.constant 0 : i32
    %c0_i32_0 = arith.constant 0 : i32
    return %arg0, %c0_i32, %arg1 : i32, i32, i32
  }
  func.func @transform_4(%arg0: i32, %arg1: i32) -> (i32, i32, i32) {
    %c0_i32 = arith.constant 0 : i32
    %c0_i32_0 = arith.constant 0 : i32
    return %arg0, %c0_i32, %arg1 : i32, i32, i32
  }
  func.func @transform_5(%arg0: i32, %arg1: i32) -> (i32, i32, i32) {
    %c0_i32 = arith.constant 0 : i32
    %c0_i32_0 = arith.constant 0 : i32
    return %arg0, %c0_i32, %arg1 : i32, i32, i32
  }
  func.func @transform_6(%arg0: i32, %arg1: i32) -> (i32, i32, i32) {
    %c0_i32 = arith.constant 0 : i32
    %c0_i32_0 = arith.constant 0 : i32
    return %arg0, %c0_i32, %arg1 : i32, i32, i32
  }
  func.func @transform_7(%arg0: i32, %arg1: i32) -> (i32, i32, i32) {
    %c0_i32 = arith.constant 0 : i32
    %c0_i32_0 = arith.constant 0 : i32
    return %arg0, %c0_i32, %arg1 : i32, i32, i32
  }
}

</mosaic_0001>

<llo_original>
// kernel: tpu_custom_call.1
$region0: #{tpu_custom_call.1}
  #allocation0 [shape = 'u32[]', space=smem, size = 0x4, offset = 0x4, fixed_abs, tag = 'smem constant byte address 0x4 - core index']
  #allocation1 [shape = 'u32[144,128]{1,0:T(1,128)}', space=vmem, size = 0x12000, scoped, tag = 'internal scratch']
  %s0 = inlined_call_operand.vmem [shape: f32[2,27], index: 0, kind: input, shape index: {}]
  %s1 = inlined_call_operand.vmem [shape: f32[2,2,256], index: 1, kind: input, shape index: {}]
  %s2 = inlined_call_operand.vmem [shape: bf16[2,6,1024], index: 2, kind: input, shape index: {}]
  %s3 = inlined_call_operand.vmem [shape: f32[2,3,256], index: 3, kind: input, shape index: {}]
  %s4 = inlined_call_operand.vmem [shape: f32[2,1,256], index: 4, kind: input, shape index: {}]
  %s5 = inlined_call_operand.vmem [shape: f32[2,3,256], index: 5, kind: output, shape index: {0}]
  %s6 = inlined_call_operand.vmem [shape: f32[2,3,256], index: 6, kind: output, shape index: {1}]
  %s7 = inlined_call_operand.vmem [shape: f32[2,3,256], index: 7, kind: output, shape index: {2}]
  %8 = xla_tuple %s5, %s6, %s7
  %s9 = sld [smem:[#allocation0]]
  $region73: #{tpu_custom_call.1} parent=0
    _
  %s11 = ssub.s32 1, %s9
  %s12 = scalar_select 0, %s11, %s9
  $region1: #{tpu_custom_call.1} parent=0
    #allocation2 [shape = 'u8[1024]{0}', space=smem, size = 0x400, scoped, tag = 'input window, operand 0, single buffered']
    #allocation3 [shape = 's32[2]{0}', space=sflag, size = 0x8, scoped, tag = 'scoped memory for tpu_custom_call.1']
    %13 = vsyncpa [#allocation3], 0
    loop: start=0, step=1, limit=4
    $region2: #{tpu_custom_call.1} parent=1 // loop_pre_header
      _
    $region3: #{tpu_custom_call.1} parent=1 // loop_header
      %s15 = sphi 0, %s19
      %p16 = scmp.ge.s32.totalorder %s15, 4
      %s22 = sphi 0, %s34
      %s23 = sphi 0, %s30
      %s24 = sphi 0, %s22
      %s25 = sphi 0, %s23
      %s26 = sphi 0, %s24
      %s27 = sphi 0, %s25
      %s35 = sphi 0, %s35
      %s37 = sphi 0, %s35
      %s38 = sphi 0, %s37
      %s52 = sphi 0, %s38
      %s60 = sphi 0, %s62
      %s63 = sphi 0, %s60
      %s64 = sphi 0, %s63
      %s80 = sphi 0, %s64
      %s86 = sphi 0, %s88
      %s89 = sphi 0, %s86
      %s90 = sphi 0, %s89
      %s106 = sphi 0, %s90
      %s114 = sphi 0, %s116
      %s117 = sphi 0, %s114
      %s118 = sphi 0, %s117
      %s134 = sphi 0, %s118
      %s142 = sphi 0, %s144
      %s145 = sphi 0, %s142
      %s146 = sphi 0, %s145
      %s162 = sphi 0, %s146
      %s170 = sphi 0, %s172
      %s173 = sphi 0, %s170
      %s174 = sphi 0, %s173
      %s190 = sphi 0, %s174
      %s198 = sphi 0, %s200
      %s201 = sphi 0, %s198
      %s202 = sphi 0, %s201
      %s218 = sphi 0, %s202
      %s226 = sphi 0, %s228
      %s229 = sphi 0, %s226
      %s230 = sphi 0, %s229
      %s246 = sphi 0, %s230
    $region4: #{tpu_custom_call.1} parent=1 // loop_header_branch
      %18 = sbr.rel (%p16) target = $region8
    $region5: #{tpu_custom_call.1} parent=1 // loop_body
      %s20 = ssub.s32 %s15, 1
      %s21 = ssub.s32 %s15, 2
      %s28 = sadd.s32 1, %s23
      %p29 = scmp.ge.s32.totalorder %s28, 1
      %s30 = scalar_select %p29, 0, %s28
      %s31 = sadd.s32 1, %s22
      %s32 = scalar_select %p29, %s31, %s22
      %p33 = scmp.ge.s32.totalorder %s32, 2
      %s34 = scalar_select %p33, 0, %s32
      %s36 = sadd.s32 %s35, 1
      %p39 = scmp.eq.s32.totalorder %s15, 1
      %p40 = scmp.ne.s32.totalorder %s35, %s37
      %p41 = scmp.eq.s32.totalorder %s15, 0
      %p42 = por %p40, %p41
      %p43 = scmp.ne.s32.totalorder %s35, %s37
      %p44 = scmp.eq.s32.totalorder %s20, 1
      %p45 = por %p43, %p44
      %p46 = scmp.ne.s32.totalorder %s37, %s38
      %p47 = scmp.eq.s32.totalorder %s20, 0
      %p48 = por %p46, %p47
      %p49 = scmp.ne.s32.totalorder %s37, %s38
      %p50 = scmp.eq.s32.totalorder %s21, 1
      %p51 = por %p49, %p50
      %p53 = scmp.ne.s32.totalorder %s38, %s52
      %p54 = scmp.eq.s32.totalorder %s21, 0
      %p55 = por %p53, %p54
      %s56 = ssub.s32 %s22, %s34
      %s57 = ssub.s32 %s23, %s30
      %s58 = sor.u32 %s56, %s57
      %p59 = scmp.eq.s32.totalorder %s58, 0
      %s61 = sadd.s32 %s60, 1
      %s62 = scalar_select %p59, %s60, %s61
      %p65 = pneg %p59
      %p66 = scmp.eq.s32.totalorder %s15, 1
      %p67 = por %p65, %p66
      %p68 = scmp.ne.s32.totalorder %s60, %s63
      %p69 = scmp.eq.s32.totalorder %s15, 0
      %p70 = por %p68, %p69
      %p71 = scmp.ne.s32.totalorder %s60, %s63
      %p72 = scmp.eq.s32.totalorder %s20, 1
      %p73 = por %p71, %p72
      %p74 = scmp.ne.s32.totalorder %s63, %s64
      %p75 = scmp.eq.s32.totalorder %s20, 0
      %p76 = por %p74, %p75
      %p77 = scmp.ne.s32.totalorder %s63, %s64
      %p78 = scmp.eq.s32.totalorder %s21, 1
      %p79 = por %p77, %p78
      %p81 = scmp.ne.s32.totalorder %s64, %s80
      %p82 = scmp.eq.s32.totalorder %s21, 0
      %p83 = por %p81, %p82
      %s84 = ssub.s32 %s22, %s34
      %p85 = scmp.eq.s32.totalorder %s84, 0
      %s87 = sadd.s32 %s86, 1
      %s88 = scalar_select %p85, %s86, %s87
      %p91 = pneg %p85
      %p92 = scmp.eq.s32.totalorder %s15, 1
      %p93 = por %p91, %p92
      %p94 = scmp.ne.s32.totalorder %s86, %s89
      %p95 = scmp.eq.s32.totalorder %s15, 0
      %p96 = por %p94, %p95
      %p97 = scmp.ne.s32.totalorder %s86, %s89
      %p98 = scmp.eq.s32.totalorder %s20, 1
      %p99 = por %p97, %p98
      %p100 = scmp.ne.s32.totalorder %s89, %s90
      %p101 = scmp.eq.s32.totalorder %s20, 0
      %p102 = por %p100, %p101
      %p103 = scmp.ne.s32.totalorder %s89, %s90
      %p104 = scmp.eq.s32.totalorder %s21, 1
      %p105 = por %p103, %p104
      %p107 = scmp.ne.s32.totalorder %s90, %s106
      %p108 = scmp.eq.s32.totalorder %s21, 0
      %p109 = por %p107, %p108
      %s110 = ssub.s32 %s22, %s34
      %s111 = ssub.s32 %s23, %s30
      %s112 = sor.u32 %s110, %s111
      %p113 = scmp.eq.s32.totalorder %s112, 0
      %s115 = sadd.s32 %s114, 1
      %s116 = scalar_select %p113, %s114, %s115
      %p119 = pneg %p113
      %p120 = scmp.eq.s32.totalorder %s15, 1
      %p121 = por %p119, %p120
      %p122 = scmp.ne.s32.totalorder %s114, %s117
      %p123 = scmp.eq.s32.totalorder %s15, 0
      %p124 = por %p122, %p123
      %p125 = scmp.ne.s32.totalorder %s114, %s117
      %p126 = scmp.eq.s32.totalorder %s20, 1
      %p127 = por %p125, %p126
      %p128 = scmp.ne.s32.totalorder %s117, %s118
      %p129 = scmp.eq.s32.totalorder %s20, 0
      %p130 = por %p128, %p129
      %p131 = scmp.ne.s32.totalorder %s117, %s118
      %p132 = scmp.eq.s32.totalorder %s21, 1
      %p133 = por %p131, %p132
      %p135 = scmp.ne.s32.totalorder %s118, %s134
      %p136 = scmp.eq.s32.totalorder %s21, 0
      %p137 = por %p135, %p136
      %s138 = ssub.s32 %s22, %s34
      %s139 = ssub.s32 %s23, %s30
      %s140 = sor.u32 %s138, %s139
      %p141 = scmp.eq.s32.totalorder %s140, 0
      %s143 = sadd.s32 %s142, 1
      %s144 = scalar_select %p141, %s142, %s143
      %p147 = pneg %p141
      %p148 = scmp.eq.s32.totalorder %s15, 1
      %p149 = por %p147, %p148
      %p150 = scmp.ne.s32.totalorder %s142, %s145
      %p151 = scmp.eq.s32.totalorder %s15, 0
      %p152 = por %p150, %p151
      %p153 = scmp.ne.s32.totalorder %s142, %s145
      %p154 = scmp.eq.s32.totalorder %s20, 1
      %p155 = por %p153, %p154
      %p156 = scmp.ne.s32.totalorder %s145, %s146
      %p157 = scmp.eq.s32.totalorder %s20, 0
      %p158 = por %p156, %p157
      %p159 = scmp.ne.s32.totalorder %s145, %s146
      %p160 = scmp.eq.s32.totalorder %s21, 1
      %p161 = por %p159, %p160
      %p163 = scmp.ne.s32.totalorder %s146, %s162
      %p164 = scmp.eq.s32.totalorder %s21, 0
      %p165 = por %p163, %p164
      %s166 = ssub.s32 %s22, %s34
      %s167 = ssub.s32 %s23, %s30
      %s168 = sor.u32 %s166, %s167
      %p169 = scmp.eq.s32.totalorder %s168, 0
      %s171 = sadd.s32 %s170, 1
      %s172 = scalar_select %p169, %s170, %s171
      %p175 = pneg %p169
      %p176 = scmp.eq.s32.totalorder %s15, 1
      %p177 = por %p175, %p176
      %p178 = scmp.ne.s32.totalorder %s170, %s173
      %p179 = scmp.eq.s32.totalorder %s15, 0
      %p180 = por %p178, %p179
      %p181 = scmp.ne.s32.totalorder %s170, %s173
      %p182 = scmp.eq.s32.totalorder %s20, 1
      %p183 = por %p181, %p182
      %p184 = scmp.ne.s32.totalorder %s173, %s174
      %p185 = scmp.eq.s32.totalorder %s20, 0
      %p186 = por %p184, %p185
      %p187 = scmp.ne.s32.totalorder %s173, %s174
      %p188 = scmp.eq.s32.totalorder %s21, 1
      %p189 = por %p187, %p188
      %p191 = scmp.ne.s32.totalorder %s174, %s190
      %p192 = scmp.eq.s32.totalorder %s21, 0
      %p193 = por %p191, %p192
      %s194 = ssub.s32 %s22, %s34
      %s195 = ssub.s32 %s23, %s30
      %s196 = sor.u32 %s194, %s195
      %p197 = scmp.eq.s32.totalorder %s196, 0
      %s199 = sadd.s32 %s198, 1
      %s200 = scalar_select %p197, %s198, %s199
      %p203 = pneg %p197
      %p204 = scmp.eq.s32.totalorder %s15, 1
      %p205 = por %p203, %p204
      %p206 = scmp.ne.s32.totalorder %s198, %s201
      %p207 = scmp.eq.s32.totalorder %s15, 0
      %p208 = por %p206, %p207
      %p209 = scmp.ne.s32.totalorder %s198, %s201
      %p210 = scmp.eq.s32.totalorder %s20, 1
      %p211 = por %p209, %p210
      %p212 = scmp.ne.s32.totalorder %s201, %s202
      %p213 = scmp.eq.s32.totalorder %s20, 0
      %p214 = por %p212, %p213
      %p215 = scmp.ne.s32.totalorder %s201, %s202
      %p216 = scmp.eq.s32.totalorder %s21, 1
      %p217 = por %p215, %p216
      %p219 = scmp.ne.s32.totalorder %s202, %s218
      %p220 = scmp.eq.s32.totalorder %s21, 0
      %p221 = por %p219, %p220
      %s222 = ssub.s32 %s22, %s34
      %s223 = ssub.s32 %s23, %s30
      %s224 = sor.u32 %s222, %s223
      %p225 = scmp.eq.s32.totalorder %s224, 0
      %s227 = sadd.s32 %s226, 1
      %s228 = scalar_select %p225, %s226, %s227
      %p231 = pneg %p225
      %p232 = scmp.eq.s32.totalorder %s15, 1
      %p233 = por %p231, %p232
      %p234 = scmp.ne.s32.totalorder %s226, %s229
      %p235 = scmp.eq.s32.totalorder %s15, 0
      %p236 = por %p234, %p235
      %p237 = scmp.ne.s32.totalorder %s226, %s229
      %p238 = scmp.eq.s32.totalorder %s20, 1
      %p239 = por %p237, %p238
      %p240 = scmp.ne.s32.totalorder %s229, %s230
      %p241 = scmp.eq.s32.totalorder %s20, 0
      %p242 = por %p240, %p241
      %p243 = scmp.ne.s32.totalorder %s229, %s230
      %p244 = scmp.eq.s32.totalorder %s21, 1
      %p245 = por %p243, %p244
      %p247 = scmp.ne.s32.totalorder %s230, %s246
      %p248 = scmp.eq.s32.totalorder %s21, 0
      %p249 = por %p247, %p248
      %p250 = scmp.le.s32.totalorder 1, %s15
      %p251 = scmp.lt.s32.totalorder %s15, 3
      %p252 = pnand %p250, %p251
      %p253 = pneg %p252
      // Predicated region
      $region9: #{tpu_custom_call.1} parent=5 // pred_check
        _
      $region10: #{tpu_custom_call.1} parent=5 // pred_check_branch
        %255 = sbr.rel (%p252) target = $region12
      $region11: #{tpu_custom_call.1} parent=5 // pred_region
        %s256 = ssub.s32 %s15, 1
        // Predicated region
        $region13: #{tpu_custom_call.1} parent=11 // pred_check
          %p257 = pneg %p48
        $region14: #{tpu_custom_call.1} parent=11 // pred_check_branch
          %259 = sbr.rel (%p257) target = $region16
        $region15: #{tpu_custom_call.1} parent=11 // pred_region
          %s261 = ssub.s32 32, 32
          %262 = vsyncadd [#allocation3], %s261
          %s264 = sshll.u32 %s0, 4
          %s265 = int_to_ptr.vmem [resolvable:$true] %s264
          %267 = dma.vmem_to_smem %s265, 32, [#allocation2], [#allocation3]
        $region16: #{tpu_custom_call.1} parent=11 // pred_fallthru
          _
      $region12: #{tpu_custom_call.1} parent=5 // pred_fallthru
        _
      %p268 = scmp.lt.s32.totalorder %s15, 2
      // Predicated region
      $region17: #{tpu_custom_call.1} parent=5 // pred_check
        %p269 = pneg %p268
      $region18: #{tpu_custom_call.1} parent=5 // pred_check_branch
        %271 = sbr.rel (%p269) target = $region20
      $region19: #{tpu_custom_call.1} parent=5 // pred_region
        // Predicated region
        $region21: #{tpu_custom_call.1} parent=19 // pred_check
          %p272 = pneg %p70
        $region22: #{tpu_custom_call.1} parent=19 // pred_check_branch
          %274 = sbr.rel (%p272) target = $region24
        $region23: #{tpu_custom_call.1} parent=19 // pred_region
          %s275 = smul.u32 2, %s23
          %p276 = scmp.lt.s32.totalorder %s22, 1
          %s277 = scalar_select %p276, %s22, 1
          %p278 = scmp.lt.s32.totalorder %s275, 1
          %s279 = scalar_select %p278, %s275, 1
          %s280 = smul.addr %s277, 2
          %s281 = sadd.s32 %s279, %s280
          %s282 = smul.addr %s281, 2
          %s283 = scalar_lea.vmem %s1, %s282
          %s284 = smul.u32 2, %s23
        $region24: #{tpu_custom_call.1} parent=19 // pred_fallthru
          _
        // Predicated region
        $region25: #{tpu_custom_call.1} parent=19 // pred_check
          %p285 = pneg %p96
        $region26: #{tpu_custom_call.1} parent=19 // pred_check_branch
          %287 = sbr.rel (%p285) target = $region28
        $region27: #{tpu_custom_call.1} parent=19 // pred_region
          %p288 = scmp.lt.s32.totalorder %s22, 1
          %s289 = scalar_select %p288, %s22, 1
          %s290 = smul.addr %s289, 8
          %s291 = smul.addr %s290, 4
          %s292 = scalar_lea.vmem %s2, %s291
        $region28: #{tpu_custom_call.1} parent=19 // pred_fallthru
          _
        // Predicated region
        $region29: #{tpu_custom_call.1} parent=19 // pred_check
          %p293 = pneg %p124
        $region30: #{tpu_custom_call.1} parent=19 // pred_check_branch
          %295 = sbr.rel (%p293) target = $region32
        $region31: #{tpu_custom_call.1} parent=19 // pred_region
          %s296 = smul.u32 2, %s23
          %p297 = scmp.lt.s32.totalorder %s22, 1
          %s298 = scalar_select %p297, %s22, 1
          %p299 = scmp.lt.s32.totalorder %s296, 1
          %s300 = scalar_select %p299, %s296, 1
          %s301 = smul.addr %s298, 2
          %s302 = sadd.s32 %s300, %s301
          %s303 = smul.addr %s302, 4
          %s304 = scalar_lea.vmem %s3, %s303
          %s305 = smul.u32 2, %s23
        $region32: #{tpu_custom_call.1} parent=19 // pred_fallthru
          _
        // Predicated region
        $region33: #{tpu_custom_call.1} parent=19 // pred_check
          %p306 = pneg %p152
        $region34: #{tpu_custom_call.1} parent=19 // pred_check_branch
          %308 = sbr.rel (%p306) target = $region36
        $region35: #{tpu_custom_call.1} parent=19 // pred_region
          %s309 = smul.u32 2, %s23
          %p310 = scmp.lt.s32.totalorder %s22, 1
          %s311 = scalar_select %p310, %s22, 1
          %p312 = scmp.lt.s32.totalorder %s309, 1
          %s313 = scalar_select %p312, %s309, 1
          %s314 = smul.addr %s311, 2
          %s315 = sadd.s32 %s313, %s314
          %s316 = scalar_lea.vmem %s4, %s315
          %s317 = smul.u32 2, %s23
        $region36: #{tpu_custom_call.1} parent=19 // pred_fallthru
          _
      $region20: #{tpu_custom_call.1} parent=5 // pred_fallthru
        _
      %p318 = scmp.le.s32.totalorder 1, %s15
      %p319 = scmp.lt.s32.totalorder %s15, 3
      %p320 = pnand %p318, %p319
      %p321 = pneg %p320
      // Predicated region
      $region37: #{tpu_custom_call.1} parent=5 // pred_check
        _
      $region38: #{tpu_custom_call.1} parent=5 // pred_check_branch
        %323 = sbr.rel (%p320) target = $region40
      $region39: #{tpu_custom_call.1} parent=5 // pred_region
        %s324 = ssub.s32 %s15, 1
        // Predicated region
        $region41: #{tpu_custom_call.1} parent=39 // pred_check
          %p325 = pneg %p48
        $region42: #{tpu_custom_call.1} parent=39 // pred_check_branch
          %327 = sbr.rel (%p325) target = $region44
        $region43: #{tpu_custom_call.1} parent=39 // pred_region
          %328 = dma.done [#allocation3], 32
        $region44: #{tpu_custom_call.1} parent=39 // pred_fallthru
          _
        %329 = sfence
        %p330 = pneg %p48
        %p331 = pneg %p45
        %s332 = smul.u32 2, %s25
        %p333 = scmp.lt.s32.totalorder %s24, 1
        %s334 = scalar_select %p333, %s24, 1
        %p335 = scmp.lt.s32.totalorder %s332, 1
        %s336 = scalar_select %p335, %s332, 1
        %s337 = smul.addr %s334, 2
        %s338 = sadd.s32 %s336, %s337
        %s339 = smul.addr %s338, 2
        %s340 = scalar_lea.vmem %s1, %s339
        %p341 = pneg %p76
        %p342 = pneg %p73
        %p343 = scmp.lt.s32.totalorder %s24, 1
        %s344 = scalar_select %p343, %s24, 1
        %s345 = smul.addr %s344, 8
        %s346 = smul.addr %s345, 4
        %s347 = scalar_lea.vmem %s2, %s346
        %p348 = pneg %p102
        %p349 = pneg %p99
        %s350 = smul.u32 2, %s25
        %p351 = scmp.lt.s32.totalorder %s24, 1
        %s352 = scalar_select %p351, %s24, 1
        %p353 = scmp.lt.s32.totalorder %s350, 1
        %s354 = scalar_select %p353, %s350, 1
        %s355 = smul.addr %s352, 2
        %s356 = sadd.s32 %s354, %s355
        %s357 = smul.addr %s356, 4
        %s358 = scalar_lea.vmem %s3, %s357
        %p359 = pneg %p130
        %p360 = pneg %p127
        %s361 = smul.u32 2, %s25
        %p362 = scmp.lt.s32.totalorder %s24, 1
        %s363 = scalar_select %p362, %s24, 1
        %p364 = scmp.lt.s32.totalorder %s361, 1
        %s365 = scalar_select %p364, %s361, 1
        %s366 = smul.addr %s363, 2
        %s367 = sadd.s32 %s365, %s366
        %s368 = scalar_lea.vmem %s4, %s367
        %p369 = pneg %p158
        %p370 = pneg %p155
        %p371 = pneg %p186
        %p372 = pneg %p183
        %s373 = smul.u32 2, %s25
        %p374 = scmp.lt.s32.totalorder %s24, 1
        %s375 = scalar_select %p374, %s24, 1
        %p376 = scmp.lt.s32.totalorder %s373, 1
        %s377 = scalar_select %p376, %s373, 1
        %s378 = smul.addr %s375, 2
        %s379 = sadd.s32 %s377, %s378
        %s380 = smul.addr %s379, 4
        %s381 = scalar_lea.vmem %s5, %s380
        %p382 = pneg %p214
        %p383 = pneg %p211
        %s384 = smul.u32 2, %s25
        %p385 = scmp.lt.s32.totalorder %s24, 1
        %s386 = scalar_select %p385, %s24, 1
        %p387 = scmp.lt.s32.totalorder %s384, 1
        %s388 = scalar_select %p387, %s384, 1
        %s389 = smul.addr %s386, 2
        %s390 = sadd.s32 %s388, %s389
        %s391 = smul.addr %s390, 4
        %s392 = scalar_lea.vmem %s6, %s391
        %p393 = pneg %p242
        %p394 = pneg %p239
        %s395 = smul.u32 2, %s25
        %p396 = scmp.lt.s32.totalorder %s24, 1
        %s397 = scalar_select %p396, %s24, 1
        %p398 = scmp.lt.s32.totalorder %s395, 1
        %s399 = scalar_select %p398, %s395, 1
        %s400 = smul.addr %s397, 2
        %s401 = sadd.s32 %s399, %s400
        %s402 = smul.addr %s401, 4
        %s403 = scalar_lea.vmem %s7, %s402
        %s404 = smul.u32 2, %s25
        %p405 = scmp.lt.s32.totalorder %s24, 1
        %s406 = scalar_select %p405, %s24, 1
        %p407 = scmp.lt.s32.totalorder %s404, 1
        %s408 = scalar_select %p407, %s404, 1
        %s409 = smul.addr %s406, 2
        %s410 = sadd.s32 %s408, %s409
        %s411 = smul.addr %s410, 2
        %s412 = scalar_lea.vmem %s1, %s411
        %s413 = smul.u32 2, %s25
        %p414 = scmp.lt.s32.totalorder %s24, 1
        %s415 = scalar_select %p414, %s24, 1
        %s416 = smul.addr %s415, 8
        %s417 = smul.addr %s416, 4
        %s418 = scalar_lea.vmem %s2, %s417
        %s419 = smul.u32 2, %s25
        %p420 = scmp.lt.s32.totalorder %s24, 1
        %s421 = scalar_select %p420, %s24, 1
        %p422 = scmp.lt.s32.totalorder %s419, 1
        %s423 = scalar_select %p422, %s419, 1
        %s424 = smul.addr %s421, 2
        %s425 = sadd.s32 %s423, %s424
        %s426 = smul.addr %s425, 4
        %s427 = scalar_lea.vmem %s3, %s426
        %s428 = smul.u32 2, %s25
        %s429 = smul.u32 2, %s25
        %p430 = scmp.lt.s32.totalorder %s24, 1
        %s431 = scalar_select %p430, %s24, 1
        %p432 = scmp.lt.s32.totalorder %s429, 1
        %s433 = scalar_select %p432, %s429, 1
        %s434 = smul.addr %s431, 2
        %s435 = sadd.s32 %s433, %s434
        %s436 = scalar_lea.vmem %s4, %s435
        %s437 = smul.u32 2, %s25
        %s438 = smul.u32 2, %s25
        %p439 = scmp.lt.s32.totalorder %s24, 1
        %s440 = scalar_select %p439, %s24, 1
        %p441 = scmp.lt.s32.totalorder %s438, 1
        %s442 = scalar_select %p441, %s438, 1
        %s443 = smul.addr %s440, 2
        %s444 = sadd.s32 %s442, %s443
        %s445 = smul.addr %s444, 4
        %s446 = scalar_lea.vmem %s5, %s445
        %s447 = smul.u32 2, %s25
        %s448 = smul.u32 2, %s25
        %p449 = scmp.lt.s32.totalorder %s24, 1
        %s450 = scalar_select %p449, %s24, 1
        %p451 = scmp.lt.s32.totalorder %s448, 1
        %s452 = scalar_select %p451, %s448, 1
        %s453 = smul.addr %s450, 2
        %s454 = sadd.s32 %s452, %s453
        %s455 = smul.addr %s454, 4
        %s456 = scalar_lea.vmem %s6, %s455
        %s457 = smul.u32 2, %s25
        %s458 = smul.u32 2, %s25
        %p459 = scmp.lt.s32.totalorder %s24, 1
        %s460 = scalar_select %p459, %s24, 1
        %p461 = scmp.lt.s32.totalorder %s458, 1
        %s462 = scalar_select %p461, %s458, 1
        %s463 = smul.addr %s460, 2
        %s464 = sadd.s32 %s462, %s463
        %s465 = smul.addr %s464, 4
        %s466 = scalar_lea.vmem %s7, %s465
        %s467 = smul.u32 2, %s25
        %v468 = vld [vmem:[%s412] ss:$2 sm:$0x3]
        %s469 = scalar_lea.vmem %s412, 1
        %v470 = vld [vmem:[%s469] ss:$2 sm:$0x3]
        %v471 = vadd.f32 %v468, 1.0
        %v472 = vmul.f32 %v471, 32.0
        %v473 = vsub.f32 %v472, 1.0
        %v474 = vmul.f32 %v473, 0.5
        %v475 = vadd.f32 %v470, 1.0
        %v476 = vmul.f32 %v475, 32.0
        %v477 = vsub.f32 %v476, 1.0
        %v478 = vmul.f32 %v477, 0.5
        %v479 = vfloor.f32 %v474
        %v480 = vfloor.f32 %v478
        %v481 = vlaneseq
        %v482 = vshrl.u32 %v481, 7
        %v483 = vadd.s32 %v482, 8
        %v484 = vadd.s32 %v482, 16
        %v485 = vadd.s32 %v482, 24
        %v486 = vadd.s32 %v482, 32
        %v487 = vadd.s32 %v482, 40
        %v488 = vadd.s32 %v482, 48
        %v489 = vadd.s32 %v482, 56
        %v490 = vadd.s32 %v482, 64
        %v491 = vadd.s32 %v482, 72
        %v492 = vadd.s32 %v482, 80
        %v493 = vadd.s32 %v482, 88
        %v494 = vadd.s32 %v482, 96
        %v495 = vadd.s32 %v482, 104
        %v496 = vadd.s32 %v482, 112
        %v497 = vadd.s32 %v482, 120
        %v498 = vadd.s32 %v482, 128
        %v499 = vadd.s32 %v482, 136
        %v500 = vadd.s32 %v482, 144
        %v501 = vadd.s32 %v482, 152
        %v502 = vadd.s32 %v482, 160
        %v503 = vadd.s32 %v482, 168
        %v504 = vadd.s32 %v482, 176
        %v505 = vadd.s32 %v482, 184
        %v506 = vadd.s32 %v482, 192
        %v507 = vadd.s32 %v482, 200
        %v508 = vadd.s32 %v482, 208
        %v509 = vadd.s32 %v482, 216
        %v510 = vadd.s32 %v482, 224
        %v511 = vadd.s32 %v482, 232
        %v512 = vadd.s32 %v482, 240
        %v513 = vadd.s32 %v482, 248
        %v514 = vadd.s32 %v482, 256
        %v515 = vadd.s32 %v482, 264
        %v516 = vadd.s32 %v482, 272
        %v517 = vadd.s32 %v482, 280
        %v518 = vadd.s32 %v482, 288
        %v519 = vadd.s32 %v482, 296
        %v520 = vadd.s32 %v482, 304
        %v521 = vadd.s32 %v482, 312
        %v522 = vadd.s32 %v482, 320
        %v523 = vadd.s32 %v482, 328
        %v524 = vadd.s32 %v482, 336
        %v525 = vadd.s32 %v482, 344
        %v526 = vadd.s32 %v482, 352
        %v527 = vadd.s32 %v482, 360
        %v528 = vadd.s32 %v482, 368
        %v529 = vadd.s32 %v482, 376
        %v530 = vadd.s32 %v482, 384
        %v531 = vadd.s32 %v482, 392
        %v532 = vadd.s32 %v482, 400
        %v533 = vadd.s32 %v482, 408
        %v534 = vadd.s32 %v482, 416
        %v535 = vadd.s32 %v482, 424
        %v536 = vadd.s32 %v482, 432
        %v537 = vadd.s32 %v482, 440
        %v538 = vadd.s32 %v482, 448
        %v539 = vadd.s32 %v482, 456
        %v540 = vadd.s32 %v482, 464
        %v541 = vadd.s32 %v482, 472
        %v542 = vadd.s32 %v482, 480
        %v543 = vadd.s32 %v482, 488
        %v544 = vadd.s32 %v482, 496
        %v545 = vadd.s32 %v482, 504
        %v546 = vadd.s32 %v482, 512
        %v547 = vadd.s32 %v482, 520
        %v548 = vadd.s32 %v482, 528
        %v549 = vadd.s32 %v482, 536
        %v550 = vadd.s32 %v482, 544
        %v551 = vadd.s32 %v482, 552
        %v552 = vadd.s32 %v482, 560
        %v553 = vadd.s32 %v482, 568
        %v554 = vadd.s32 %v482, 576
        %v555 = vadd.s32 %v482, 584
        %v556 = vadd.s32 %v482, 592
        %v557 = vadd.s32 %v482, 600
        %v558 = vadd.s32 %v482, 608
        %v559 = vadd.s32 %v482, 616
        %v560 = vadd.s32 %v482, 624
        %v561 = vadd.s32 %v482, 632
        %v562 = vadd.s32 %v482, 640
        %v563 = vadd.s32 %v482, 648
        %v564 = vadd.s32 %v482, 656
        %v565 = vadd.s32 %v482, 664
        %v566 = vadd.s32 %v482, 672
        %v567 = vadd.s32 %v482, 680
        %v568 = vadd.s32 %v482, 688
        %v569 = vadd.s32 %v482, 696
        %v570 = vadd.s32 %v482, 704
        %v571 = vadd.s32 %v482, 712
        %v572 = vadd.s32 %v482, 720
        %v573 = vadd.s32 %v482, 728
        %v574 = vadd.s32 %v482, 736
        %v575 = vadd.s32 %v482, 744
        %v576 = vadd.s32 %v482, 752
        %v577 = vadd.s32 %v482, 760
        %v578 = vadd.s32 %v482, 768
        %v579 = vadd.s32 %v482, 776
        %v580 = vadd.s32 %v482, 784
        %v581 = vadd.s32 %v482, 792
        %v582 = vadd.s32 %v482, 800
        %v583 = vadd.s32 %v482, 808
        %v584 = vadd.s32 %v482, 816
        %v585 = vadd.s32 %v482, 824
        %v586 = vadd.s32 %v482, 832
        %v587 = vadd.s32 %v482, 840
        %v588 = vadd.s32 %v482, 848
        %v589 = vadd.s32 %v482, 856
        %v590 = vadd.s32 %v482, 864
        %v591 = vadd.s32 %v482, 872
        %v592 = vadd.s32 %v482, 880
        %v593 = vadd.s32 %v482, 888
        %v594 = vadd.s32 %v482, 896
        %v595 = vadd.s32 %v482, 904
        %v596 = vadd.s32 %v482, 912
        %v597 = vadd.s32 %v482, 920
        %v598 = vadd.s32 %v482, 928
        %v599 = vadd.s32 %v482, 936
        %v600 = vadd.s32 %v482, 944
        %v601 = vadd.s32 %v482, 952
        %v602 = vadd.s32 %v482, 960
        %v603 = vadd.s32 %v482, 968
        %v604 = vadd.s32 %v482, 976
        %v605 = vadd.s32 %v482, 984
        %v606 = vadd.s32 %v482, 992
        %v607 = vadd.s32 %v482, 1000
        %v608 = vadd.s32 %v482, 1008
        %v609 = vadd.s32 %v482, 1016
        %v610 = vadd.f32 %v479, 0.0
        %v611 = vadd.f32 %v480, 0.0
        %v612 = vsub.f32 %v474, %v610
        %v613 = vand.u32 2147483647, %v612
        %v614 = vsub.f32 1.0, %v613
        %v615 = vsub.f32 %v478, %v611
        %v616 = vand.u32 2147483647, %v615
        %v617 = vsub.f32 1.0, %v616
        %v618 = vmul.f32 %v614, %v617
        %vm619 = vcmp.ge.f32.partialorder %v610, 0.0
        %vm620 = vcmp.le.f32.partialorder %v610, 31.0
        %vm621 = vmand %vm619, %vm620
        %vm622 = vcmp.ge.f32.partialorder %v611, 0.0
        %vm623 = vmand %vm621, %vm622
        %vm624 = vcmp.le.f32.partialorder %v611, 31.0
        %vm625 = vmand %vm623, %vm624
        %v626 = vsel %vm625, %v618, 0.0
        %v627 = vmax.f32 %v610, 0.0
        %v628 = vmin.f32 %v627, 31.0
        %v629 = vcvt.f32.s32.to.zero.pseudo %v628
        %v630 = vmax.f32 %v611, 0.0
        %v631 = vmin.f32 %v630, 31.0
        %v632 = vcvt.f32.s32.to.zero.pseudo %v631
        %v633 = vmul.u32 %v632, 32
        %v634 = vadd.s32 %v633, %v629
        %v635 = vlaneseq
        %v636 = vshrl.u32 %v635, 7
        %v637 = vsub.s32 0, %v636
        %v638 = vrot.slane %v634, %v637
        %v639 = vlaneseq
        %v640 = vshrl.u32 %v639, 7
        %v641 = vsub.s32 1, %v640
        %v642 = vrot.slane %v634, %v641
        %vm643 = vcmp.eq.s32.totalorder %v482, %v638
        %vm644 = vcmp.eq.s32.totalorder %v482, %v642
        %vm645 = vcmp.eq.s32.totalorder %v483, %v638
        %vm646 = vcmp.eq.s32.totalorder %v483, %v642
        %vm647 = vcmp.eq.s32.totalorder %v484, %v638
        %vm648 = vcmp.eq.s32.totalorder %v484, %v642
        %vm649 = vcmp.eq.s32.totalorder %v485, %v638
        %vm650 = vcmp.eq.s32.totalorder %v485, %v642
        %vm651 = vcmp.eq.s32.totalorder %v486, %v638
        %vm652 = vcmp.eq.s32.totalorder %v486, %v642
        %vm653 = vcmp.eq.s32.totalorder %v487, %v638
        %vm654 = vcmp.eq.s32.totalorder %v487, %v642
        %vm655 = vcmp.eq.s32.totalorder %v488, %v638
        %vm656 = vcmp.eq.s32.totalorder %v488, %v642
        %vm657 = vcmp.eq.s32.totalorder %v489, %v638
        %vm658 = vcmp.eq.s32.totalorder %v489, %v642
        %vm659 = vcmp.eq.s32.totalorder %v490, %v638
        %vm660 = vcmp.eq.s32.totalorder %v490, %v642
        %vm661 = vcmp.eq.s32.totalorder %v491, %v638
        %vm662 = vcmp.eq.s32.totalorder %v491, %v642
        %vm663 = vcmp.eq.s32.totalorder %v492, %v638
        %vm664 = vcmp.eq.s32.totalorder %v492, %v642
        %vm665 = vcmp.eq.s32.totalorder %v493, %v638
        %vm666 = vcmp.eq.s32.totalorder %v493, %v642
        %vm667 = vcmp.eq.s32.totalorder %v494, %v638
        %vm668 = vcmp.eq.s32.totalorder %v494, %v642
        %vm669 = vcmp.eq.s32.totalorder %v495, %v638
        %vm670 = vcmp.eq.s32.totalorder %v495, %v642
        %vm671 = vcmp.eq.s32.totalorder %v496, %v638
        %vm672 = vcmp.eq.s32.totalorder %v496, %v642
        %vm673 = vcmp.eq.s32.totalorder %v497, %v638
        %vm674 = vcmp.eq.s32.totalorder %v497, %v642
        %vm675 = vcmp.eq.s32.totalorder %v498, %v638
        %vm676 = vcmp.eq.s32.totalorder %v498, %v642
        %vm677 = vcmp.eq.s32.totalorder %v499, %v638
        %vm678 = vcmp.eq.s32.totalorder %v499, %v642
        %vm679 = vcmp.eq.s32.totalorder %v500, %v638
        %vm680 = vcmp.eq.s32.totalorder %v500, %v642
        %vm681 = vcmp.eq.s32.totalorder %v501, %v638
        %vm682 = vcmp.eq.s32.totalorder %v501, %v642
        %vm683 = vcmp.eq.s32.totalorder %v502, %v638
        %vm684 = vcmp.eq.s32.totalorder %v502, %v642
        %vm685 = vcmp.eq.s32.totalorder %v503, %v638
        %vm686 = vcmp.eq.s32.totalorder %v503, %v642
        %vm687 = vcmp.eq.s32.totalorder %v504, %v638
        %vm688 = vcmp.eq.s32.totalorder %v504, %v642
        %vm689 = vcmp.eq.s32.totalorder %v505, %v638
        %vm690 = vcmp.eq.s32.totalorder %v505, %v642
        %vm691 = vcmp.eq.s32.totalorder %v506, %v638
        %vm692 = vcmp.eq.s32.totalorder %v506, %v642
        %vm693 = vcmp.eq.s32.totalorder %v507, %v638
        %vm694 = vcmp.eq.s32.totalorder %v507, %v642
        %vm695 = vcmp.eq.s32.totalorder %v508, %v638
        %vm696 = vcmp.eq.s32.totalorder %v508, %v642
        %vm697 = vcmp.eq.s32.totalorder %v509, %v638
        %vm698 = vcmp.eq.s32.totalorder %v509, %v642
        %vm699 = vcmp.eq.s32.totalorder %v510, %v638
        %vm700 = vcmp.eq.s32.totalorder %v510, %v642
        %vm701 = vcmp.eq.s32.totalorder %v511, %v638
        %vm702 = vcmp.eq.s32.totalorder %v511, %v642
        %vm703 = vcmp.eq.s32.totalorder %v512, %v638
        %vm704 = vcmp.eq.s32.totalorder %v512, %v642
        %vm705 = vcmp.eq.s32.totalorder %v513, %v638
        %vm706 = vcmp.eq.s32.totalorder %v513, %v642
        %vm707 = vcmp.eq.s32.totalorder %v514, %v638
        %vm708 = vcmp.eq.s32.totalorder %v514, %v642
        %vm709 = vcmp.eq.s32.totalorder %v515, %v638
        %vm710 = vcmp.eq.s32.totalorder %v515, %v642
        %vm711 = vcmp.eq.s32.totalorder %v516, %v638
        %vm712 = vcmp.eq.s32.totalorder %v516, %v642
        %vm713 = vcmp.eq.s32.totalorder %v517, %v638
        %vm714 = vcmp.eq.s32.totalorder %v517, %v642
        %vm715 = vcmp.eq.s32.totalorder %v518, %v638
        %vm716 = vcmp.eq.s32.totalorder %v518, %v642
        %vm717 = vcmp.eq.s32.totalorder %v519, %v638
        %vm718 = vcmp.eq.s32.totalorder %v519, %v642
        %vm719 = vcmp.eq.s32.totalorder %v520, %v638
        %vm720 = vcmp.eq.s32.totalorder %v520, %v642
        %vm721 = vcmp.eq.s32.totalorder %v521, %v638
        %vm722 = vcmp.eq.s32.totalorder %v521, %v642
        %vm723 = vcmp.eq.s32.totalorder %v522, %v638
        %vm724 = vcmp.eq.s32.totalorder %v522, %v642
        %vm725 = vcmp.eq.s32.totalorder %v523, %v638
        %vm726 = vcmp.eq.s32.totalorder %v523, %v642
        %vm727 = vcmp.eq.s32.totalorder %v524, %v638
        %vm728 = vcmp.eq.s32.totalorder %v524, %v642
        %vm729 = vcmp.eq.s32.totalorder %v525, %v638
        %vm730 = vcmp.eq.s32.totalorder %v525, %v642
        %vm731 = vcmp.eq.s32.totalorder %v526, %v638
        %vm732 = vcmp.eq.s32.totalorder %v526, %v642
        %vm733 = vcmp.eq.s32.totalorder %v527, %v638
        %vm734 = vcmp.eq.s32.totalorder %v527, %v642
        %vm735 = vcmp.eq.s32.totalorder %v528, %v638
        %vm736 = vcmp.eq.s32.totalorder %v528, %v642
        %vm737 = vcmp.eq.s32.totalorder %v529, %v638
        %vm738 = vcmp.eq.s32.totalorder %v529, %v642
        %vm739 = vcmp.eq.s32.totalorder %v530, %v638
        %vm740 = vcmp.eq.s32.totalorder %v530, %v642
        %vm741 = vcmp.eq.s32.totalorder %v531, %v638
        %vm742 = vcmp.eq.s32.totalorder %v531, %v642
        %vm743 = vcmp.eq.s32.totalorder %v532, %v638
        %vm744 = vcmp.eq.s32.totalorder %v532, %v642
        %vm745 = vcmp.eq.s32.totalorder %v533, %v638
        %vm746 = vcmp.eq.s32.totalorder %v533, %v642
        %vm747 = vcmp.eq.s32.totalorder %v534, %v638
        %vm748 = vcmp.eq.s32.totalorder %v534, %v642
        %vm749 = vcmp.eq.s32.totalorder %v535, %v638
        %vm750 = vcmp.eq.s32.totalorder %v535, %v642
        %vm751 = vcmp.eq.s32.totalorder %v536, %v638
        %vm752 = vcmp.eq.s32.totalorder %v536, %v642
        %vm753 = vcmp.eq.s32.totalorder %v537, %v638
        %vm754 = vcmp.eq.s32.totalorder %v537, %v642
        %vm755 = vcmp.eq.s32.totalorder %v538, %v638
        %vm756 = vcmp.eq.s32.totalorder %v538, %v642
        %vm757 = vcmp.eq.s32.totalorder %v539, %v638
        %vm758 = vcmp.eq.s32.totalorder %v539, %v642
        %vm759 = vcmp.eq.s32.totalorder %v540, %v638
        %vm760 = vcmp.eq.s32.totalorder %v540, %v642
        %vm761 = vcmp.eq.s32.totalorder %v541, %v638
        %vm762 = vcmp.eq.s32.totalorder %v541, %v642
        %vm763 = vcmp.eq.s32.totalorder %v542, %v638
        %vm764 = vcmp.eq.s32.totalorder %v542, %v642
        %vm765 = vcmp.eq.s32.totalorder %v543, %v638
        %vm766 = vcmp.eq.s32.totalorder %v543, %v642
        %vm767 = vcmp.eq.s32.totalorder %v544, %v638
        %vm768 = vcmp.eq.s32.totalorder %v544, %v642
        %vm769 = vcmp.eq.s32.totalorder %v545, %v638
        %vm770 = vcmp.eq.s32.totalorder %v545, %v642
        %vm771 = vcmp.eq.s32.totalorder %v546, %v638
        %vm772 = vcmp.eq.s32.totalorder %v546, %v642
        %vm773 = vcmp.eq.s32.totalorder %v547, %v638
        %vm774 = vcmp.eq.s32.totalorder %v547, %v642
        %vm775 = vcmp.eq.s32.totalorder %v548, %v638
        %vm776 = vcmp.eq.s32.totalorder %v548, %v642
        %vm777 = vcmp.eq.s32.totalorder %v549, %v638
        %vm778 = vcmp.eq.s32.totalorder %v549, %v642
        %vm779 = vcmp.eq.s32.totalorder %v550, %v638
        %vm780 = vcmp.eq.s32.totalorder %v550, %v642
        %vm781 = vcmp.eq.s32.totalorder %v551, %v638
        %vm782 = vcmp.eq.s32.totalorder %v551, %v642
        %vm783 = vcmp.eq.s32.totalorder %v552, %v638
        %vm784 = vcmp.eq.s32.totalorder %v552, %v642
        %vm785 = vcmp.eq.s32.totalorder %v553, %v638
        %vm786 = vcmp.eq.s32.totalorder %v553, %v642
        %vm787 = vcmp.eq.s32.totalorder %v554, %v638
        %vm788 = vcmp.eq.s32.totalorder %v554, %v642
        %vm789 = vcmp.eq.s32.totalorder %v555, %v638
        %vm790 = vcmp.eq.s32.totalorder %v555, %v642
        %vm791 = vcmp.eq.s32.totalorder %v556, %v638
        %vm792 = vcmp.eq.s32.totalorder %v556, %v642
        %vm793 = vcmp.eq.s32.totalorder %v557, %v638
        %vm794 = vcmp.eq.s32.totalorder %v557, %v642
        %vm795 = vcmp.eq.s32.totalorder %v558, %v638
        %vm796 = vcmp.eq.s32.totalorder %v558, %v642
        %vm797 = vcmp.eq.s32.totalorder %v559, %v638
        %vm798 = vcmp.eq.s32.totalorder %v559, %v642
        %vm799 = vcmp.eq.s32.totalorder %v560, %v638
        %vm800 = vcmp.eq.s32.totalorder %v560, %v642
        %vm801 = vcmp.eq.s32.totalorder %v561, %v638
        %vm802 = vcmp.eq.s32.totalorder %v561, %v642
        %vm803 = vcmp.eq.s32.totalorder %v562, %v638
        %vm804 = vcmp.eq.s32.totalorder %v562, %v642
        %vm805 = vcmp.eq.s32.totalorder %v563, %v638
        %vm806 = vcmp.eq.s32.totalorder %v563, %v642
        %vm807 = vcmp.eq.s32.totalorder %v564, %v638
        %vm808 = vcmp.eq.s32.totalorder %v564, %v642
        %vm809 = vcmp.eq.s32.totalorder %v565, %v638
        %vm810 = vcmp.eq.s32.totalorder %v565, %v642
        %vm811 = vcmp.eq.s32.totalorder %v566, %v638
        %vm812 = vcmp.eq.s32.totalorder %v566, %v642
        %vm813 = vcmp.eq.s32.totalorder %v567, %v638
        %vm814 = vcmp.eq.s32.totalorder %v567, %v642
        %vm815 = vcmp.eq.s32.totalorder %v568, %v638
        %vm816 = vcmp.eq.s32.totalorder %v568, %v642
        %vm817 = vcmp.eq.s32.totalorder %v569, %v638
        %vm818 = vcmp.eq.s32.totalorder %v569, %v642
        %vm819 = vcmp.eq.s32.totalorder %v570, %v638
        %vm820 = vcmp.eq.s32.totalorder %v570, %v642
        %vm821 = vcmp.eq.s32.totalorder %v571, %v638
        %vm822 = vcmp.eq.s32.totalorder %v571, %v642
        %vm823 = vcmp.eq.s32.totalorder %v572, %v638
        %vm824 = vcmp.eq.s32.totalorder %v572, %v642
        %vm825 = vcmp.eq.s32.totalorder %v573, %v638
        %vm826 = vcmp.eq.s32.totalorder %v573, %v642
        %vm827 = vcmp.eq.s32.totalorder %v574, %v638
        %vm828 = vcmp.eq.s32.totalorder %v574, %v642
        %vm829 = vcmp.eq.s32.totalorder %v575, %v638
        %vm830 = vcmp.eq.s32.totalorder %v575, %v642
        %vm831 = vcmp.eq.s32.totalorder %v576, %v638
        %vm832 = vcmp.eq.s32.totalorder %v576, %v642
        %vm833 = vcmp.eq.s32.totalorder %v577, %v638
        %vm834 = vcmp.eq.s32.totalorder %v577, %v642
        %vm835 = vcmp.eq.s32.totalorder %v578, %v638
        %vm836 = vcmp.eq.s32.totalorder %v578, %v642
        %vm837 = vcmp.eq.s32.totalorder %v579, %v638
        %vm838 = vcmp.eq.s32.totalorder %v579, %v642
        %vm839 = vcmp.eq.s32.totalorder %v580, %v638
        %vm840 = vcmp.eq.s32.totalorder %v580, %v642
        %vm841 = vcmp.eq.s32.totalorder %v581, %v638
        %vm842 = vcmp.eq.s32.totalorder %v581, %v642
        %vm843 = vcmp.eq.s32.totalorder %v582, %v638
        %vm844 = vcmp.eq.s32.totalorder %v582, %v642
        %vm845 = vcmp.eq.s32.totalorder %v583, %v638
        %vm846 = vcmp.eq.s32.totalorder %v583, %v642
        %vm847 = vcmp.eq.s32.totalorder %v584, %v638
        %vm848 = vcmp.eq.s32.totalorder %v584, %v642
        %vm849 = vcmp.eq.s32.totalorder %v585, %v638
        %vm850 = vcmp.eq.s32.totalorder %v585, %v642
        %vm851 = vcmp.eq.s32.totalorder %v586, %v638
        %vm852 = vcmp.eq.s32.totalorder %v586, %v642
        %vm853 = vcmp.eq.s32.totalorder %v587, %v638
        %vm854 = vcmp.eq.s32.totalorder %v587, %v642
        %vm855 = vcmp.eq.s32.totalorder %v588, %v638
        %vm856 = vcmp.eq.s32.totalorder %v588, %v642
        %vm857 = vcmp.eq.s32.totalorder %v589, %v638
        %vm858 = vcmp.eq.s32.totalorder %v589, %v642
        %vm859 = vcmp.eq.s32.totalorder %v590, %v638
        %vm860 = vcmp.eq.s32.totalorder %v590, %v642
        %vm861 = vcmp.eq.s32.totalorder %v591, %v638
        %vm862 = vcmp.eq.s32.totalorder %v591, %v642
        %vm863 = vcmp.eq.s32.totalorder %v592, %v638
        %vm864 = vcmp.eq.s32.totalorder %v592, %v642
        %vm865 = vcmp.eq.s32.totalorder %v593, %v638
        %vm866 = vcmp.eq.s32.totalorder %v593, %v642
        %vm867 = vcmp.eq.s32.totalorder %v594, %v638
        %vm868 = vcmp.eq.s32.totalorder %v594, %v642
        %vm869 = vcmp.eq.s32.totalorder %v595, %v638
        %vm870 = vcmp.eq.s32.totalorder %v595, %v642
        %vm871 = vcmp.eq.s32.totalorder %v596, %v638
        %vm872 = vcmp.eq.s32.totalorder %v596, %v642
        %vm873 = vcmp.eq.s32.totalorder %v597, %v638
        %vm874 = vcmp.eq.s32.totalorder %v597, %v642
        %vm875 = vcmp.eq.s32.totalorder %v598, %v638
        %vm876 = vcmp.eq.s32.totalorder %v598, %v642
        %vm877 = vcmp.eq.s32.totalorder %v599, %v638
        %vm878 = vcmp.eq.s32.totalorder %v599, %v642
        %vm879 = vcmp.eq.s32.totalorder %v600, %v638
        %vm880 = vcmp.eq.s32.totalorder %v600, %v642
        %vm881 = vcmp.eq.s32.totalorder %v601, %v638
        %vm882 = vcmp.eq.s32.totalorder %v601, %v642
        %vm883 = vcmp.eq.s32.totalorder %v602, %v638
        %vm884 = vcmp.eq.s32.totalorder %v602, %v642
        %vm885 = vcmp.eq.s32.totalorder %v603, %v638
        %vm886 = vcmp.eq.s32.totalorder %v603, %v642
        %vm887 = vcmp.eq.s32.totalorder %v604, %v638
        %vm888 = vcmp.eq.s32.totalorder %v604, %v642
        %vm889 = vcmp.eq.s32.totalorder %v605, %v638
        %vm890 = vcmp.eq.s32.totalorder %v605, %v642
        %vm891 = vcmp.eq.s32.totalorder %v606, %v638
        %vm892 = vcmp.eq.s32.totalorder %v606, %v642
        %vm893 = vcmp.eq.s32.totalorder %v607, %v638
        %vm894 = vcmp.eq.s32.totalorder %v607, %v642
        %vm895 = vcmp.eq.s32.totalorder %v608, %v638
        %vm896 = vcmp.eq.s32.totalorder %v608, %v642
        %vm897 = vcmp.eq.s32.totalorder %v609, %v638
        %vm898 = vcmp.eq.s32.totalorder %v609, %v642
        %v900 = vlaneseq
        %v901 = vshrl.u32 %v900, 7
        %v902 = vsub.s32 0, %v901
        %v903 = vrot.slane %v626, %v902
        %v904 = vlaneseq
        %v905 = vshrl.u32 %v904, 7
        %v906 = vsub.s32 1, %v905
        %v907 = vrot.slane %v626, %v906
        %v910 = vsel %vm643, %v903, 0.0
        %v911 = vsel %vm644, %v907, 0.0
        %v912 = vsel %vm645, %v903, 0.0
        %v913 = vsel %vm646, %v907, 0.0
        %v914 = vsel %vm647, %v903, 0.0
        %v915 = vsel %vm648, %v907, 0.0
        %v916 = vsel %vm649, %v903, 0.0
        %v917 = vsel %vm650, %v907, 0.0
        %v918 = vsel %vm651, %v903, 0.0
        %v919 = vsel %vm652, %v907, 0.0
        %v920 = vsel %vm653, %v903, 0.0
        %v921 = vsel %vm654, %v907, 0.0
        %v922 = vsel %vm655, %v903, 0.0
        %v923 = vsel %vm656, %v907, 0.0
        %v924 = vsel %vm657, %v903, 0.0
        %v925 = vsel %vm658, %v907, 0.0
        %v926 = vsel %vm659, %v903, 0.0
        %v927 = vsel %vm660, %v907, 0.0
        %v928 = vsel %vm661, %v903, 0.0
        %v929 = vsel %vm662, %v907, 0.0
        %v930 = vsel %vm663, %v903, 0.0
        %v931 = vsel %vm664, %v907, 0.0
        %v932 = vsel %vm665, %v903, 0.0
        %v933 = vsel %vm666, %v907, 0.0
        %v934 = vsel %vm667, %v903, 0.0
        %v935 = vsel %vm668, %v907, 0.0
        %v936 = vsel %vm669, %v903, 0.0
        %v937 = vsel %vm670, %v907, 0.0
        %v938 = vsel %vm671, %v903, 0.0
        %v939 = vsel %vm672, %v907, 0.0
        %v940 = vsel %vm673, %v903, 0.0
        %v941 = vsel %vm674, %v907, 0.0
        %v942 = vsel %vm675, %v903, 0.0
        %v943 = vsel %vm676, %v907, 0.0
        %v944 = vsel %vm677, %v903, 0.0
        %v945 = vsel %vm678, %v907, 0.0
        %v946 = vsel %vm679, %v903, 0.0
        %v947 = vsel %vm680, %v907, 0.0
        %v948 = vsel %vm681, %v903, 0.0
        %v949 = vsel %vm682, %v907, 0.0
        %v950 = vsel %vm683, %v903, 0.0
        %v951 = vsel %vm684, %v907, 0.0
        %v952 = vsel %vm685, %v903, 0.0
        %v953 = vsel %vm686, %v907, 0.0
        %v954 = vsel %vm687, %v903, 0.0
        %v955 = vsel %vm688, %v907, 0.0
        %v956 = vsel %vm689, %v903, 0.0
        %v957 = vsel %vm690, %v907, 0.0
        %v958 = vsel %vm691, %v903, 0.0
        %v959 = vsel %vm692, %v907, 0.0
        %v960 = vsel %vm693, %v903, 0.0
        %v961 = vsel %vm694, %v907, 0.0
        %v962 = vsel %vm695, %v903, 0.0
        %v963 = vsel %vm696, %v907, 0.0
        %v964 = vsel %vm697, %v903, 0.0
        %v965 = vsel %vm698, %v907, 0.0
        %v966 = vsel %vm699, %v903, 0.0
        %v967 = vsel %vm700, %v907, 0.0
        %v968 = vsel %vm701, %v903, 0.0
        %v969 = vsel %vm702, %v907, 0.0
        %v970 = vsel %vm703, %v903, 0.0
        %v971 = vsel %vm704, %v907, 0.0
        %v972 = vsel %vm705, %v903, 0.0
        %v973 = vsel %vm706, %v907, 0.0
        %v974 = vsel %vm707, %v903, 0.0
        %v975 = vsel %vm708, %v907, 0.0
        %v976 = vsel %vm709, %v903, 0.0
        %v977 = vsel %vm710, %v907, 0.0
        %v978 = vsel %vm711, %v903, 0.0
        %v979 = vsel %vm712, %v907, 0.0
        %v980 = vsel %vm713, %v903, 0.0
        %v981 = vsel %vm714, %v907, 0.0
        %v982 = vsel %vm715, %v903, 0.0
        %v983 = vsel %vm716, %v907, 0.0
        %v984 = vsel %vm717, %v903, 0.0
        %v985 = vsel %vm718, %v907, 0.0
        %v986 = vsel %vm719, %v903, 0.0
        %v987 = vsel %vm720, %v907, 0.0
        %v988 = vsel %vm721, %v903, 0.0
        %v989 = vsel %vm722, %v907, 0.0
        %v990 = vsel %vm723, %v903, 0.0
        %v991 = vsel %vm724, %v907, 0.0
        %v992 = vsel %vm725, %v903, 0.0
        %v993 = vsel %vm726, %v907, 0.0
        %v994 = vsel %vm727, %v903, 0.0
        %v995 = vsel %vm728, %v907, 0.0
        %v996 = vsel %vm729, %v903, 0.0
        %v997 = vsel %vm730, %v907, 0.0
        %v998 = vsel %vm731, %v903, 0.0
        %v999 = vsel %vm732, %v907, 0.0
        %v1000 = vsel %vm733, %v903, 0.0
        %v1001 = vsel %vm734, %v907, 0.0
        %v1002 = vsel %vm735, %v903, 0.0
        %v1003 = vsel %vm736, %v907, 0.0
        %v1004 = vsel %vm737, %v903, 0.0
        %v1005 = vsel %vm738, %v907, 0.0
        %v1006 = vsel %vm739, %v903, 0.0
        %v1007 = vsel %vm740, %v907, 0.0
        %v1008 = vsel %vm741, %v903, 0.0
        %v1009 = vsel %vm742, %v907, 0.0
        %v1010 = vsel %vm743, %v903, 0.0
        %v1011 = vsel %vm744, %v907, 0.0
        %v1012 = vsel %vm745, %v903, 0.0
        %v1013 = vsel %vm746, %v907, 0.0
        %v1014 = vsel %vm747, %v903, 0.0
        %v1015 = vsel %vm748, %v907, 0.0
        %v1016 = vsel %vm749, %v903, 0.0
        %v1017 = vsel %vm750, %v907, 0.0
        %v1018 = vsel %vm751, %v903, 0.0
        %v1019 = vsel %vm752, %v907, 0.0
        %v1020 = vsel %vm753, %v903, 0.0
        %v1021 = vsel %vm754, %v907, 0.0
        %v1022 = vsel %vm755, %v903, 0.0
        %v1023 = vsel %vm756, %v907, 0.0
        %v1024 = vsel %vm757, %v903, 0.0
        %v1025 = vsel %vm758, %v907, 0.0
        %v1026 = vsel %vm759, %v903, 0.0
        %v1027 = vsel %vm760, %v907, 0.0
        %v1028 = vsel %vm761, %v903, 0.0
        %v1029 = vsel %vm762, %v907, 0.0
        %v1030 = vsel %vm763, %v903, 0.0
        %v1031 = vsel %vm764, %v907, 0.0
        %v1032 = vsel %vm765, %v903, 0.0
        %v1033 = vsel %vm766, %v907, 0.0
        %v1034 = vsel %vm767, %v903, 0.0
        %v1035 = vsel %vm768, %v907, 0.0
        %v1036 = vsel %vm769, %v903, 0.0
        %v1037 = vsel %vm770, %v907, 0.0
        %v1038 = vsel %vm771, %v903, 0.0
        %v1039 = vsel %vm772, %v907, 0.0
        %v1040 = vsel %vm773, %v903, 0.0
        %v1041 = vsel %vm774, %v907, 0.0
        %v1042 = vsel %vm775, %v903, 0.0
        %v1043 = vsel %vm776, %v907, 0.0
        %v1044 = vsel %vm777, %v903, 0.0
        %v1045 = vsel %vm778, %v907, 0.0
        %v1046 = vsel %vm779, %v903, 0.0
        %v1047 = vsel %vm780, %v907, 0.0
        %v1048 = vsel %vm781, %v903, 0.0
        %v1049 = vsel %vm782, %v907, 0.0
        %v1050 = vsel %vm783, %v903, 0.0
        %v1051 = vsel %vm784, %v907, 0.0
        %v1052 = vsel %vm785, %v903, 0.0
        %v1053 = vsel %vm786, %v907, 0.0
        %v1054 = vsel %vm787, %v903, 0.0
        %v1055 = vsel %vm788, %v907, 0.0
        %v1056 = vsel %vm789, %v903, 0.0
        %v1057 = vsel %vm790, %v907, 0.0
        %v1058 = vsel %vm791, %v903, 0.0
        %v1059 = vsel %vm792, %v907, 0.0
        %v1060 = vsel %vm793, %v903, 0.0
        %v1061 = vsel %vm794, %v907, 0.0
        %v1062 = vsel %vm795, %v903, 0.0
        %v1063 = vsel %vm796, %v907, 0.0
        %v1064 = vsel %vm797, %v903, 0.0
        %v1065 = vsel %vm798, %v907, 0.0
        %v1066 = vsel %vm799, %v903, 0.0
        %v1067 = vsel %vm800, %v907, 0.0
        %v1068 = vsel %vm801, %v903, 0.0
        %v1069 = vsel %vm802, %v907, 0.0
        %v1070 = vsel %vm803, %v903, 0.0
        %v1071 = vsel %vm804, %v907, 0.0
        %v1072 = vsel %vm805, %v903, 0.0
        %v1073 = vsel %vm806, %v907, 0.0
        %v1074 = vsel %vm807, %v903, 0.0
        %v1075 = vsel %vm808, %v907, 0.0
        %v1076 = vsel %vm809, %v903, 0.0
        %v1077 = vsel %vm810, %v907, 0.0
        %v1078 = vsel %vm811, %v903, 0.0
        %v1079 = vsel %vm812, %v907, 0.0
        %v1080 = vsel %vm813, %v903, 0.0
        %v1081 = vsel %vm814, %v907, 0.0
        %v1082 = vsel %vm815, %v903, 0.0
        %v1083 = vsel %vm816, %v907, 0.0
        %v1084 = vsel %vm817, %v903, 0.0
        %v1085 = vsel %vm818, %v907, 0.0
        %v1086 = vsel %vm819, %v903, 0.0
        %v1087 = vsel %vm820, %v907, 0.0
        %v1088 = vsel %vm821, %v903, 0.0
        %v1089 = vsel %vm822, %v907, 0.0
        %v1090 = vsel %vm823, %v903, 0.0
        %v1091 = vsel %vm824, %v907, 0.0
        %v1092 = vsel %vm825, %v903, 0.0
        %v1093 = vsel %vm826, %v907, 0.0
        %v1094 = vsel %vm827, %v903, 0.0
        %v1095 = vsel %vm828, %v907, 0.0
        %v1096 = vsel %vm829, %v903, 0.0
        %v1097 = vsel %vm830, %v907, 0.0
        %v1098 = vsel %vm831, %v903, 0.0
        %v1099 = vsel %vm832, %v907, 0.0
        %v1100 = vsel %vm833, %v903, 0.0
        %v1101 = vsel %vm834, %v907, 0.0
        %v1102 = vsel %vm835, %v903, 0.0
        %v1103 = vsel %vm836, %v907, 0.0
        %v1104 = vsel %vm837, %v903, 0.0
        %v1105 = vsel %vm838, %v907, 0.0
        %v1106 = vsel %vm839, %v903, 0.0
        %v1107 = vsel %vm840, %v907, 0.0
        %v1108 = vsel %vm841, %v903, 0.0
        %v1109 = vsel %vm842, %v907, 0.0
        %v1110 = vsel %vm843, %v903, 0.0
        %v1111 = vsel %vm844, %v907, 0.0
        %v1112 = vsel %vm845, %v903, 0.0
        %v1113 = vsel %vm846, %v907, 0.0
        %v1114 = vsel %vm847, %v903, 0.0
        %v1115 = vsel %vm848, %v907, 0.0
        %v1116 = vsel %vm849, %v903, 0.0
        %v1117 = vsel %vm850, %v907, 0.0
        %v1118 = vsel %vm851, %v903, 0.0
        %v1119 = vsel %vm852, %v907, 0.0
        %v1120 = vsel %vm853, %v903, 0.0
        %v1121 = vsel %vm854, %v907, 0.0
        %v1122 = vsel %vm855, %v903, 0.0
        %v1123 = vsel %vm856, %v907, 0.0
        %v1124 = vsel %vm857, %v903, 0.0
        %v1125 = vsel %vm858, %v907, 0.0
        %v1126 = vsel %vm859, %v903, 0.0
        %v1127 = vsel %vm860, %v907, 0.0
        %v1128 = vsel %vm861, %v903, 0.0
        %v1129 = vsel %vm862, %v907, 0.0
        %v1130 = vsel %vm863, %v903, 0.0
        %v1131 = vsel %vm864, %v907, 0.0
        %v1132 = vsel %vm865, %v903, 0.0
        %v1133 = vsel %vm866, %v907, 0.0
        %v1134 = vsel %vm867, %v903, 0.0
        %v1135 = vsel %vm868, %v907, 0.0
        %v1136 = vsel %vm869, %v903, 0.0
        %v1137 = vsel %vm870, %v907, 0.0
        %v1138 = vsel %vm871, %v903, 0.0
        %v1139 = vsel %vm872, %v907, 0.0
        %v1140 = vsel %vm873, %v903, 0.0
        %v1141 = vsel %vm874, %v907, 0.0
        %v1142 = vsel %vm875, %v903, 0.0
        %v1143 = vsel %vm876, %v907, 0.0
        %v1144 = vsel %vm877, %v903, 0.0
        %v1145 = vsel %vm878, %v907, 0.0
        %v1146 = vsel %vm879, %v903, 0.0
        %v1147 = vsel %vm880, %v907, 0.0
        %v1148 = vsel %vm881, %v903, 0.0
        %v1149 = vsel %vm882, %v907, 0.0
        %v1150 = vsel %vm883, %v903, 0.0
        %v1151 = vsel %vm884, %v907, 0.0
        %v1152 = vsel %vm885, %v903, 0.0
        %v1153 = vsel %vm886, %v907, 0.0
        %v1154 = vsel %vm887, %v903, 0.0
        %v1155 = vsel %vm888, %v907, 0.0
        %v1156 = vsel %vm889, %v903, 0.0
        %v1157 = vsel %vm890, %v907, 0.0
        %v1158 = vsel %vm891, %v903, 0.0
        %v1159 = vsel %vm892, %v907, 0.0
        %v1160 = vsel %vm893, %v903, 0.0
        %v1161 = vsel %vm894, %v907, 0.0
        %v1162 = vsel %vm895, %v903, 0.0
        %v1163 = vsel %vm896, %v907, 0.0
        %v1164 = vsel %vm897, %v903, 0.0
        %v1165 = vsel %vm898, %v907, 0.0
        %v1166 = vadd.f32 %v479, 1.0
        %v1167 = vsub.f32 %v474, %v1166
        %v1168 = vand.u32 2147483647, %v1167
        %v1169 = vsub.f32 1.0, %v1168
        %v1170 = vmul.f32 %v1169, %v617
        %vm1171 = vcmp.ge.f32.partialorder %v1166, 0.0
        %vm1172 = vcmp.le.f32.partialorder %v1166, 31.0
        %vm1173 = vmand %vm1171, %vm1172
        %vm1174 = vmand %vm1173, %vm622
        %vm1175 = vmand %vm1174, %vm624
        %v1176 = vsel %vm1175, %v1170, 0.0
        %v1177 = vmax.f32 %v1166, 0.0
        %v1178 = vmin.f32 %v1177, 31.0
        %v1179 = vcvt.f32.s32.to.zero.pseudo %v1178
        %v1180 = vadd.s32 %v633, %v1179
        %v1181 = vlaneseq
        %v1182 = vshrl.u32 %v1181, 7
        %v1183 = vsub.s32 0, %v1182
        %v1184 = vrot.slane %v1180, %v1183
        %v1185 = vlaneseq
        %v1186 = vshrl.u32 %v1185, 7
        %v1187 = vsub.s32 1, %v1186
        %v1188 = vrot.slane %v1180, %v1187
        %vm1189 = vcmp.eq.s32.totalorder %v482, %v1184
        %vm1190 = vcmp.eq.s32.totalorder %v482, %v1188
        %vm1191 = vcmp.eq.s32.totalorder %v483, %v1184
        %vm1192 = vcmp.eq.s32.totalorder %v483, %v1188
        %vm1193 = vcmp.eq.s32.totalorder %v484, %v1184
        %vm1194 = vcmp.eq.s32.totalorder %v484, %v1188
        %vm1195 = vcmp.eq.s32.totalorder %v485, %v1184
        %vm1196 = vcmp.eq.s32.totalorder %v485, %v1188
        %vm1197 = vcmp.eq.s32.totalorder %v486, %v1184
        %vm1198 = vcmp.eq.s32.totalorder %v486, %v1188
        %vm1199 = vcmp.eq.s32.totalorder %v487, %v1184
        %vm1200 = vcmp.eq.s32.totalorder %v487, %v1188
        %vm1201 = vcmp.eq.s32.totalorder %v488, %v1184
        %vm1202 = vcmp.eq.s32.totalorder %v488, %v1188
        %vm1203 = vcmp.eq.s32.totalorder %v489, %v1184
        %vm1204 = vcmp.eq.s32.totalorder %v489, %v1188
        %vm1205 = vcmp.eq.s32.totalorder %v490, %v1184
        %vm1206 = vcmp.eq.s32.totalorder %v490, %v1188
        %vm1207 = vcmp.eq.s32.totalorder %v491, %v1184
        %vm1208 = vcmp.eq.s32.totalorder %v491, %v1188
        %vm1209 = vcmp.eq.s32.totalorder %v492, %v1184
        %vm1210 = vcmp.eq.s32.totalorder %v492, %v1188
        %vm1211 = vcmp.eq.s32.totalorder %v493, %v1184
        %vm1212 = vcmp.eq.s32.totalorder %v493, %v1188
        %vm1213 = vcmp.eq.s32.totalorder %v494, %v1184
        %vm1214 = vcmp.eq.s32.totalorder %v494, %v1188
        %vm1215 = vcmp.eq.s32.totalorder %v495, %v1184
        %vm1216 = vcmp.eq.s32.totalorder %v495, %v1188
        %vm1217 = vcmp.eq.s32.totalorder %v496, %v1184
        %vm1218 = vcmp.eq.s32.totalorder %v496, %v1188
        %vm1219 = vcmp.eq.s32.totalorder %v497, %v1184
        %vm1220 = vcmp.eq.s32.totalorder %v497, %v1188
        %vm1221 = vcmp.eq.s32.totalorder %v498, %v1184
        %vm1222 = vcmp.eq.s32.totalorder %v498, %v1188
        %vm1223 = vcmp.eq.s32.totalorder %v499, %v1184
        %vm1224 = vcmp.eq.s32.totalorder %v499, %v1188
        %vm1225 = vcmp.eq.s32.totalorder %v500, %v1184
        %vm1226 = vcmp.eq.s32.totalorder %v500, %v1188
        %vm1227 = vcmp.eq.s32.totalorder %v501, %v1184
        %vm1228 = vcmp.eq.s32.totalorder %v501, %v1188
        %vm1229 = vcmp.eq.s32.totalorder %v502, %v1184
        %vm1230 = vcmp.eq.s32.totalorder %v502, %v1188
        %vm1231 = vcmp.eq.s32.totalorder %v503, %v1184
        %vm1232 = vcmp.eq.s32.totalorder %v503, %v1188
        %vm1233 = vcmp.eq.s32.totalorder %v504, %v1184
        %vm1234 = vcmp.eq.s32.totalorder %v504, %v1188
        %vm1235 = vcmp.eq.s32.totalorder %v505, %v1184
        %vm1236 = vcmp.eq.s32.totalorder %v505, %v1188
        %vm1237 = vcmp.eq.s32.totalorder %v506, %v1184
        %vm1238 = vcmp.eq.s32.totalorder %v506, %v1188
        %vm1239 = vcmp.eq.s32.totalorder %v507, %v1184
        %vm1240 = vcmp.eq.s32.totalorder %v507, %v1188
        %vm1241 = vcmp.eq.s32.totalorder %v508, %v1184
        %vm1242 = vcmp.eq.s32.totalorder %v508, %v1188
        %vm1243 = vcmp.eq.s32.totalorder %v509, %v1184
        %vm1244 = vcmp.eq.s32.totalorder %v509, %v1188
        %vm1245 = vcmp.eq.s32.totalorder %v510, %v1184
        %vm1246 = vcmp.eq.s32.totalorder %v510, %v1188
        %vm1247 = vcmp.eq.s32.totalorder %v511, %v1184
        %vm1248 = vcmp.eq.s32.totalorder %v511, %v1188
        %vm1249 = vcmp.eq.s32.totalorder %v512, %v1184
        %vm1250 = vcmp.eq.s32.totalorder %v512, %v1188
        %vm1251 = vcmp.eq.s32.totalorder %v513, %v1184
        %vm1252 = vcmp.eq.s32.totalorder %v513, %v1188
        %vm1253 = vcmp.eq.s32.totalorder %v514, %v1184
        %vm1254 = vcmp.eq.s32.totalorder %v514, %v1188
        %vm1255 = vcmp.eq.s32.totalorder %v515, %v1184
        %vm1256 = vcmp.eq.s32.totalorder %v515, %v1188
        %vm1257 = vcmp.eq.s32.totalorder %v516, %v1184
        %vm1258 = vcmp.eq.s32.totalorder %v516, %v1188
        %vm1259 = vcmp.eq.s32.totalorder %v517, %v1184
        %vm1260 = vcmp.eq.s32.totalorder %v517, %v1188
        %vm1261 = vcmp.eq.s32.totalorder %v518, %v1184
        %vm1262 = vcmp.eq.s32.totalorder %v518, %v1188
        %vm1263 = vcmp.eq.s32.totalorder %v519, %v1184
        %vm1264 = vcmp.eq.s32.totalorder %v519, %v1188
        %vm1265 = vcmp.eq.s32.totalorder %v520, %v1184
        %vm1266 = vcmp.eq.s32.totalorder %v520, %v1188
        %vm1267 = vcmp.eq.s32.totalorder %v521, %v1184
        %vm1268 = vcmp.eq.s32.totalorder %v521, %v1188
        %vm1269 = vcmp.eq.s32.totalorder %v522, %v1184
        %vm1270 = vcmp.eq.s32.totalorder %v522, %v1188
        %vm1271 = vcmp.eq.s32.totalorder %v523, %v1184
        %vm1272 = vcmp.eq.s32.totalorder %v523, %v1188
        %vm1273 = vcmp.eq.s32.totalorder %v524, %v1184
        %vm1274 = vcmp.eq.s32.totalorder %v524, %v1188
        %vm1275 = vcmp.eq.s32.totalorder %v525, %v1184
        %vm1276 = vcmp.eq.s32.totalorder %v525, %v1188
        %vm1277 = vcmp.eq.s32.totalorder %v526, %v1184
        %vm1278 = vcmp.eq.s32.totalorder %v526, %v1188
        %vm1279 = vcmp.eq.s32.totalorder %v527, %v1184
        %vm1280 = vcmp.eq.s32.totalorder %v527, %v1188
        %vm1281 = vcmp.eq.s32.totalorder %v528, %v1184
        %vm1282 = vcmp.eq.s32.totalorder %v528, %v1188
        %vm1283 = vcmp.eq.s32.totalorder %v529, %v1184
        %vm1284 = vcmp.eq.s32.totalorder %v529, %v1188
        %vm1285 = vcmp.eq.s32.totalorder %v530, %v1184
        %vm1286 = vcmp.eq.s32.totalorder %v530, %v1188
        %vm1287 = vcmp.eq.s32.totalorder %v531, %v1184
        %vm1288 = vcmp.eq.s32.totalorder %v531, %v1188
        %vm1289 = vcmp.eq.s32.totalorder %v532, %v1184
        %vm1290 = vcmp.eq.s32.totalorder %v532, %v1188
        %vm1291 = vcmp.eq.s32.totalorder %v533, %v1184
        %vm1292 = vcmp.eq.s32.totalorder %v533, %v1188
        %vm1293 = vcmp.eq.s32.totalorder %v534, %v1184
        %vm1294 = vcmp.eq.s32.totalorder %v534, %v1188
        %vm1295 = vcmp.eq.s32.totalorder %v535, %v1184
        %vm1296 = vcmp.eq.s32.totalorder %v535, %v1188
        %vm1297 = vcmp.eq.s32.totalorder %v536, %v1184
        %vm1298 = vcmp.eq.s32.totalorder %v536, %v1188
        %vm1299 = vcmp.eq.s32.totalorder %v537, %v1184
        %vm1300 = vcmp.eq.s32.totalorder %v537, %v1188
        %vm1301 = vcmp.eq.s32.totalorder %v538, %v1184
        %vm1302 = vcmp.eq.s32.totalorder %v538, %v1188
        %vm1303 = vcmp.eq.s32.totalorder %v539, %v1184
        %vm1304 = vcmp.eq.s32.totalorder %v539, %v1188
        %vm1305 = vcmp.eq.s32.totalorder %v540, %v1184
        %vm1306 = vcmp.eq.s32.totalorder %v540, %v1188
        %vm1307 = vcmp.eq.s32.totalorder %v541, %v1184
        %vm1308 = vcmp.eq.s32.totalorder %v541, %v1188
        %vm1309 = vcmp.eq.s32.totalorder %v542, %v1184
        %vm1310 = vcmp.eq.s32.totalorder %v542, %v1188
        %vm1311 = vcmp.eq.s32.totalorder %v543, %v1184
        %vm1312 = vcmp.eq.s32.totalorder %v543, %v1188
        %vm1313 = vcmp.eq.s32.totalorder %v544, %v1184
        %vm1314 = vcmp.eq.s32.totalorder %v544, %v1188
        %vm1315 = vcmp.eq.s32.totalorder %v545, %v1184
        %vm1316 = vcmp.eq.s32.totalorder %v545, %v1188
        %vm1317 = vcmp.eq.s32.totalorder %v546, %v1184
        %vm1318 = vcmp.eq.s32.totalorder %v546, %v1188
        %vm1319 = vcmp.eq.s32.totalorder %v547, %v1184
        %vm1320 = vcmp.eq.s32.totalorder %v547, %v1188
        %vm1321 = vcmp.eq.s32.totalorder %v548, %v1184
        %vm1322 = vcmp.eq.s32.totalorder %v548, %v1188
        %vm1323 = vcmp.eq.s32.totalorder %v549, %v1184
        %vm1324 = vcmp.eq.s32.totalorder %v549, %v1188
        %vm1325 = vcmp.eq.s32.totalorder %v550, %v1184
        %vm1326 = vcmp.eq.s32.totalorder %v550, %v1188
        %vm1327 = vcmp.eq.s32.totalorder %v551, %v1184
        %vm1328 = vcmp.eq.s32.totalorder %v551, %v1188
        %vm1329 = vcmp.eq.s32.totalorder %v552, %v1184
        %vm1330 = vcmp.eq.s32.totalorder %v552, %v1188
        %vm1331 = vcmp.eq.s32.totalorder %v553, %v1184
        %vm1332 = vcmp.eq.s32.totalorder %v553, %v1188
        %vm1333 = vcmp.eq.s32.totalorder %v554, %v1184
        %vm1334 = vcmp.eq.s32.totalorder %v554, %v1188
        %vm1335 = vcmp.eq.s32.totalorder %v555, %v1184
        %vm1336 = vcmp.eq.s32.totalorder %v555, %v1188
        %vm1337 = vcmp.eq.s32.totalorder %v556, %v1184
        %vm1338 = vcmp.eq.s32.totalorder %v556, %v1188
        %vm1339 = vcmp.eq.s32.totalorder %v557, %v1184
        %vm1340 = vcmp.eq.s32.totalorder %v557, %v1188
        %vm1341 = vcmp.eq.s32.totalorder %v558, %v1184
        %vm1342 = vcmp.eq.s32.totalorder %v558, %v1188
        %vm1343 = vcmp.eq.s32.totalorder %v559, %v1184
        %vm1344 = vcmp.eq.s32.totalorder %v559, %v1188
        %vm1345 = vcmp.eq.s32.totalorder %v560, %v1184
        %vm1346 = vcmp.eq.s32.totalorder %v560, %v1188
        %vm1347 = vcmp.eq.s32.totalorder %v561, %v1184
        %vm1348 = vcmp.eq.s32.totalorder %v561, %v1188
        %vm1349 = vcmp.eq.s32.totalorder %v562, %v1184
        %vm1350 = vcmp.eq.s32.totalorder %v562, %v1188
        %vm1351 = vcmp.eq.s32.totalorder %v563, %v1184
        %vm1352 = vcmp.eq.s32.totalorder %v563, %v1188
        %vm1353 = vcmp.eq.s32.totalorder %v564, %v1184
        %vm1354 = vcmp.eq.s32.totalorder %v564, %v1188
        %vm1355 = vcmp.eq.s32.totalorder %v565, %v1184
        %vm1356 = vcmp.eq.s32.totalorder %v565, %v1188
        %vm1357 = vcmp.eq.s32.totalorder %v566, %v1184
        %vm1358 = vcmp.eq.s32.totalorder %v566, %v1188
        %vm1359 = vcmp.eq.s32.totalorder %v567, %v1184
        %vm1360 = vcmp.eq.s32.totalorder %v567, %v1188
        %vm1361 = vcmp.eq.s32.totalorder %v568, %v1184
        %vm1362 = vcmp.eq.s32.totalorder %v568, %v1188
        %vm1363 = vcmp.eq.s32.totalorder %v569, %v1184
        %vm1364 = vcmp.eq.s32.totalorder %v569, %v1188
        %vm1365 = vcmp.eq.s32.totalorder %v570, %v1184
        %vm1366 = vcmp.eq.s32.totalorder %v570, %v1188
        %vm1367 = vcmp.eq.s32.totalorder %v571, %v1184
        %vm1368 = vcmp.eq.s32.totalorder %v571, %v1188
        %vm1369 = vcmp.eq.s32.totalorder %v572, %v1184
        %vm1370 = vcmp.eq.s32.totalorder %v572, %v1188
        %vm1371 = vcmp.eq.s32.totalorder %v573, %v1184
        %vm1372 = vcmp.eq.s32.totalorder %v573, %v1188
        %vm1373 = vcmp.eq.s32.totalorder %v574, %v1184
        %vm1374 = vcmp.eq.s32.totalorder %v574, %v1188
        %vm1375 = vcmp.eq.s32.totalorder %v575, %v1184
        %vm1376 = vcmp.eq.s32.totalorder %v575, %v1188
        %vm1377 = vcmp.eq.s32.totalorder %v576, %v1184
        %vm1378 = vcmp.eq.s32.totalorder %v576, %v1188
        %vm1379 = vcmp.eq.s32.totalorder %v577, %v1184
        %vm1380 = vcmp.eq.s32.totalorder %v577, %v1188
        %vm1381 = vcmp.eq.s32.totalorder %v578, %v1184
        %vm1382 = vcmp.eq.s32.totalorder %v578, %v1188
        %vm1383 = vcmp.eq.s32.totalorder %v579, %v1184
        %vm1384 = vcmp.eq.s32.totalorder %v579, %v1188
        %vm1385 = vcmp.eq.s32.totalorder %v580, %v1184
        %vm1386 = vcmp.eq.s32.totalorder %v580, %v1188
        %vm1387 = vcmp.eq.s32.totalorder %v581, %v1184
        %vm1388 = vcmp.eq.s32.totalorder %v581, %v1188
        %vm1389 = vcmp.eq.s32.totalorder %v582, %v1184
        %vm1390 = vcmp.eq.s32.totalorder %v582, %v1188
        %vm1391 = vcmp.eq.s32.totalorder %v583, %v1184
        %vm1392 = vcmp.eq.s32.totalorder %v583, %v1188
        %vm1393 = vcmp.eq.s32.totalorder %v584, %v1184
        %vm1394 = vcmp.eq.s32.totalorder %v584, %v1188
        %vm1395 = vcmp.eq.s32.totalorder %v585, %v1184
        %vm1396 = vcmp.eq.s32.totalorder %v585, %v1188
        %vm1397 = vcmp.eq.s32.totalorder %v586, %v1184
        %vm1398 = vcmp.eq.s32.totalorder %v586, %v1188
        %vm1399 = vcmp.eq.s32.totalorder %v587, %v1184
        %vm1400 = vcmp.eq.s32.totalorder %v587, %v1188
        %vm1401 = vcmp.eq.s32.totalorder %v588, %v1184
        %vm1402 = vcmp.eq.s32.totalorder %v588, %v1188
        %vm1403 = vcmp.eq.s32.totalorder %v589, %v1184
        %vm1404 = vcmp.eq.s32.totalorder %v589, %v1188
        %vm1405 = vcmp.eq.s32.totalorder %v590, %v1184
        %vm1406 = vcmp.eq.s32.totalorder %v590, %v1188
        %vm1407 = vcmp.eq.s32.totalorder %v591, %v1184
        %vm1408 = vcmp.eq.s32.totalorder %v591, %v1188
        %vm1409 = vcmp.eq.s32.totalorder %v592, %v1184
        %vm1410 = vcmp.eq.s32.totalorder %v592, %v1188
        %vm1411 = vcmp.eq.s32.totalorder %v593, %v1184
        %vm1412 = vcmp.eq.s32.totalorder %v593, %v1188
        %vm1413 = vcmp.eq.s32.totalorder %v594, %v1184
        %vm1414 = vcmp.eq.s32.totalorder %v594, %v1188
        %vm1415 = vcmp.eq.s32.totalorder %v595, %v1184
        %vm1416 = vcmp.eq.s32.totalorder %v595, %v1188
        %vm1417 = vcmp.eq.s32.totalorder %v596, %v1184
        %vm1418 = vcmp.eq.s32.totalorder %v596, %v1188
        %vm1419 = vcmp.eq.s32.totalorder %v597, %v1184
        %vm1420 = vcmp.eq.s32.totalorder %v597, %v1188
        %vm1421 = vcmp.eq.s32.totalorder %v598, %v1184
        %vm1422 = vcmp.eq.s32.totalorder %v598, %v1188
        %vm1423 = vcmp.eq.s32.totalorder %v599, %v1184
        %vm1424 = vcmp.eq.s32.totalorder %v599, %v1188
        %vm1425 = vcmp.eq.s32.totalorder %v600, %v1184
        %vm1426 = vcmp.eq.s32.totalorder %v600, %v1188
        %vm1427 = vcmp.eq.s32.totalorder %v601, %v1184
        %vm1428 = vcmp.eq.s32.totalorder %v601, %v1188
        %vm1429 = vcmp.eq.s32.totalorder %v602, %v1184
        %vm1430 = vcmp.eq.s32.totalorder %v602, %v1188
        %vm1431 = vcmp.eq.s32.totalorder %v603, %v1184
        %vm1432 = vcmp.eq.s32.totalorder %v603, %v1188
        %vm1433 = vcmp.eq.s32.totalorder %v604, %v1184
        %vm1434 = vcmp.eq.s32.totalorder %v604, %v1188
        %vm1435 = vcmp.eq.s32.totalorder %v605, %v1184
        %vm1436 = vcmp.eq.s32.totalorder %v605, %v1188
        %vm1437 = vcmp.eq.s32.totalorder %v606, %v1184
        %vm1438 = vcmp.eq.s32.totalorder %v606, %v1188
        %vm1439 = vcmp.eq.s32.totalorder %v607, %v1184
        %vm1440 = vcmp.eq.s32.totalorder %v607, %v1188
        %vm1441 = vcmp.eq.s32.totalorder %v608, %v1184
        %vm1442 = vcmp.eq.s32.totalorder %v608, %v1188
        %vm1443 = vcmp.eq.s32.totalorder %v609, %v1184
        %vm1444 = vcmp.eq.s32.totalorder %v609, %v1188
        %v1446 = vlaneseq
        %v1447 = vshrl.u32 %v1446, 7
        %v1448 = vsub.s32 0, %v1447
        %v1449 = vrot.slane %v1176, %v1448
        %v1450 = vlaneseq
        %v1451 = vshrl.u32 %v1450, 7
        %v1452 = vsub.s32 1, %v1451
        %v1453 = vrot.slane %v1176, %v1452
        %v1456 = vsel %vm1189, %v1449, 0.0
        %v1457 = vsel %vm1190, %v1453, 0.0
        %v1458 = vsel %vm1191, %v1449, 0.0
        %v1459 = vsel %vm1192, %v1453, 0.0
        %v1460 = vsel %vm1193, %v1449, 0.0
        %v1461 = vsel %vm1194, %v1453, 0.0
        %v1462 = vsel %vm1195, %v1449, 0.0
        %v1463 = vsel %vm1196, %v1453, 0.0
        %v1464 = vsel %vm1197, %v1449, 0.0
        %v1465 = vsel %vm1198, %v1453, 0.0
        %v1466 = vsel %vm1199, %v1449, 0.0
        %v1467 = vsel %vm1200, %v1453, 0.0
        %v1468 = vsel %vm1201, %v1449, 0.0
        %v1469 = vsel %vm1202, %v1453, 0.0
        %v1470 = vsel %vm1203, %v1449, 0.0
        %v1471 = vsel %vm1204, %v1453, 0.0
        %v1472 = vsel %vm1205, %v1449, 0.0
        %v1473 = vsel %vm1206, %v1453, 0.0
        %v1474 = vsel %vm1207, %v1449, 0.0
        %v1475 = vsel %vm1208, %v1453, 0.0
        %v1476 = vsel %vm1209, %v1449, 0.0
        %v1477 = vsel %vm1210, %v1453, 0.0
        %v1478 = vsel %vm1211, %v1449, 0.0
        %v1479 = vsel %vm1212, %v1453, 0.0
        %v1480 = vsel %vm1213, %v1449, 0.0
        %v1481 = vsel %vm1214, %v1453, 0.0
        %v1482 = vsel %vm1215, %v1449, 0.0
        %v1483 = vsel %vm1216, %v1453, 0.0
        %v1484 = vsel %vm1217, %v1449, 0.0
        %v1485 = vsel %vm1218, %v1453, 0.0
        %v1486 = vsel %vm1219, %v1449, 0.0
        %v1487 = vsel %vm1220, %v1453, 0.0
        %v1488 = vsel %vm1221, %v1449, 0.0
        %v1489 = vsel %vm1222, %v1453, 0.0
        %v1490 = vsel %vm1223, %v1449, 0.0
        %v1491 = vsel %vm1224, %v1453, 0.0
        %v1492 = vsel %vm1225, %v1449, 0.0
        %v1493 = vsel %vm1226, %v1453, 0.0
        %v1494 = vsel %vm1227, %v1449, 0.0
        %v1495 = vsel %vm1228, %v1453, 0.0
        %v1496 = vsel %vm1229, %v1449, 0.0
        %v1497 = vsel %vm1230, %v1453, 0.0
        %v1498 = vsel %vm1231, %v1449, 0.0
        %v1499 = vsel %vm1232, %v1453, 0.0
        %v1500 = vsel %vm1233, %v1449, 0.0
        %v1501 = vsel %vm1234, %v1453, 0.0
        %v1502 = vsel %vm1235, %v1449, 0.0
        %v1503 = vsel %vm1236, %v1453, 0.0
        %v1504 = vsel %vm1237, %v1449, 0.0
        %v1505 = vsel %vm1238, %v1453, 0.0
        %v1506 = vsel %vm1239, %v1449, 0.0
        %v1507 = vsel %vm1240, %v1453, 0.0
        %v1508 = vsel %vm1241, %v1449, 0.0
        %v1509 = vsel %vm1242, %v1453, 0.0
        %v1510 = vsel %vm1243, %v1449, 0.0
        %v1511 = vsel %vm1244, %v1453, 0.0
        %v1512 = vsel %vm1245, %v1449, 0.0
        %v1513 = vsel %vm1246, %v1453, 0.0
        %v1514 = vsel %vm1247, %v1449, 0.0
        %v1515 = vsel %vm1248, %v1453, 0.0
        %v1516 = vsel %vm1249, %v1449, 0.0
        %v1517 = vsel %vm1250, %v1453, 0.0
        %v1518 = vsel %vm1251, %v1449, 0.0
        %v1519 = vsel %vm1252, %v1453, 0.0
        %v1520 = vsel %vm1253, %v1449, 0.0
        %v1521 = vsel %vm1254, %v1453, 0.0
        %v1522 = vsel %vm1255, %v1449, 0.0
        %v1523 = vsel %vm1256, %v1453, 0.0
        %v1524 = vsel %vm1257, %v1449, 0.0
        %v1525 = vsel %vm1258, %v1453, 0.0
        %v1526 = vsel %vm1259, %v1449, 0.0
        %v1527 = vsel %vm1260, %v1453, 0.0
        %v1528 = vsel %vm1261, %v1449, 0.0
        %v1529 = vsel %vm1262, %v1453, 0.0
        %v1530 = vsel %vm1263, %v1449, 0.0
        %v1531 = vsel %vm1264, %v1453, 0.0
        %v1532 = vsel %vm1265, %v1449, 0.0
        %v1533 = vsel %vm1266, %v1453, 0.0
        %v1534 = vsel %vm1267, %v1449, 0.0
        %v1535 = vsel %vm1268, %v1453, 0.0
        %v1536 = vsel %vm1269, %v1449, 0.0
        %v1537 = vsel %vm1270, %v1453, 0.0
        %v1538 = vsel %vm1271, %v1449, 0.0
        %v1539 = vsel %vm1272, %v1453, 0.0
        %v1540 = vsel %vm1273, %v1449, 0.0
        %v1541 = vsel %vm1274, %v1453, 0.0
        %v1542 = vsel %vm1275, %v1449, 0.0
        %v1543 = vsel %vm1276, %v1453, 0.0
        %v1544 = vsel %vm1277, %v1449, 0.0
        %v1545 = vsel %vm1278, %v1453, 0.0
        %v1546 = vsel %vm1279, %v1449, 0.0
        %v1547 = vsel %vm1280, %v1453, 0.0
        %v1548 = vsel %vm1281, %v1449, 0.0
        %v1549 = vsel %vm1282, %v1453, 0.0
        %v1550 = vsel %vm1283, %v1449, 0.0
        %v1551 = vsel %vm1284, %v1453, 0.0
        %v1552 = vsel %vm1285, %v1449, 0.0
        %v1553 = vsel %vm1286, %v1453, 0.0
        %v1554 = vsel %vm1287, %v1449, 0.0
        %v1555 = vsel %vm1288, %v1453, 0.0
        %v1556 = vsel %vm1289, %v1449, 0.0
        %v1557 = vsel %vm1290, %v1453, 0.0
        %v1558 = vsel %vm1291, %v1449, 0.0
        %v1559 = vsel %vm1292, %v1453, 0.0
        %v1560 = vsel %vm1293, %v1449, 0.0
        %v1561 = vsel %vm1294, %v1453, 0.0
        %v1562 = vsel %vm1295, %v1449, 0.0
        %v1563 = vsel %vm1296, %v1453, 0.0
        %v1564 = vsel %vm1297, %v1449, 0.0
        %v1565 = vsel %vm1298, %v1453, 0.0
        %v1566 = vsel %vm1299, %v1449, 0.0
        %v1567 = vsel %vm1300, %v1453, 0.0
        %v1568 = vsel %vm1301, %v1449, 0.0
        %v1569 = vsel %vm1302, %v1453, 0.0
        %v1570 = vsel %vm1303, %v1449, 0.0
        %v1571 = vsel %vm1304, %v1453, 0.0
        %v1572 = vsel %vm1305, %v1449, 0.0
        %v1573 = vsel %vm1306, %v1453, 0.0
        %v1574 = vsel %vm1307, %v1449, 0.0
        %v1575 = vsel %vm1308, %v1453, 0.0
        %v1576 = vsel %vm1309, %v1449, 0.0
        %v1577 = vsel %vm1310, %v1453, 0.0
        %v1578 = vsel %vm1311, %v1449, 0.0
        %v1579 = vsel %vm1312, %v1453, 0.0
        %v1580 = vsel %vm1313, %v1449, 0.0
        %v1581 = vsel %vm1314, %v1453, 0.0
        %v1582 = vsel %vm1315, %v1449, 0.0
        %v1583 = vsel %vm1316, %v1453, 0.0
        %v1584 = vsel %vm1317, %v1449, 0.0
        %v1585 = vsel %vm1318, %v1453, 0.0
        %v1586 = vsel %vm1319, %v1449, 0.0
        %v1587 = vsel %vm1320, %v1453, 0.0
        %v1588 = vsel %vm1321, %v1449, 0.0
        %v1589 = vsel %vm1322, %v1453, 0.0
        %v1590 = vsel %vm1323, %v1449, 0.0
        %v1591 = vsel %vm1324, %v1453, 0.0
        %v1592 = vsel %vm1325, %v1449, 0.0
        %v1593 = vsel %vm1326, %v1453, 0.0
        %v1594 = vsel %vm1327, %v1449, 0.0
        %v1595 = vsel %vm1328, %v1453, 0.0
        %v1596 = vsel %vm1329, %v1449, 0.0
        %v1597 = vsel %vm1330, %v1453, 0.0
        %v1598 = vsel %vm1331, %v1449, 0.0
        %v1599 = vsel %vm1332, %v1453, 0.0
        %v1600 = vsel %vm1333, %v1449, 0.0
        %v1601 = vsel %vm1334, %v1453, 0.0
        %v1602 = vsel %vm1335, %v1449, 0.0
        %v1603 = vsel %vm1336, %v1453, 0.0
        %v1604 = vsel %vm1337, %v1449, 0.0
        %v1605 = vsel %vm1338, %v1453, 0.0
        %v1606 = vsel %vm1339, %v1449, 0.0
        %v1607 = vsel %vm1340, %v1453, 0.0
        %v1608 = vsel %vm1341, %v1449, 0.0
        %v1609 = vsel %vm1342, %v1453, 0.0
        %v1610 = vsel %vm1343, %v1449, 0.0
        %v1611 = vsel %vm1344, %v1453, 0.0
        %v1612 = vsel %vm1345, %v1449, 0.0
        %v1613 = vsel %vm1346, %v1453, 0.0
        %v1614 = vsel %vm1347, %v1449, 0.0
        %v1615 = vsel %vm1348, %v1453, 0.0
        %v1616 = vsel %vm1349, %v1449, 0.0
        %v1617 = vsel %vm1350, %v1453, 0.0
        %v1618 = vsel %vm1351, %v1449, 0.0
        %v1619 = vsel %vm1352, %v1453, 0.0
        %v1620 = vsel %vm1353, %v1449, 0.0
        %v1621 = vsel %vm1354, %v1453, 0.0
        %v1622 = vsel %vm1355, %v1449, 0.0
        %v1623 = vsel %vm1356, %v1453, 0.0
        %v1624 = vsel %vm1357, %v1449, 0.0
        %v1625 = vsel %vm1358, %v1453, 0.0
        %v1626 = vsel %vm1359, %v1449, 0.0
        %v1627 = vsel %vm1360, %v1453, 0.0
        %v1628 = vsel %vm1361, %v1449, 0.0
        %v1629 = vsel %vm1362, %v1453, 0.0
        %v1630 = vsel %vm1363, %v1449, 0.0
        %v1631 = vsel %vm1364, %v1453, 0.0
        %v1632 = vsel %vm1365, %v1449, 0.0
        %v1633 = vsel %vm1366, %v1453, 0.0
        %v1634 = vsel %vm1367, %v1449, 0.0
        %v1635 = vsel %vm1368, %v1453, 0.0
        %v1636 = vsel %vm1369, %v1449, 0.0
        %v1637 = vsel %vm1370, %v1453, 0.0
        %v1638 = vsel %vm1371, %v1449, 0.0
        %v1639 = vsel %vm1372, %v1453, 0.0
        %v1640 = vsel %vm1373, %v1449, 0.0
        %v1641 = vsel %vm1374, %v1453, 0.0
        %v1642 = vsel %vm1375, %v1449, 0.0
        %v1643 = vsel %vm1376, %v1453, 0.0
        %v1644 = vsel %vm1377, %v1449, 0.0
        %v1645 = vsel %vm1378, %v1453, 0.0
        %v1646 = vsel %vm1379, %v1449, 0.0
        %v1647 = vsel %vm1380, %v1453, 0.0
        %v1648 = vsel %vm1381, %v1449, 0.0
        %v1649 = vsel %vm1382, %v1453, 0.0
        %v1650 = vsel %vm1383, %v1449, 0.0
        %v1651 = vsel %vm1384, %v1453, 0.0
        %v1652 = vsel %vm1385, %v1449, 0.0
        %v1653 = vsel %vm1386, %v1453, 0.0
        %v1654 = vsel %vm1387, %v1449, 0.0
        %v1655 = vsel %vm1388, %v1453, 0.0
        %v1656 = vsel %vm1389, %v1449, 0.0
        %v1657 = vsel %vm1390, %v1453, 0.0
        %v1658 = vsel %vm1391, %v1449, 0.0
        %v1659 = vsel %vm1392, %v1453, 0.0
        %v1660 = vsel %vm1393, %v1449, 0.0
        %v1661 = vsel %vm1394, %v1453, 0.0
        %v1662 = vsel %vm1395, %v1449, 0.0
        %v1663 = vsel %vm1396, %v1453, 0.0
        %v1664 = vsel %vm1397, %v1449, 0.0
        %v1665 = vsel %vm1398, %v1453, 0.0
        %v1666 = vsel %vm1399, %v1449, 0.0
        %v1667 = vsel %vm1400, %v1453, 0.0
        %v1668 = vsel %vm1401, %v1449, 0.0
        %v1669 = vsel %vm1402, %v1453, 0.0
        %v1670 = vsel %vm1403, %v1449, 0.0
        %v1671 = vsel %vm1404, %v1453, 0.0
        %v1672 = vsel %vm1405, %v1449, 0.0
        %v1673 = vsel %vm1406, %v1453, 0.0
        %v1674 = vsel %vm1407, %v1449, 0.0
        %v1675 = vsel %vm1408, %v1453, 0.0
        %v1676 = vsel %vm1409, %v1449, 0.0
        %v1677 = vsel %vm1410, %v1453, 0.0
        %v1678 = vsel %vm1411, %v1449, 0.0
        %v1679 = vsel %vm1412, %v1453, 0.0
        %v1680 = vsel %vm1413, %v1449, 0.0
        %v1681 = vsel %vm1414, %v1453, 0.0
        %v1682 = vsel %vm1415, %v1449, 0.0
        %v1683 = vsel %vm1416, %v1453, 0.0
        %v1684 = vsel %vm1417, %v1449, 0.0
        %v1685 = vsel %vm1418, %v1453, 0.0
        %v1686 = vsel %vm1419, %v1449, 0.0
        %v1687 = vsel %vm1420, %v1453, 0.0
        %v1688 = vsel %vm1421, %v1449, 0.0
        %v1689 = vsel %vm1422, %v1453, 0.0
        %v1690 = vsel %vm1423, %v1449, 0.0
        %v1691 = vsel %vm1424, %v1453, 0.0
        %v1692 = vsel %vm1425, %v1449, 0.0
        %v1693 = vsel %vm1426, %v1453, 0.0
        %v1694 = vsel %vm1427, %v1449, 0.0
        %v1695 = vsel %vm1428, %v1453, 0.0
        %v1696 = vsel %vm1429, %v1449, 0.0
        %v1697 = vsel %vm1430, %v1453, 0.0
        %v1698 = vsel %vm1431, %v1449, 0.0
        %v1699 = vsel %vm1432, %v1453, 0.0
        %v1700 = vsel %vm1433, %v1449, 0.0
        %v1701 = vsel %vm1434, %v1453, 0.0
        %v1702 = vsel %vm1435, %v1449, 0.0
        %v1703 = vsel %vm1436, %v1453, 0.0
        %v1704 = vsel %vm1437, %v1449, 0.0
        %v1705 = vsel %vm1438, %v1453, 0.0
        %v1706 = vsel %vm1439, %v1449, 0.0
        %v1707 = vsel %vm1440, %v1453, 0.0
        %v1708 = vsel %vm1441, %v1449, 0.0
        %v1709 = vsel %vm1442, %v1453, 0.0
        %v1710 = vsel %vm1443, %v1449, 0.0
        %v1711 = vsel %vm1444, %v1453, 0.0
        %v1712 = vadd.f32 %v910, %v1456
        %v1713 = vadd.f32 %v911, %v1457
        %v1714 = vadd.f32 %v912, %v1458
        %v1715 = vadd.f32 %v913, %v1459
        %v1716 = vadd.f32 %v914, %v1460
        %v1717 = vadd.f32 %v915, %v1461
        %v1718 = vadd.f32 %v916, %v1462
        %v1719 = vadd.f32 %v917, %v1463
        %v1720 = vadd.f32 %v918, %v1464
        %v1721 = vadd.f32 %v919, %v1465
        %v1722 = vadd.f32 %v920, %v1466
        %v1723 = vadd.f32 %v921, %v1467
        %v1724 = vadd.f32 %v922, %v1468
        %v1725 = vadd.f32 %v923, %v1469
        %v1726 = vadd.f32 %v924, %v1470
        %v1727 = vadd.f32 %v925, %v1471
        %v1728 = vadd.f32 %v926, %v1472
        %v1729 = vadd.f32 %v927, %v1473
        %v1730 = vadd.f32 %v928, %v1474
        %v1731 = vadd.f32 %v929, %v1475
        %v1732 = vadd.f32 %v930, %v1476
        %v1733 = vadd.f32 %v931, %v1477
        %v1734 = vadd.f32 %v932, %v1478
        %v1735 = vadd.f32 %v933, %v1479
        %v1736 = vadd.f32 %v934, %v1480
        %v1737 = vadd.f32 %v935, %v1481
        %v1738 = vadd.f32 %v936, %v1482
        %v1739 = vadd.f32 %v937, %v1483
        %v1740 = vadd.f32 %v938, %v1484
        %v1741 = vadd.f32 %v939, %v1485
        %v1742 = vadd.f32 %v940, %v1486
        %v1743 = vadd.f32 %v941, %v1487
        %v1744 = vadd.f32 %v942, %v1488
        %v1745 = vadd.f32 %v943, %v1489
        %v1746 = vadd.f32 %v944, %v1490
        %v1747 = vadd.f32 %v945, %v1491
        %v1748 = vadd.f32 %v946, %v1492
        %v1749 = vadd.f32 %v947, %v1493
        %v1750 = vadd.f32 %v948, %v1494
        %v1751 = vadd.f32 %v949, %v1495
        %v1752 = vadd.f32 %v950, %v1496
        %v1753 = vadd.f32 %v951, %v1497
        %v1754 = vadd.f32 %v952, %v1498
        %v1755 = vadd.f32 %v953, %v1499
        %v1756 = vadd.f32 %v954, %v1500
        %v1757 = vadd.f32 %v955, %v1501
        %v1758 = vadd.f32 %v956, %v1502
        %v1759 = vadd.f32 %v957, %v1503
        %v1760 = vadd.f32 %v958, %v1504
        %v1761 = vadd.f32 %v959, %v1505
        %v1762 = vadd.f32 %v960, %v1506
        %v1763 = vadd.f32 %v961, %v1507
        %v1764 = vadd.f32 %v962, %v1508
        %v1765 = vadd.f32 %v963, %v1509
        %v1766 = vadd.f32 %v964, %v1510
        %v1767 = vadd.f32 %v965, %v1511
        %v1768 = vadd.f32 %v966, %v1512
        %v1769 = vadd.f32 %v967, %v1513
        %v1770 = vadd.f32 %v968, %v1514
        %v1771 = vadd.f32 %v969, %v1515
        %v1772 = vadd.f32 %v970, %v1516
        %v1773 = vadd.f32 %v971, %v1517
        %v1774 = vadd.f32 %v972, %v1518
        %v1775 = vadd.f32 %v973, %v1519
        %v1776 = vadd.f32 %v974, %v1520
        %v1777 = vadd.f32 %v975, %v1521
        %v1778 = vadd.f32 %v976, %v1522
        %v1779 = vadd.f32 %v977, %v1523
        %v1780 = vadd.f32 %v978, %v1524
        %v1781 = vadd.f32 %v979, %v1525
        %v1782 = vadd.f32 %v980, %v1526
        %v1783 = vadd.f32 %v981, %v1527
        %v1784 = vadd.f32 %v982, %v1528
        %v1785 = vadd.f32 %v983, %v1529
        %v1786 = vadd.f32 %v984, %v1530
        %v1787 = vadd.f32 %v985, %v1531
        %v1788 = vadd.f32 %v986, %v1532
        %v1789 = vadd.f32 %v987, %v1533
        %v1790 = vadd.f32 %v988, %v1534
        %v1791 = vadd.f32 %v989, %v1535
        %v1792 = vadd.f32 %v990, %v1536
        %v1793 = vadd.f32 %v991, %v1537
        %v1794 = vadd.f32 %v992, %v1538
        %v1795 = vadd.f32 %v993, %v1539
        %v1796 = vadd.f32 %v994, %v1540
        %v1797 = vadd.f32 %v995, %v1541
        %v1798 = vadd.f32 %v996, %v1542
        %v1799 = vadd.f32 %v997, %v1543
        %v1800 = vadd.f32 %v998, %v1544
        %v1801 = vadd.f32 %v999, %v1545
        %v1802 = vadd.f32 %v1000, %v1546
        %v1803 = vadd.f32 %v1001, %v1547
        %v1804 = vadd.f32 %v1002, %v1548
        %v1805 = vadd.f32 %v1003, %v1549
        %v1806 = vadd.f32 %v1004, %v1550
        %v1807 = vadd.f32 %v1005, %v1551
        %v1808 = vadd.f32 %v1006, %v1552
        %v1809 = vadd.f32 %v1007, %v1553
        %v1810 = vadd.f32 %v1008, %v1554
        %v1811 = vadd.f32 %v1009, %v1555
        %v1812 = vadd.f32 %v1010, %v1556
        %v1813 = vadd.f32 %v1011, %v1557
        %v1814 = vadd.f32 %v1012, %v1558
        %v1815 = vadd.f32 %v1013, %v1559
        %v1816 = vadd.f32 %v1014, %v1560
        %v1817 = vadd.f32 %v1015, %v1561
        %v1818 = vadd.f32 %v1016, %v1562
        %v1819 = vadd.f32 %v1017, %v1563
        %v1820 = vadd.f32 %v1018, %v1564
        %v1821 = vadd.f32 %v1019, %v1565
        %v1822 = vadd.f32 %v1020, %v1566
        %v1823 = vadd.f32 %v1021, %v1567
        %v1824 = vadd.f32 %v1022, %v1568
        %v1825 = vadd.f32 %v1023, %v1569
        %v1826 = vadd.f32 %v1024, %v1570
        %v1827 = vadd.f32 %v1025, %v1571
        %v1828 = vadd.f32 %v1026, %v1572
        %v1829 = vadd.f32 %v1027, %v1573
        %v1830 = vadd.f32 %v1028, %v1574
        %v1831 = vadd.f32 %v1029, %v1575
        %v1832 = vadd.f32 %v1030, %v1576
        %v1833 = vadd.f32 %v1031, %v1577
        %v1834 = vadd.f32 %v1032, %v1578
        %v1835 = vadd.f32 %v1033, %v1579
        %v1836 = vadd.f32 %v1034, %v1580
        %v1837 = vadd.f32 %v1035, %v1581
        %v1838 = vadd.f32 %v1036, %v1582
        %v1839 = vadd.f32 %v1037, %v1583
        %v1840 = vadd.f32 %v1038, %v1584
        %v1841 = vadd.f32 %v1039, %v1585
        %v1842 = vadd.f32 %v1040, %v1586
        %v1843 = vadd.f32 %v1041, %v1587
        %v1844 = vadd.f32 %v1042, %v1588
        %v1845 = vadd.f32 %v1043, %v1589
        %v1846 = vadd.f32 %v1044, %v1590
        %v1847 = vadd.f32 %v1045, %v1591
        %v1848 = vadd.f32 %v1046, %v1592
        %v1849 = vadd.f32 %v1047, %v1593
        %v1850 = vadd.f32 %v1048, %v1594
        %v1851 = vadd.f32 %v1049, %v1595
        %v1852 = vadd.f32 %v1050, %v1596
        %v1853 = vadd.f32 %v1051, %v1597
        %v1854 = vadd.f32 %v1052, %v1598
        %v1855 = vadd.f32 %v1053, %v1599
        %v1856 = vadd.f32 %v1054, %v1600
        %v1857 = vadd.f32 %v1055, %v1601
        %v1858 = vadd.f32 %v1056, %v1602
        %v1859 = vadd.f32 %v1057, %v1603
        %v1860 = vadd.f32 %v1058, %v1604
        %v1861 = vadd.f32 %v1059, %v1605
        %v1862 = vadd.f32 %v1060, %v1606
        %v1863 = vadd.f32 %v1061, %v1607
        %v1864 = vadd.f32 %v1062, %v1608
        %v1865 = vadd.f32 %v1063, %v1609
        %v1866 = vadd.f32 %v1064, %v1610
        %v1867 = vadd.f32 %v1065, %v1611
        %v1868 = vadd.f32 %v1066, %v1612
        %v1869 = vadd.f32 %v1067, %v1613
        %v1870 = vadd.f32 %v1068, %v1614
        %v1871 = vadd.f32 %v1069, %v1615
        %v1872 = vadd.f32 %v1070, %v1616
        %v1873 = vadd.f32 %v1071, %v1617
        %v1874 = vadd.f32 %v1072, %v1618
        %v1875 = vadd.f32 %v1073, %v1619
        %v1876 = vadd.f32 %v1074, %v1620
        %v1877 = vadd.f32 %v1075, %v1621
        %v1878 = vadd.f32 %v1076, %v1622
        %v1879 = vadd.f32 %v1077, %v1623
        %v1880 = vadd.f32 %v1078, %v1624
        %v1881 = vadd.f32 %v1079, %v1625
        %v1882 = vadd.f32 %v1080, %v1626
        %v1883 = vadd.f32 %v1081, %v1627
        %v1884 = vadd.f32 %v1082, %v1628
        %v1885 = vadd.f32 %v1083, %v1629
        %v1886 = vadd.f32 %v1084, %v1630
        %v1887 = vadd.f32 %v1085, %v1631
        %v1888 = vadd.f32 %v1086, %v1632
        %v1889 = vadd.f32 %v1087, %v1633
        %v1890 = vadd.f32 %v1088, %v1634
        %v1891 = vadd.f32 %v1089, %v1635
        %v1892 = vadd.f32 %v1090, %v1636
        %v1893 = vadd.f32 %v1091, %v1637
        %v1894 = vadd.f32 %v1092, %v1638
        %v1895 = vadd.f32 %v1093, %v1639
        %v1896 = vadd.f32 %v1094, %v1640
        %v1897 = vadd.f32 %v1095, %v1641
        %v1898 = vadd.f32 %v1096, %v1642
        %v1899 = vadd.f32 %v1097, %v1643
        %v1900 = vadd.f32 %v1098, %v1644
        %v1901 = vadd.f32 %v1099, %v1645
        %v1902 = vadd.f32 %v1100, %v1646
        %v1903 = vadd.f32 %v1101, %v1647
        %v1904 = vadd.f32 %v1102, %v1648
        %v1905 = vadd.f32 %v1103, %v1649
        %v1906 = vadd.f32 %v1104, %v1650
        %v1907 = vadd.f32 %v1105, %v1651
        %v1908 = vadd.f32 %v1106, %v1652
        %v1909 = vadd.f32 %v1107, %v1653
        %v1910 = vadd.f32 %v1108, %v1654
        %v1911 = vadd.f32 %v1109, %v1655
        %v1912 = vadd.f32 %v1110, %v1656
        %v1913 = vadd.f32 %v1111, %v1657
        %v1914 = vadd.f32 %v1112, %v1658
        %v1915 = vadd.f32 %v1113, %v1659
        %v1916 = vadd.f32 %v1114, %v1660
        %v1917 = vadd.f32 %v1115, %v1661
        %v1918 = vadd.f32 %v1116, %v1662
        %v1919 = vadd.f32 %v1117, %v1663
        %v1920 = vadd.f32 %v1118, %v1664
        %v1921 = vadd.f32 %v1119, %v1665
        %v1922 = vadd.f32 %v1120, %v1666
        %v1923 = vadd.f32 %v1121, %v1667
        %v1924 = vadd.f32 %v1122, %v1668
        %v1925 = vadd.f32 %v1123, %v1669
        %v1926 = vadd.f32 %v1124, %v1670
        %v1927 = vadd.f32 %v1125, %v1671
        %v1928 = vadd.f32 %v1126, %v1672
        %v1929 = vadd.f32 %v1127, %v1673
        %v1930 = vadd.f32 %v1128, %v1674
        %v1931 = vadd.f32 %v1129, %v1675
        %v1932 = vadd.f32 %v1130, %v1676
        %v1933 = vadd.f32 %v1131, %v1677
        %v1934 = vadd.f32 %v1132, %v1678
        %v1935 = vadd.f32 %v1133, %v1679
        %v1936 = vadd.f32 %v1134, %v1680
        %v1937 = vadd.f32 %v1135, %v1681
        %v1938 = vadd.f32 %v1136, %v1682
        %v1939 = vadd.f32 %v1137, %v1683
        %v1940 = vadd.f32 %v1138, %v1684
        %v1941 = vadd.f32 %v1139, %v1685
        %v1942 = vadd.f32 %v1140, %v1686
        %v1943 = vadd.f32 %v1141, %v1687
        %v1944 = vadd.f32 %v1142, %v1688
        %v1945 = vadd.f32 %v1143, %v1689
        %v1946 = vadd.f32 %v1144, %v1690
        %v1947 = vadd.f32 %v1145, %v1691
        %v1948 = vadd.f32 %v1146, %v1692
        %v1949 = vadd.f32 %v1147, %v1693
        %v1950 = vadd.f32 %v1148, %v1694
        %v1951 = vadd.f32 %v1149, %v1695
        %v1952 = vadd.f32 %v1150, %v1696
        %v1953 = vadd.f32 %v1151, %v1697
        %v1954 = vadd.f32 %v1152, %v1698
        %v1955 = vadd.f32 %v1153, %v1699
        %v1956 = vadd.f32 %v1154, %v1700
        %v1957 = vadd.f32 %v1155, %v1701
        %v1958 = vadd.f32 %v1156, %v1702
        %v1959 = vadd.f32 %v1157, %v1703
        %v1960 = vadd.f32 %v1158, %v1704
        %v1961 = vadd.f32 %v1159, %v1705
        %v1962 = vadd.f32 %v1160, %v1706
        %v1963 = vadd.f32 %v1161, %v1707
        %v1964 = vadd.f32 %v1162, %v1708
        %v1965 = vadd.f32 %v1163, %v1709
        %v1966 = vadd.f32 %v1164, %v1710
        %v1967 = vadd.f32 %v1165, %v1711
        %v1968 = vadd.f32 %v480, 1.0
        %v1969 = vsub.f32 %v478, %v1968
        %v1970 = vand.u32 2147483647, %v1969
        %v1971 = vsub.f32 1.0, %v1970
        %v1972 = vmul.f32 %v614, %v1971
        %vm1973 = vcmp.ge.f32.partialorder %v1968, 0.0
        %vm1974 = vmand %vm621, %vm1973
        %vm1975 = vcmp.le.f32.partialorder %v1968, 31.0
        %vm1976 = vmand %vm1974, %vm1975
        %v1977 = vsel %vm1976, %v1972, 0.0
        %v1978 = vmax.f32 %v1968, 0.0
        %v1979 = vmin.f32 %v1978, 31.0
        %v1980 = vcvt.f32.s32.to.zero.pseudo %v1979
        %v1981 = vmul.u32 %v1980, 32
        %v1982 = vadd.s32 %v1981, %v629
        %v1983 = vlaneseq
        %v1984 = vshrl.u32 %v1983, 7
        %v1985 = vsub.s32 0, %v1984
        %v1986 = vrot.slane %v1982, %v1985
        %v1987 = vlaneseq
        %v1988 = vshrl.u32 %v1987, 7
        %v1989 = vsub.s32 1, %v1988
        %v1990 = vrot.slane %v1982, %v1989
        %vm1991 = vcmp.eq.s32.totalorder %v482, %v1986
        %vm1992 = vcmp.eq.s32.totalorder %v482, %v1990
        %vm1993 = vcmp.eq.s32.totalorder %v483, %v1986
        %vm1994 = vcmp.eq.s32.totalorder %v483, %v1990
        %vm1995 = vcmp.eq.s32.totalorder %v484, %v1986
        %vm1996 = vcmp.eq.s32.totalorder %v484, %v1990
        %vm1997 = vcmp.eq.s32.totalorder %v485, %v1986
        %vm1998 = vcmp.eq.s32.totalorder %v485, %v1990
        %vm1999 = vcmp.eq.s32.totalorder %v486, %v1986
        %vm2000 = vcmp.eq.s32.totalorder %v486, %v1990
        %vm2001 = vcmp.eq.s32.totalorder %v487, %v1986
        %vm2002 = vcmp.eq.s32.totalorder %v487, %v1990
        %vm2003 = vcmp.eq.s32.totalorder %v488, %v1986
        %vm2004 = vcmp.eq.s32.totalorder %v488, %v1990
        %vm2005 = vcmp.eq.s32.totalorder %v489, %v1986
        %vm2006 = vcmp.eq.s32.totalorder %v489, %v1990
        %vm2007 = vcmp.eq.s32.totalorder %v490, %v1986
        %vm2008 = vcmp.eq.s32.totalorder %v490, %v1990
        %vm2009 = vcmp.eq.s32.totalorder %v491, %v1986
        %vm2010 = vcmp.eq.s32.totalorder %v491, %v1990
        %vm2011 = vcmp.eq.s32.totalorder %v492, %v1986
        %vm2012 = vcmp.eq.s32.totalorder %v492, %v1990
        %vm2013 = vcmp.eq.s32.totalorder %v493, %v1986
        %vm2014 = vcmp.eq.s32.totalorder %v493, %v1990
        %vm2015 = vcmp.eq.s32.totalorder %v494, %v1986
        %vm2016 = vcmp.eq.s32.totalorder %v494, %v1990
        %vm2017 = vcmp.eq.s32.totalorder %v495, %v1986
        %vm2018 = vcmp.eq.s32.totalorder %v495, %v1990
        %vm2019 = vcmp.eq.s32.totalorder %v496, %v1986
        %vm2020 = vcmp.eq.s32.totalorder %v496, %v1990
        %vm2021 = vcmp.eq.s32.totalorder %v497, %v1986
        %vm2022 = vcmp.eq.s32.totalorder %v497, %v1990
        %vm2023 = vcmp.eq.s32.totalorder %v498, %v1986
        %vm2024 = vcmp.eq.s32.totalorder %v498, %v1990
        %vm2025 = vcmp.eq.s32.totalorder %v499, %v1986
        %vm2026 = vcmp.eq.s32.totalorder %v499, %v1990
        %vm2027 = vcmp.eq.s32.totalorder %v500, %v1986
        %vm2028 = vcmp.eq.s32.totalorder %v500, %v1990
        %vm2029 = vcmp.eq.s32.totalorder %v501, %v1986
        %vm2030 = vcmp.eq.s32.totalorder %v501, %v1990
        %vm2031 = vcmp.eq.s32.totalorder %v502, %v1986
        %vm2032 = vcmp.eq.s32.totalorder %v502, %v1990
        %vm2033 = vcmp.eq.s32.totalorder %v503, %v1986
        %vm2034 = vcmp.eq.s32.totalorder %v503, %v1990
        %vm2035 = vcmp.eq.s32.totalorder %v504, %v1986
        %vm2036 = vcmp.eq.s32.totalorder %v504, %v1990
        %vm2037 = vcmp.eq.s32.totalorder %v505, %v1986
        %vm2038 = vcmp.eq.s32.totalorder %v505, %v1990
        %vm2039 = vcmp.eq.s32.totalorder %v506, %v1986
        %vm2040 = vcmp.eq.s32.totalorder %v506, %v1990
        %vm2041 = vcmp.eq.s32.totalorder %v507, %v1986
        %vm2042 = vcmp.eq.s32.totalorder %v507, %v1990
        %vm2043 = vcmp.eq.s32.totalorder %v508, %v1986
        %vm2044 = vcmp.eq.s32.totalorder %v508, %v1990
        %vm2045 = vcmp.eq.s32.totalorder %v509, %v1986
        %vm2046 = vcmp.eq.s32.totalorder %v509, %v1990
        %vm2047 = vcmp.eq.s32.totalorder %v510, %v1986
        %vm2048 = vcmp.eq.s32.totalorder %v510, %v1990
        %vm2049 = vcmp.eq.s32.totalorder %v511, %v1986
        %vm2050 = vcmp.eq.s32.totalorder %v511, %v1990
        %vm2051 = vcmp.eq.s32.totalorder %v512, %v1986
        %vm2052 = vcmp.eq.s32.totalorder %v512, %v1990
        %vm2053 = vcmp.eq.s32.totalorder %v513, %v1986
        %vm2054 = vcmp.eq.s32.totalorder %v513, %v1990
        %vm2055 = vcmp.eq.s32.totalorder %v514, %v1986
        %vm2056 = vcmp.eq.s32.totalorder %v514, %v1990
        %vm2057 = vcmp.eq.s32.totalorder %v515, %v1986
        %vm2058 = vcmp.eq.s32.totalorder %v515, %v1990
        %vm2059 = vcmp.eq.s32.totalorder %v516, %v1986
        %vm2060 = vcmp.eq.s32.totalorder %v516, %v1990
        %vm2061 = vcmp.eq.s32.totalorder %v517, %v1986
        %vm2062 = vcmp.eq.s32.totalorder %v517, %v1990
        %vm2063 = vcmp.eq.s32.totalorder %v518, %v1986
        %vm2064 = vcmp.eq.s32.totalorder %v518, %v1990
        %vm2065 = vcmp.eq.s32.totalorder %v519, %v1986
        %vm2066 = vcmp.eq.s32.totalorder %v519, %v1990
        %vm2067 = vcmp.eq.s32.totalorder %v520, %v1986
        %vm2068 = vcmp.eq.s32.totalorder %v520, %v1990
        %vm2069 = vcmp.eq.s32.totalorder %v521, %v1986
        %vm2070 = vcmp.eq.s32.totalorder %v521, %v1990
        %vm2071 = vcmp.eq.s32.totalorder %v522, %v1986
        %vm2072 = vcmp.eq.s32.totalorder %v522, %v1990
        %vm2073 = vcmp.eq.s32.totalorder %v523, %v1986
        %vm2074 = vcmp.eq.s32.totalorder %v523, %v1990
        %vm2075 = vcmp.eq.s32.totalorder %v524, %v1986
        %vm2076 = vcmp.eq.s32.totalorder %v524, %v1990
        %vm2077 = vcmp.eq.s32.totalorder %v525, %v1986
        %vm2078 = vcmp.eq.s32.totalorder %v525, %v1990
        %vm2079 = vcmp.eq.s32.totalorder %v526, %v1986
        %vm2080 = vcmp.eq.s32.totalorder %v526, %v1990
        %vm2081 = vcmp.eq.s32.totalorder %v527, %v1986
        %vm2082 = vcmp.eq.s32.totalorder %v527, %v1990
        %vm2083 = vcmp.eq.s32.totalorder %v528, %v1986
        %vm2084 = vcmp.eq.s32.totalorder %v528, %v1990
        %vm2085 = vcmp.eq.s32.totalorder %v529, %v1986
        %vm2086 = vcmp.eq.s32.totalorder %v529, %v1990
        %vm2087 = vcmp.eq.s32.totalorder %v530, %v1986
        %vm2088 = vcmp.eq.s32.totalorder %v530, %v1990
        %vm2089 = vcmp.eq.s32.totalorder %v531, %v1986
        %vm2090 = vcmp.eq.s32.totalorder %v531, %v1990
        %vm2091 = vcmp.eq.s32.totalorder %v532, %v1986
        %vm2092 = vcmp.eq.s32.totalorder %v532, %v1990
        %vm2093 = vcmp.eq.s32.totalorder %v533, %v1986
        %vm2094 = vcmp.eq.s32.totalorder %v533, %v1990
        %vm2095 = vcmp.eq.s32.totalorder %v534, %v1986
        %vm2096 = vcmp.eq.s32.totalorder %v534, %v1990
        %vm2097 = vcmp.eq.s32.totalorder %v535, %v1986
        %vm2098 = vcmp.eq.s32.totalorder %v535, %v1990
        %vm2099 = vcmp.eq.s32.totalorder %v536, %v1986
        %vm2100 = vcmp.eq.s32.totalorder %v536, %v1990
        %vm2101 = vcmp.eq.s32.totalorder %v537, %v1986
        %vm2102 = vcmp.eq.s32.totalorder %v537, %v1990
        %vm2103 = vcmp.eq.s32.totalorder %v538, %v1986
        %vm2104 = vcmp.eq.s32.totalorder %v538, %v1990
        %vm2105 = vcmp.eq.s32.totalorder %v539, %v1986
        %vm2106 = vcmp.eq.s32.totalorder %v539, %v1990
        %vm2107 = vcmp.eq.s32.totalorder %v540, %v1986
        %vm2108 = vcmp.eq.s32.totalorder %v540, %v1990
        %vm2109 = vcmp.eq.s32.totalorder %v541, %v1986
        %vm2110 = vcmp.eq.s32.totalorder %v541, %v1990
        %vm2111 = vcmp.eq.s32.totalorder %v542, %v1986
        %vm2112 = vcmp.eq.s32.totalorder %v542, %v1990
        %vm2113 = vcmp.eq.s32.totalorder %v543, %v1986
        %vm2114 = vcmp.eq.s32.totalorder %v543, %v1990
        %vm2115 = vcmp.eq.s32.totalorder %v544, %v1986
        %vm2116 = vcmp.eq.s32.totalorder %v544, %v1990
        %vm2117 = vcmp.eq.s32.totalorder %v545, %v1986
        %vm2118 = vcmp.eq.s32.totalorder %v545, %v1990
        %vm2119 = vcmp.eq.s32.totalorder %v546, %v1986
        %vm2120 = vcmp.eq.s32.totalorder %v546, %v1990
        %vm2121 = vcmp.eq.s32.totalorder %v547, %v1986
        %vm2122 = vcmp.eq.s32.totalorder %v547, %v1990
        %vm2123 = vcmp.eq.s32.totalorder %v548, %v1986
        %vm2124 = vcmp.eq.s32.totalorder %v548, %v1990
        %vm2125 = vcmp.eq.s32.totalorder %v549, %v1986
        %vm2126 = vcmp.eq.s32.totalorder %v549, %v1990
        %vm2127 = vcmp.eq.s32.totalorder %v550, %v1986
        %vm2128 = vcmp.eq.s32.totalorder %v550, %v1990
        %vm2129 = vcmp.eq.s32.totalorder %v551, %v1986
        %vm2130 = vcmp.eq.s32.totalorder %v551, %v1990
        %vm2131 = vcmp.eq.s32.totalorder %v552, %v1986
        %vm2132 = vcmp.eq.s32.totalorder %v552, %v1990
        %vm2133 = vcmp.eq.s32.totalorder %v553, %v1986
        %vm2134 = vcmp.eq.s32.totalorder %v553, %v1990
        %vm2135 = vcmp.eq.s32.totalorder %v554, %v1986
        %vm2136 = vcmp.eq.s32.totalorder %v554, %v1990
        %vm2137 = vcmp.eq.s32.totalorder %v555, %v1986
        %vm2138 = vcmp.eq.s32.totalorder %v555, %v1990
        %vm2139 = vcmp.eq.s32.totalorder %v556, %v1986
        %vm2140 = vcmp.eq.s32.totalorder %v556, %v1990
        %vm2141 = vcmp.eq.s32.totalorder %v557, %v1986
        %vm2142 = vcmp.eq.s32.totalorder %v557, %v1990
        %vm2143 = vcmp.eq.s32.totalorder %v558, %v1986
        %vm2144 = vcmp.eq.s32.totalorder %v558, %v1990
        %vm2145 = vcmp.eq.s32.totalorder %v559, %v1986
        %vm2146 = vcmp.eq.s32.totalorder %v559, %v1990
        %vm2147 = vcmp.eq.s32.totalorder %v560, %v1986
        %vm2148 = vcmp.eq.s32.totalorder %v560, %v1990
        %vm2149 = vcmp.eq.s32.totalorder %v561, %v1986
        %vm2150 = vcmp.eq.s32.totalorder %v561, %v1990
        %vm2151 = vcmp.eq.s32.totalorder %v562, %v1986
        %vm2152 = vcmp.eq.s32.totalorder %v562, %v1990
        %vm2153 = vcmp.eq.s32.totalorder %v563, %v1986
        %vm2154 = vcmp.eq.s32.totalorder %v563, %v1990
        %vm2155 = vcmp.eq.s32.totalorder %v564, %v1986
        %vm2156 = vcmp.eq.s32.totalorder %v564, %v1990
        %vm2157 = vcmp.eq.s32.totalorder %v565, %v1986
        %vm2158 = vcmp.eq.s32.totalorder %v565, %v1990
        %vm2159 = vcmp.eq.s32.totalorder %v566, %v1986
        %vm2160 = vcmp.eq.s32.totalorder %v566, %v1990
        %vm2161 = vcmp.eq.s32.totalorder %v567, %v1986
        %vm2162 = vcmp.eq.s32.totalorder %v567, %v1990
        %vm2163 = vcmp.eq.s32.totalorder %v568, %v1986
        %vm2164 = vcmp.eq.s32.totalorder %v568, %v1990
        %vm2165 = vcmp.eq.s32.totalorder %v569, %v1986
        %vm2166 = vcmp.eq.s32.totalorder %v569, %v1990
        %vm2167 = vcmp.eq.s32.totalorder %v570, %v1986
        %vm2168 = vcmp.eq.s32.totalorder %v570, %v1990
        %vm2169 = vcmp.eq.s32.totalorder %v571, %v1986
        %vm2170 = vcmp.eq.s32.totalorder %v571, %v1990
        %vm2171 = vcmp.eq.s32.totalorder %v572, %v1986
        %vm2172 = vcmp.eq.s32.totalorder %v572, %v1990
        %vm2173 = vcmp.eq.s32.totalorder %v573, %v1986
        %vm2174 = vcmp.eq.s32.totalorder %v573, %v1990
        %vm2175 = vcmp.eq.s32.totalorder %v574, %v1986
        %vm2176 = vcmp.eq.s32.totalorder %v574, %v1990
        %vm2177 = vcmp.eq.s32.totalorder %v575, %v1986
        %vm2178 = vcmp.eq.s32.totalorder %v575, %v1990
        %vm2179 = vcmp.eq.s32.totalorder %v576, %v1986
        %vm2180 = vcmp.eq.s32.totalorder %v576, %v1990
        %vm2181 = vcmp.eq.s32.totalorder %v577, %v1986
        %vm2182 = vcmp.eq.s32.totalorder %v577, %v1990
        %vm2183 = vcmp.eq.s32.totalorder %v578, %v1986
        %vm2184 = vcmp.eq.s32.totalorder %v578, %v1990
        %vm2185 = vcmp.eq.s32.totalorder %v579, %v1986
        %vm2186 = vcmp.eq.s32.totalorder %v579, %v1990
        %vm2187 = vcmp.eq.s32.totalorder %v580, %v1986
        %vm2188 = vcmp.eq.s32.totalorder %v580, %v1990
        %vm2189 = vcmp.eq.s32.totalorder %v581, %v1986
        %vm2190 = vcmp.eq.s32.totalorder %v581, %v1990
        %vm2191 = vcmp.eq.s32.totalorder %v582, %v1986
        %vm2192 = vcmp.eq.s32.totalorder %v582, %v1990
        %vm2193 = vcmp.eq.s32.totalorder %v583, %v1986
        %vm2194 = vcmp.eq.s32.totalorder %v583, %v1990
        %vm2195 = vcmp.eq.s32.totalorder %v584, %v1986
        %vm2196 = vcmp.eq.s32.totalorder %v584, %v1990
        %vm2197 = vcmp.eq.s32.totalorder %v585, %v1986
        %vm2198 = vcmp.eq.s32.totalorder %v585, %v1990
        %vm2199 = vcmp.eq.s32.totalorder %v586, %v1986
        %vm2200 = vcmp.eq.s32.totalorder %v586, %v1990
        %vm2201 = vcmp.eq.s32.totalorder %v587, %v1986
        %vm2202 = vcmp.eq.s32.totalorder %v587, %v1990
        %vm2203 = vcmp.eq.s32.totalorder %v588, %v1986
        %vm2204 = vcmp.eq.s32.totalorder %v588, %v1990
        %vm2205 = vcmp.eq.s32.totalorder %v589, %v1986
        %vm2206 = vcmp.eq.s32.totalorder %v589, %v1990
        %vm2207 = vcmp.eq.s32.totalorder %v590, %v1986
        %vm2208 = vcmp.eq.s32.totalorder %v590, %v1990
        %vm2209 = vcmp.eq.s32.totalorder %v591, %v1986
        %vm2210 = vcmp.eq.s32.totalorder %v591, %v1990
        %vm2211 = vcmp.eq.s32.totalorder %v592, %v1986
        %vm2212 = vcmp.eq.s32.totalorder %v592, %v1990
        %vm2213 = vcmp.eq.s32.totalorder %v593, %v1986
        %vm2214 = vcmp.eq.s32.totalorder %v593, %v1990
        %vm2215 = vcmp.eq.s32.totalorder %v594, %v1986
        %vm2216 = vcmp.eq.s32.totalorder %v594, %v1990
        %vm2217 = vcmp.eq.s32.totalorder %v595, %v1986
        %vm2218 = vcmp.eq.s32.totalorder %v595, %v1990
        %vm2219 = vcmp.eq.s32.totalorder %v596, %v1986
        %vm2220 = vcmp.eq.s32.totalorder %v596, %v1990
        %vm2221 = vcmp.eq.s32.totalorder %v597, %v1986
        %vm2222 = vcmp.eq.s32.totalorder %v597, %v1990
        %vm2223 = vcmp.eq.s32.totalorder %v598, %v1986
        %vm2224 = vcmp.eq.s32.totalorder %v598, %v1990
        %vm2225 = vcmp.eq.s32.totalorder %v599, %v1986
        %vm2226 = vcmp.eq.s32.totalorder %v599, %v1990
        %vm2227 = vcmp.eq.s32.totalorder %v600, %v1986
        %vm2228 = vcmp.eq.s32.totalorder %v600, %v1990
        %vm2229 = vcmp.eq.s32.totalorder %v601, %v1986
        %vm2230 = vcmp.eq.s32.totalorder %v601, %v1990
        %vm2231 = vcmp.eq.s32.totalorder %v602, %v1986
        %vm2232 = vcmp.eq.s32.totalorder %v602, %v1990
        %vm2233 = vcmp.eq.s32.totalorder %v603, %v1986
        %vm2234 = vcmp.eq.s32.totalorder %v603, %v1990
        %vm2235 = vcmp.eq.s32.totalorder %v604, %v1986
        %vm2236 = vcmp.eq.s32.totalorder %v604, %v1990
        %vm2237 = vcmp.eq.s32.totalorder %v605, %v1986
        %vm2238 = vcmp.eq.s32.totalorder %v605, %v1990
        %vm2239 = vcmp.eq.s32.totalorder %v606, %v1986
        %vm2240 = vcmp.eq.s32.totalorder %v606, %v1990
        %vm2241 = vcmp.eq.s32.totalorder %v607, %v1986
        %vm2242 = vcmp.eq.s32.totalorder %v607, %v1990
        %vm2243 = vcmp.eq.s32.totalorder %v608, %v1986
        %vm2244 = vcmp.eq.s32.totalorder %v608, %v1990
        %vm2245 = vcmp.eq.s32.totalorder %v609, %v1986
        %vm2246 = vcmp.eq.s32.totalorder %v609, %v1990
        %v2248 = vlaneseq
        %v2249 = vshrl.u32 %v2248, 7
        %v2250 = vsub.s32 0, %v2249
        %v2251 = vrot.slane %v1977, %v2250
        %v2252 = vlaneseq
        %v2253 = vshrl.u32 %v2252, 7
        %v2254 = vsub.s32 1, %v2253
        %v2255 = vrot.slane %v1977, %v2254
        %v2258 = vsel %vm1991, %v2251, 0.0
        %v2259 = vsel %vm1992, %v2255, 0.0
        %v2260 = vsel %vm1993, %v2251, 0.0
        %v2261 = vsel %vm1994, %v2255, 0.0
        %v2262 = vsel %vm1995, %v2251, 0.0
        %v2263 = vsel %vm1996, %v2255, 0.0
        %v2264 = vsel %vm1997, %v2251, 0.0
        %v2265 = vsel %vm1998, %v2255, 0.0
        %v2266 = vsel %vm1999, %v2251, 0.0
        %v2267 = vsel %vm2000, %v2255, 0.0
        %v2268 = vsel %vm2001, %v2251, 0.0
        %v2269 = vsel %vm2002, %v2255, 0.0
        %v2270 = vsel %vm2003, %v2251, 0.0
        %v2271 = vsel %vm2004, %v2255, 0.0
        %v2272 = vsel %vm2005, %v2251, 0.0
        %v2273 = vsel %vm2006, %v2255, 0.0
        %v2274 = vsel %vm2007, %v2251, 0.0
        %v2275 = vsel %vm2008, %v2255, 0.0
        %v2276 = vsel %vm2009, %v2251, 0.0
        %v2277 = vsel %vm2010, %v2255, 0.0
        %v2278 = vsel %vm2011, %v2251, 0.0
        %v2279 = vsel %vm2012, %v2255, 0.0
        %v2280 = vsel %vm2013, %v2251, 0.0
        %v2281 = vsel %vm2014, %v2255, 0.0
        %v2282 = vsel %vm2015, %v2251, 0.0
        %v2283 = vsel %vm2016, %v2255, 0.0
        %v2284 = vsel %vm2017, %v2251, 0.0
        %v2285 = vsel %vm2018, %v2255, 0.0
        %v2286 = vsel %vm2019, %v2251, 0.0
        %v2287 = vsel %vm2020, %v2255, 0.0
        %v2288 = vsel %vm2021, %v2251, 0.0
        %v2289 = vsel %vm2022, %v2255, 0.0
        %v2290 = vsel %vm2023, %v2251, 0.0
        %v2291 = vsel %vm2024, %v2255, 0.0
        %v2292 = vsel %vm2025, %v2251, 0.0
        %v2293 = vsel %vm2026, %v2255, 0.0
        %v2294 = vsel %vm2027, %v2251, 0.0
        %v2295 = vsel %vm2028, %v2255, 0.0
        %v2296 = vsel %vm2029, %v2251, 0.0
        %v2297 = vsel %vm2030, %v2255, 0.0
        %v2298 = vsel %vm2031, %v2251, 0.0
        %v2299 = vsel %vm2032, %v2255, 0.0
        %v2300 = vsel %vm2033, %v2251, 0.0
        %v2301 = vsel %vm2034, %v2255, 0.0
        %v2302 = vsel %vm2035, %v2251, 0.0
        %v2303 = vsel %vm2036, %v2255, 0.0
        %v2304 = vsel %vm2037, %v2251, 0.0
        %v2305 = vsel %vm2038, %v2255, 0.0
        %v2306 = vsel %vm2039, %v2251, 0.0
        %v2307 = vsel %vm2040, %v2255, 0.0
        %v2308 = vsel %vm2041, %v2251, 0.0
        %v2309 = vsel %vm2042, %v2255, 0.0
        %v2310 = vsel %vm2043, %v2251, 0.0
        %v2311 = vsel %vm2044, %v2255, 0.0
        %v2312 = vsel %vm2045, %v2251, 0.0
        %v2313 = vsel %vm2046, %v2255, 0.0
        %v2314 = vsel %vm2047, %v2251, 0.0
        %v2315 = vsel %vm2048, %v2255, 0.0
        %v2316 = vsel %vm2049, %v2251, 0.0
        %v2317 = vsel %vm2050, %v2255, 0.0
        %v2318 = vsel %vm2051, %v2251, 0.0
        %v2319 = vsel %vm2052, %v2255, 0.0
        %v2320 = vsel %vm2053, %v2251, 0.0
        %v2321 = vsel %vm2054, %v2255, 0.0
        %v2322 = vsel %vm2055, %v2251, 0.0
        %v2323 = vsel %vm2056, %v2255, 0.0
        %v2324 = vsel %vm2057, %v2251, 0.0
        %v2325 = vsel %vm2058, %v2255, 0.0
        %v2326 = vsel %vm2059, %v2251, 0.0
        %v2327 = vsel %vm2060, %v2255, 0.0
        %v2328 = vsel %vm2061, %v2251, 0.0
        %v2329 = vsel %vm2062, %v2255, 0.0
        %v2330 = vsel %vm2063, %v2251, 0.0
        %v2331 = vsel %vm2064, %v2255, 0.0
        %v2332 = vsel %vm2065, %v2251, 0.0
        %v2333 = vsel %vm2066, %v2255, 0.0
        %v2334 = vsel %vm2067, %v2251, 0.0
        %v2335 = vsel %vm2068, %v2255, 0.0
        %v2336 = vsel %vm2069, %v2251, 0.0
        %v2337 = vsel %vm2070, %v2255, 0.0
        %v2338 = vsel %vm2071, %v2251, 0.0
        %v2339 = vsel %vm2072, %v2255, 0.0
        %v2340 = vsel %vm2073, %v2251, 0.0
        %v2341 = vsel %vm2074, %v2255, 0.0
        %v2342 = vsel %vm2075, %v2251, 0.0
        %v2343 = vsel %vm2076, %v2255, 0.0
        %v2344 = vsel %vm2077, %v2251, 0.0
        %v2345 = vsel %vm2078, %v2255, 0.0
        %v2346 = vsel %vm2079, %v2251, 0.0
        %v2347 = vsel %vm2080, %v2255, 0.0
        %v2348 = vsel %vm2081, %v2251, 0.0
        %v2349 = vsel %vm2082, %v2255, 0.0
        %v2350 = vsel %vm2083, %v2251, 0.0
        %v2351 = vsel %vm2084, %v2255, 0.0
        %v2352 = vsel %vm2085, %v2251, 0.0
        %v2353 = vsel %vm2086, %v2255, 0.0
        %v2354 = vsel %vm2087, %v2251, 0.0
        %v2355 = vsel %vm2088, %v2255, 0.0
        %v2356 = vsel %vm2089, %v2251, 0.0
        %v2357 = vsel %vm2090, %v2255, 0.0
        %v2358 = vsel %vm2091, %v2251, 0.0
        %v2359 = vsel %vm2092, %v2255, 0.0
        %v2360 = vsel %vm2093, %v2251, 0.0
        %v2361 = vsel %vm2094, %v2255, 0.0
        %v2362 = vsel %vm2095, %v2251, 0.0
        %v2363 = vsel %vm2096, %v2255, 0.0
        %v2364 = vsel %vm2097, %v2251, 0.0
        %v2365 = vsel %vm2098, %v2255, 0.0
        %v2366 = vsel %vm2099, %v2251, 0.0
        %v2367 = vsel %vm2100, %v2255, 0.0
        %v2368 = vsel %vm2101, %v2251, 0.0
        %v2369 = vsel %vm2102, %v2255, 0.0
        %v2370 = vsel %vm2103, %v2251, 0.0
        %v2371 = vsel %vm2104, %v2255, 0.0
        %v2372 = vsel %vm2105, %v2251, 0.0
        %v2373 = vsel %vm2106, %v2255, 0.0
        %v2374 = vsel %vm2107, %v2251, 0.0
        %v2375 = vsel %vm2108, %v2255, 0.0
        %v2376 = vsel %vm2109, %v2251, 0.0
        %v2377 = vsel %vm2110, %v2255, 0.0
        %v2378 = vsel %vm2111, %v2251, 0.0
        %v2379 = vsel %vm2112, %v2255, 0.0
        %v2380 = vsel %vm2113, %v2251, 0.0
        %v2381 = vsel %vm2114, %v2255, 0.0
        %v2382 = vsel %vm2115, %v2251, 0.0
        %v2383 = vsel %vm2116, %v2255, 0.0
        %v2384 = vsel %vm2117, %v2251, 0.0
        %v2385 = vsel %vm2118, %v2255, 0.0
        %v2386 = vsel %vm2119, %v2251, 0.0
        %v2387 = vsel %vm2120, %v2255, 0.0
        %v2388 = vsel %vm2121, %v2251, 0.0
        %v2389 = vsel %vm2122, %v2255, 0.0
        %v2390 = vsel %vm2123, %v2251, 0.0
        %v2391 = vsel %vm2124, %v2255, 0.0
        %v2392 = vsel %vm2125, %v2251, 0.0
        %v2393 = vsel %vm2126, %v2255, 0.0
        %v2394 = vsel %vm2127, %v2251, 0.0
        %v2395 = vsel %vm2128, %v2255, 0.0
        %v2396 = vsel %vm2129, %v2251, 0.0
        %v2397 = vsel %vm2130, %v2255, 0.0
        %v2398 = vsel %vm2131, %v2251, 0.0
        %v2399 = vsel %vm2132, %v2255, 0.0
        %v2400 = vsel %vm2133, %v2251, 0.0
        %v2401 = vsel %vm2134, %v2255, 0.0
        %v2402 = vsel %vm2135, %v2251, 0.0
        %v2403 = vsel %vm2136, %v2255, 0.0
        %v2404 = vsel %vm2137, %v2251, 0.0
        %v2405 = vsel %vm2138, %v2255, 0.0
        %v2406 = vsel %vm2139, %v2251, 0.0
        %v2407 = vsel %vm2140, %v2255, 0.0
        %v2408 = vsel %vm2141, %v2251, 0.0
        %v2409 = vsel %vm2142, %v2255, 0.0
        %v2410 = vsel %vm2143, %v2251, 0.0
        %v2411 = vsel %vm2144, %v2255, 0.0
        %v2412 = vsel %vm2145, %v2251, 0.0
        %v2413 = vsel %vm2146, %v2255, 0.0
        %v2414 = vsel %vm2147, %v2251, 0.0
        %v2415 = vsel %vm2148, %v2255, 0.0
        %v2416 = vsel %vm2149, %v2251, 0.0
        %v2417 = vsel %vm2150, %v2255, 0.0
        %v2418 = vsel %vm2151, %v2251, 0.0
        %v2419 = vsel %vm2152, %v2255, 0.0
        %v2420 = vsel %vm2153, %v2251, 0.0
        %v2421 = vsel %vm2154, %v2255, 0.0
        %v2422 = vsel %vm2155, %v2251, 0.0
        %v2423 = vsel %vm2156, %v2255, 0.0
        %v2424 = vsel %vm2157, %v2251, 0.0
        %v2425 = vsel %vm2158, %v2255, 0.0
        %v2426 = vsel %vm2159, %v2251, 0.0
        %v2427 = vsel %vm2160, %v2255, 0.0
        %v2428 = vsel %vm2161, %v2251, 0.0
        %v2429 = vsel %vm2162, %v2255, 0.0
        %v2430 = vsel %vm2163, %v2251, 0.0
        %v2431 = vsel %vm2164, %v2255, 0.0
        %v2432 = vsel %vm2165, %v2251, 0.0
        %v2433 = vsel %vm2166, %v2255, 0.0
        %v2434 = vsel %vm2167, %v2251, 0.0
        %v2435 = vsel %vm2168, %v2255, 0.0
        %v2436 = vsel %vm2169, %v2251, 0.0
        %v2437 = vsel %vm2170, %v2255, 0.0
        %v2438 = vsel %vm2171, %v2251, 0.0
        %v2439 = vsel %vm2172, %v2255, 0.0
        %v2440 = vsel %vm2173, %v2251, 0.0
        %v2441 = vsel %vm2174, %v2255, 0.0
        %v2442 = vsel %vm2175, %v2251, 0.0
        %v2443 = vsel %vm2176, %v2255, 0.0
        %v2444 = vsel %vm2177, %v2251, 0.0
        %v2445 = vsel %vm2178, %v2255, 0.0
        %v2446 = vsel %vm2179, %v2251, 0.0
        %v2447 = vsel %vm2180, %v2255, 0.0
        %v2448 = vsel %vm2181, %v2251, 0.0
        %v2449 = vsel %vm2182, %v2255, 0.0
        %v2450 = vsel %vm2183, %v2251, 0.0
        %v2451 = vsel %vm2184, %v2255, 0.0
        %v2452 = vsel %vm2185, %v2251, 0.0
        %v2453 = vsel %vm2186, %v2255, 0.0
        %v2454 = vsel %vm2187, %v2251, 0.0
        %v2455 = vsel %vm2188, %v2255, 0.0
        %v2456 = vsel %vm2189, %v2251, 0.0
        %v2457 = vsel %vm2190, %v2255, 0.0
        %v2458 = vsel %vm2191, %v2251, 0.0
        %v2459 = vsel %vm2192, %v2255, 0.0
        %v2460 = vsel %vm2193, %v2251, 0.0
        %v2461 = vsel %vm2194, %v2255, 0.0
        %v2462 = vsel %vm2195, %v2251, 0.0
        %v2463 = vsel %vm2196, %v2255, 0.0
        %v2464 = vsel %vm2197, %v2251, 0.0
        %v2465 = vsel %vm2198, %v2255, 0.0
        %v2466 = vsel %vm2199, %v2251, 0.0
        %v2467 = vsel %vm2200, %v2255, 0.0
        %v2468 = vsel %vm2201, %v2251, 0.0
        %v2469 = vsel %vm2202, %v2255, 0.0
        %v2470 = vsel %vm2203, %v2251, 0.0
        %v2471 = vsel %vm2204, %v2255, 0.0
        %v2472 = vsel %vm2205, %v2251, 0.0
        %v2473 = vsel %vm2206, %v2255, 0.0
        %v2474 = vsel %vm2207, %v2251, 0.0
        %v2475 = vsel %vm2208, %v2255, 0.0
        %v2476 = vsel %vm2209, %v2251, 0.0
        %v2477 = vsel %vm2210, %v2255, 0.0
        %v2478 = vsel %vm2211, %v2251, 0.0
        %v2479 = vsel %vm2212, %v2255, 0.0
        %v2480 = vsel %vm2213, %v2251, 0.0
        %v2481 = vsel %vm2214, %v2255, 0.0
        %v2482 = vsel %vm2215, %v2251, 0.0
        %v2483 = vsel %vm2216, %v2255, 0.0
        %v2484 = vsel %vm2217, %v2251, 0.0
        %v2485 = vsel %vm2218, %v2255, 0.0
        %v2486 = vsel %vm2219, %v2251, 0.0
        %v2487 = vsel %vm2220, %v2255, 0.0
        %v2488 = vsel %vm2221, %v2251, 0.0
        %v2489 = vsel %vm2222, %v2255, 0.0
        %v2490 = vsel %vm2223, %v2251, 0.0
        %v2491 = vsel %vm2224, %v2255, 0.0
        %v2492 = vsel %vm2225, %v2251, 0.0
        %v2493 = vsel %vm2226, %v2255, 0.0
        %v2494 = vsel %vm2227, %v2251, 0.0
        %v2495 = vsel %vm2228, %v2255, 0.0
        %v2496 = vsel %vm2229, %v2251, 0.0
        %v2497 = vsel %vm2230, %v2255, 0.0
        %v2498 = vsel %vm2231, %v2251, 0.0
        %v2499 = vsel %vm2232, %v2255, 0.0
        %v2500 = vsel %vm2233, %v2251, 0.0
        %v2501 = vsel %vm2234, %v2255, 0.0
        %v2502 = vsel %vm2235, %v2251, 0.0
        %v2503 = vsel %vm2236, %v2255, 0.0
        %v2504 = vsel %vm2237, %v2251, 0.0
        %v2505 = vsel %vm2238, %v2255, 0.0
        %v2506 = vsel %vm2239, %v2251, 0.0
        %v2507 = vsel %vm2240, %v2255, 0.0
        %v2508 = vsel %vm2241, %v2251, 0.0
        %v2509 = vsel %vm2242, %v2255, 0.0
        %v2510 = vsel %vm2243, %v2251, 0.0
        %v2511 = vsel %vm2244, %v2255, 0.0
        %v2512 = vsel %vm2245, %v2251, 0.0
        %v2513 = vsel %vm2246, %v2255, 0.0
        %v2514 = vadd.f32 %v1712, %v2258
        %v2515 = vadd.f32 %v1713, %v2259
        %v2516 = vadd.f32 %v1714, %v2260
        %v2517 = vadd.f32 %v1715, %v2261
        %v2518 = vadd.f32 %v1716, %v2262
        %v2519 = vadd.f32 %v1717, %v2263
        %v2520 = vadd.f32 %v1718, %v2264
        %v2521 = vadd.f32 %v1719, %v2265
        %v2522 = vadd.f32 %v1720, %v2266
        %v2523 = vadd.f32 %v1721, %v2267
        %v2524 = vadd.f32 %v1722, %v2268
        %v2525 = vadd.f32 %v1723, %v2269
        %v2526 = vadd.f32 %v1724, %v2270
        %v2527 = vadd.f32 %v1725, %v2271
        %v2528 = vadd.f32 %v1726, %v2272
        %v2529 = vadd.f32 %v1727, %v2273
        %v2530 = vadd.f32 %v1728, %v2274
        %v2531 = vadd.f32 %v1729, %v2275
        %v2532 = vadd.f32 %v1730, %v2276
        %v2533 = vadd.f32 %v1731, %v2277
        %v2534 = vadd.f32 %v1732, %v2278
        %v2535 = vadd.f32 %v1733, %v2279
        %v2536 = vadd.f32 %v1734, %v2280
        %v2537 = vadd.f32 %v1735, %v2281
        %v2538 = vadd.f32 %v1736, %v2282
        %v2539 = vadd.f32 %v1737, %v2283
        %v2540 = vadd.f32 %v1738, %v2284
        %v2541 = vadd.f32 %v1739, %v2285
        %v2542 = vadd.f32 %v1740, %v2286
        %v2543 = vadd.f32 %v1741, %v2287
        %v2544 = vadd.f32 %v1742, %v2288
        %v2545 = vadd.f32 %v1743, %v2289
        %v2546 = vadd.f32 %v1744, %v2290
        %v2547 = vadd.f32 %v1745, %v2291
        %v2548 = vadd.f32 %v1746, %v2292
        %v2549 = vadd.f32 %v1747, %v2293
        %v2550 = vadd.f32 %v1748, %v2294
        %v2551 = vadd.f32 %v1749, %v2295
        %v2552 = vadd.f32 %v1750, %v2296
        %v2553 = vadd.f32 %v1751, %v2297
        %v2554 = vadd.f32 %v1752, %v2298
        %v2555 = vadd.f32 %v1753, %v2299
        %v2556 = vadd.f32 %v1754, %v2300
        %v2557 = vadd.f32 %v1755, %v2301
        %v2558 = vadd.f32 %v1756, %v2302
        %v2559 = vadd.f32 %v1757, %v2303
        %v2560 = vadd.f32 %v1758, %v2304
        %v2561 = vadd.f32 %v1759, %v2305
        %v2562 = vadd.f32 %v1760, %v2306
        %v2563 = vadd.f32 %v1761, %v2307
        %v2564 = vadd.f32 %v1762, %v2308
        %v2565 = vadd.f32 %v1763, %v2309
        %v2566 = vadd.f32 %v1764, %v2310
        %v2567 = vadd.f32 %v1765, %v2311
        %v2568 = vadd.f32 %v1766, %v2312
        %v2569 = vadd.f32 %v1767, %v2313
        %v2570 = vadd.f32 %v1768, %v2314
        %v2571 = vadd.f32 %v1769, %v2315
        %v2572 = vadd.f32 %v1770, %v2316
        %v2573 = vadd.f32 %v1771, %v2317
        %v2574 = vadd.f32 %v1772, %v2318
        %v2575 = vadd.f32 %v1773, %v2319
        %v2576 = vadd.f32 %v1774, %v2320
        %v2577 = vadd.f32 %v1775, %v2321
        %v2578 = vadd.f32 %v1776, %v2322
        %v2579 = vadd.f32 %v1777, %v2323
        %v2580 = vadd.f32 %v1778, %v2324
        %v2581 = vadd.f32 %v1779, %v2325
        %v2582 = vadd.f32 %v1780, %v2326
        %v2583 = vadd.f32 %v1781, %v2327
        %v2584 = vadd.f32 %v1782, %v2328
        %v2585 = vadd.f32 %v1783, %v2329
        %v2586 = vadd.f32 %v1784, %v2330
        %v2587 = vadd.f32 %v1785, %v2331
        %v2588 = vadd.f32 %v1786, %v2332
        %v2589 = vadd.f32 %v1787, %v2333
        %v2590 = vadd.f32 %v1788, %v2334
        %v2591 = vadd.f32 %v1789, %v2335
        %v2592 = vadd.f32 %v1790, %v2336
        %v2593 = vadd.f32 %v1791, %v2337
        %v2594 = vadd.f32 %v1792, %v2338
        %v2595 = vadd.f32 %v1793, %v2339
        %v2596 = vadd.f32 %v1794, %v2340
        %v2597 = vadd.f32 %v1795, %v2341
        %v2598 = vadd.f32 %v1796, %v2342
        %v2599 = vadd.f32 %v1797, %v2343
        %v2600 = vadd.f32 %v1798, %v2344
        %v2601 = vadd.f32 %v1799, %v2345
        %v2602 = vadd.f32 %v1800, %v2346
        %v2603 = vadd.f32 %v1801, %v2347
        %v2604 = vadd.f32 %v1802, %v2348
        %v2605 = vadd.f32 %v1803, %v2349
        %v2606 = vadd.f32 %v1804, %v2350
        %v2607 = vadd.f32 %v1805, %v2351
        %v2608 = vadd.f32 %v1806, %v2352
        %v2609 = vadd.f32 %v1807, %v2353
        %v2610 = vadd.f32 %v1808, %v2354
        %v2611 = vadd.f32 %v1809, %v2355
        %v2612 = vadd.f32 %v1810, %v2356
        %v2613 = vadd.f32 %v1811, %v2357
        %v2614 = vadd.f32 %v1812, %v2358
        %v2615 = vadd.f32 %v1813, %v2359
        %v2616 = vadd.f32 %v1814, %v2360
        %v2617 = vadd.f32 %v1815, %v2361
        %v2618 = vadd.f32 %v1816, %v2362
        %v2619 = vadd.f32 %v1817, %v2363
        %v2620 = vadd.f32 %v1818, %v2364
        %v2621 = vadd.f32 %v1819, %v2365
        %v2622 = vadd.f32 %v1820, %v2366
        %v2623 = vadd.f32 %v1821, %v2367
        %v2624 = vadd.f32 %v1822, %v2368
        %v2625 = vadd.f32 %v1823, %v2369
        %v2626 = vadd.f32 %v1824, %v2370
        %v2627 = vadd.f32 %v1825, %v2371
        %v2628 = vadd.f32 %v1826, %v2372
        %v2629 = vadd.f32 %v1827, %v2373
        %v2630 = vadd.f32 %v1828, %v2374
        %v2631 = vadd.f32 %v1829, %v2375
        %v2632 = vadd.f32 %v1830, %v2376
        %v2633 = vadd.f32 %v1831, %v2377
        %v2634 = vadd.f32 %v1832, %v2378
        %v2635 = vadd.f32 %v1833, %v2379
        %v2636 = vadd.f32 %v1834, %v2380
        %v2637 = vadd.f32 %v1835, %v2381
        %v2638 = vadd.f32 %v1836, %v2382
        %v2639 = vadd.f32 %v1837, %v2383
        %v2640 = vadd.f32 %v1838, %v2384
        %v2641 = vadd.f32 %v1839, %v2385
        %v2642 = vadd.f32 %v1840, %v2386
        %v2643 = vadd.f32 %v1841, %v2387
        %v2644 = vadd.f32 %v1842, %v2388
        %v2645 = vadd.f32 %v1843, %v2389
        %v2646 = vadd.f32 %v1844, %v2390
        %v2647 = vadd.f32 %v1845, %v2391
        %v2648 = vadd.f32 %v1846, %v2392
        %v2649 = vadd.f32 %v1847, %v2393
        %v2650 = vadd.f32 %v1848, %v2394
        %v2651 = vadd.f32 %v1849, %v2395
        %v2652 = vadd.f32 %v1850, %v2396
        %v2653 = vadd.f32 %v1851, %v2397
        %v2654 = vadd.f32 %v1852, %v2398
        %v2655 = vadd.f32 %v1853, %v2399
        %v2656 = vadd.f32 %v1854, %v2400
        %v2657 = vadd.f32 %v1855, %v2401
        %v2658 = vadd.f32 %v1856, %v2402
        %v2659 = vadd.f32 %v1857, %v2403
        %v2660 = vadd.f32 %v1858, %v2404
        %v2661 = vadd.f32 %v1859, %v2405
        %v2662 = vadd.f32 %v1860, %v2406
        %v2663 = vadd.f32 %v1861, %v2407
        %v2664 = vadd.f32 %v1862, %v2408
        %v2665 = vadd.f32 %v1863, %v2409
        %v2666 = vadd.f32 %v1864, %v2410
        %v2667 = vadd.f32 %v1865, %v2411
        %v2668 = vadd.f32 %v1866, %v2412
        %v2669 = vadd.f32 %v1867, %v2413
        %v2670 = vadd.f32 %v1868, %v2414
        %v2671 = vadd.f32 %v1869, %v2415
        %v2672 = vadd.f32 %v1870, %v2416
        %v2673 = vadd.f32 %v1871, %v2417
        %v2674 = vadd.f32 %v1872, %v2418
        %v2675 = vadd.f32 %v1873, %v2419
        %v2676 = vadd.f32 %v1874, %v2420
        %v2677 = vadd.f32 %v1875, %v2421
        %v2678 = vadd.f32 %v1876, %v2422
        %v2679 = vadd.f32 %v1877, %v2423
        %v2680 = vadd.f32 %v1878, %v2424
        %v2681 = vadd.f32 %v1879, %v2425
        %v2682 = vadd.f32 %v1880, %v2426
        %v2683 = vadd.f32 %v1881, %v2427
        %v2684 = vadd.f32 %v1882, %v2428
        %v2685 = vadd.f32 %v1883, %v2429
        %v2686 = vadd.f32 %v1884, %v2430
        %v2687 = vadd.f32 %v1885, %v2431
        %v2688 = vadd.f32 %v1886, %v2432
        %v2689 = vadd.f32 %v1887, %v2433
        %v2690 = vadd.f32 %v1888, %v2434
        %v2691 = vadd.f32 %v1889, %v2435
        %v2692 = vadd.f32 %v1890, %v2436
        %v2693 = vadd.f32 %v1891, %v2437
        %v2694 = vadd.f32 %v1892, %v2438
        %v2695 = vadd.f32 %v1893, %v2439
        %v2696 = vadd.f32 %v1894, %v2440
        %v2697 = vadd.f32 %v1895, %v2441
        %v2698 = vadd.f32 %v1896, %v2442
        %v2699 = vadd.f32 %v1897, %v2443
        %v2700 = vadd.f32 %v1898, %v2444
        %v2701 = vadd.f32 %v1899, %v2445
        %v2702 = vadd.f32 %v1900, %v2446
        %v2703 = vadd.f32 %v1901, %v2447
        %v2704 = vadd.f32 %v1902, %v2448
        %v2705 = vadd.f32 %v1903, %v2449
        %v2706 = vadd.f32 %v1904, %v2450
        %v2707 = vadd.f32 %v1905, %v2451
        %v2708 = vadd.f32 %v1906, %v2452
        %v2709 = vadd.f32 %v1907, %v2453
        %v2710 = vadd.f32 %v1908, %v2454
        %v2711 = vadd.f32 %v1909, %v2455
        %v2712 = vadd.f32 %v1910, %v2456
        %v2713 = vadd.f32 %v1911, %v2457
        %v2714 = vadd.f32 %v1912, %v2458
        %v2715 = vadd.f32 %v1913, %v2459
        %v2716 = vadd.f32 %v1914, %v2460
        %v2717 = vadd.f32 %v1915, %v2461
        %v2718 = vadd.f32 %v1916, %v2462
        %v2719 = vadd.f32 %v1917, %v2463
        %v2720 = vadd.f32 %v1918, %v2464
        %v2721 = vadd.f32 %v1919, %v2465
        %v2722 = vadd.f32 %v1920, %v2466
        %v2723 = vadd.f32 %v1921, %v2467
        %v2724 = vadd.f32 %v1922, %v2468
        %v2725 = vadd.f32 %v1923, %v2469
        %v2726 = vadd.f32 %v1924, %v2470
        %v2727 = vadd.f32 %v1925, %v2471
        %v2728 = vadd.f32 %v1926, %v2472
        %v2729 = vadd.f32 %v1927, %v2473
        %v2730 = vadd.f32 %v1928, %v2474
        %v2731 = vadd.f32 %v1929, %v2475
        %v2732 = vadd.f32 %v1930, %v2476
        %v2733 = vadd.f32 %v1931, %v2477
        %v2734 = vadd.f32 %v1932, %v2478
        %v2735 = vadd.f32 %v1933, %v2479
        %v2736 = vadd.f32 %v1934, %v2480
        %v2737 = vadd.f32 %v1935, %v2481
        %v2738 = vadd.f32 %v1936, %v2482
        %v2739 = vadd.f32 %v1937, %v2483
        %v2740 = vadd.f32 %v1938, %v2484
        %v2741 = vadd.f32 %v1939, %v2485
        %v2742 = vadd.f32 %v1940, %v2486
        %v2743 = vadd.f32 %v1941, %v2487
        %v2744 = vadd.f32 %v1942, %v2488
        %v2745 = vadd.f32 %v1943, %v2489
        %v2746 = vadd.f32 %v1944, %v2490
        %v2747 = vadd.f32 %v1945, %v2491
        %v2748 = vadd.f32 %v1946, %v2492
        %v2749 = vadd.f32 %v1947, %v2493
        %v2750 = vadd.f32 %v1948, %v2494
        %v2751 = vadd.f32 %v1949, %v2495
        %v2752 = vadd.f32 %v1950, %v2496
        %v2753 = vadd.f32 %v1951, %v2497
        %v2754 = vadd.f32 %v1952, %v2498
        %v2755 = vadd.f32 %v1953, %v2499
        %v2756 = vadd.f32 %v1954, %v2500
        %v2757 = vadd.f32 %v1955, %v2501
        %v2758 = vadd.f32 %v1956, %v2502
        %v2759 = vadd.f32 %v1957, %v2503
        %v2760 = vadd.f32 %v1958, %v2504
        %v2761 = vadd.f32 %v1959, %v2505
        %v2762 = vadd.f32 %v1960, %v2506
        %v2763 = vadd.f32 %v1961, %v2507
        %v2764 = vadd.f32 %v1962, %v2508
        %v2765 = vadd.f32 %v1963, %v2509
        %v2766 = vadd.f32 %v1964, %v2510
        %v2767 = vadd.f32 %v1965, %v2511
        %v2768 = vadd.f32 %v1966, %v2512
        %v2769 = vadd.f32 %v1967, %v2513
        %v2770 = vmul.f32 %v1169, %v1971
        %vm2771 = vmand %vm1173, %vm1973
        %vm2772 = vmand %vm2771, %vm1975
        %v2773 = vsel %vm2772, %v2770, 0.0
        %v2774 = vadd.s32 %v1981, %v1179
        %v2775 = vlaneseq
        %v2776 = vshrl.u32 %v2775, 7
        %v2777 = vsub.s32 0, %v2776
        %v2778 = vrot.slane %v2774, %v2777
        %v2779 = vlaneseq
        %v2780 = vshrl.u32 %v2779, 7
        %v2781 = vsub.s32 1, %v2780
        %v2782 = vrot.slane %v2774, %v2781
        %vm2783 = vcmp.eq.s32.totalorder %v482, %v2778
        %vm2784 = vcmp.eq.s32.totalorder %v482, %v2782
        %vm2785 = vcmp.eq.s32.totalorder %v483, %v2778
        %vm2786 = vcmp.eq.s32.totalorder %v483, %v2782
        %vm2787 = vcmp.eq.s32.totalorder %v484, %v2778
        %vm2788 = vcmp.eq.s32.totalorder %v484, %v2782
        %vm2789 = vcmp.eq.s32.totalorder %v485, %v2778
        %vm2790 = vcmp.eq.s32.totalorder %v485, %v2782
        %vm2791 = vcmp.eq.s32.totalorder %v486, %v2778
        %vm2792 = vcmp.eq.s32.totalorder %v486, %v2782
        %vm2793 = vcmp.eq.s32.totalorder %v487, %v2778
        %vm2794 = vcmp.eq.s32.totalorder %v487, %v2782
        %vm2795 = vcmp.eq.s32.totalorder %v488, %v2778
        %vm2796 = vcmp.eq.s32.totalorder %v488, %v2782
        %vm2797 = vcmp.eq.s32.totalorder %v489, %v2778
        %vm2798 = vcmp.eq.s32.totalorder %v489, %v2782
        %vm2799 = vcmp.eq.s32.totalorder %v490, %v2778
        %vm2800 = vcmp.eq.s32.totalorder %v490, %v2782
        %vm2801 = vcmp.eq.s32.totalorder %v491, %v2778
        %vm2802 = vcmp.eq.s32.totalorder %v491, %v2782
        %vm2803 = vcmp.eq.s32.totalorder %v492, %v2778
        %vm2804 = vcmp.eq.s32.totalorder %v492, %v2782
        %vm2805 = vcmp.eq.s32.totalorder %v493, %v2778
        %vm2806 = vcmp.eq.s32.totalorder %v493, %v2782
        %vm2807 = vcmp.eq.s32.totalorder %v494, %v2778
        %vm2808 = vcmp.eq.s32.totalorder %v494, %v2782
        %vm2809 = vcmp.eq.s32.totalorder %v495, %v2778
        %vm2810 = vcmp.eq.s32.totalorder %v495, %v2782
        %vm2811 = vcmp.eq.s32.totalorder %v496, %v2778
        %vm2812 = vcmp.eq.s32.totalorder %v496, %v2782
        %vm2813 = vcmp.eq.s32.totalorder %v497, %v2778
        %vm2814 = vcmp.eq.s32.totalorder %v497, %v2782
        %vm2815 = vcmp.eq.s32.totalorder %v498, %v2778
        %vm2816 = vcmp.eq.s32.totalorder %v498, %v2782
        %vm2817 = vcmp.eq.s32.totalorder %v499, %v2778
        %vm2818 = vcmp.eq.s32.totalorder %v499, %v2782
        %vm2819 = vcmp.eq.s32.totalorder %v500, %v2778
        %vm2820 = vcmp.eq.s32.totalorder %v500, %v2782
        %vm2821 = vcmp.eq.s32.totalorder %v501, %v2778
        %vm2822 = vcmp.eq.s32.totalorder %v501, %v2782
        %vm2823 = vcmp.eq.s32.totalorder %v502, %v2778
        %vm2824 = vcmp.eq.s32.totalorder %v502, %v2782
        %vm2825 = vcmp.eq.s32.totalorder %v503, %v2778
        %vm2826 = vcmp.eq.s32.totalorder %v503, %v2782
        %vm2827 = vcmp.eq.s32.totalorder %v504, %v2778
        %vm2828 = vcmp.eq.s32.totalorder %v504, %v2782
        %vm2829 = vcmp.eq.s32.totalorder %v505, %v2778
        %vm2830 = vcmp.eq.s32.totalorder %v505, %v2782
        %vm2831 = vcmp.eq.s32.totalorder %v506, %v2778
        %vm2832 = vcmp.eq.s32.totalorder %v506, %v2782
        %vm2833 = vcmp.eq.s32.totalorder %v507, %v2778
        %vm2834 = vcmp.eq.s32.totalorder %v507, %v2782
        %vm2835 = vcmp.eq.s32.totalorder %v508, %v2778
        %vm2836 = vcmp.eq.s32.totalorder %v508, %v2782
        %vm2837 = vcmp.eq.s32.totalorder %v509, %v2778
        %vm2838 = vcmp.eq.s32.totalorder %v509, %v2782
        %vm2839 = vcmp.eq.s32.totalorder %v510, %v2778
        %vm2840 = vcmp.eq.s32.totalorder %v510, %v2782
        %vm2841 = vcmp.eq.s32.totalorder %v511, %v2778
        %vm2842 = vcmp.eq.s32.totalorder %v511, %v2782
        %vm2843 = vcmp.eq.s32.totalorder %v512, %v2778
        %vm2844 = vcmp.eq.s32.totalorder %v512, %v2782
        %vm2845 = vcmp.eq.s32.totalorder %v513, %v2778
        %vm2846 = vcmp.eq.s32.totalorder %v513, %v2782
        %vm2847 = vcmp.eq.s32.totalorder %v514, %v2778
        %vm2848 = vcmp.eq.s32.totalorder %v514, %v2782
        %vm2849 = vcmp.eq.s32.totalorder %v515, %v2778
        %vm2850 = vcmp.eq.s32.totalorder %v515, %v2782
        %vm2851 = vcmp.eq.s32.totalorder %v516, %v2778
        %vm2852 = vcmp.eq.s32.totalorder %v516, %v2782
        %vm2853 = vcmp.eq.s32.totalorder %v517, %v2778
        %vm2854 = vcmp.eq.s32.totalorder %v517, %v2782
        %vm2855 = vcmp.eq.s32.totalorder %v518, %v2778
        %vm2856 = vcmp.eq.s32.totalorder %v518, %v2782
        %vm2857 = vcmp.eq.s32.totalorder %v519, %v2778
        %vm2858 = vcmp.eq.s32.totalorder %v519, %v2782
        %vm2859 = vcmp.eq.s32.totalorder %v520, %v2778
        %vm2860 = vcmp.eq.s32.totalorder %v520, %v2782
        %vm2861 = vcmp.eq.s32.totalorder %v521, %v2778
        %vm2862 = vcmp.eq.s32.totalorder %v521, %v2782
        %vm2863 = vcmp.eq.s32.totalorder %v522, %v2778
        %vm2864 = vcmp.eq.s32.totalorder %v522, %v2782
        %vm2865 = vcmp.eq.s32.totalorder %v523, %v2778
        %vm2866 = vcmp.eq.s32.totalorder %v523, %v2782
        %vm2867 = vcmp.eq.s32.totalorder %v524, %v2778
        %vm2868 = vcmp.eq.s32.totalorder %v524, %v2782
        %vm2869 = vcmp.eq.s32.totalorder %v525, %v2778
        %vm2870 = vcmp.eq.s32.totalorder %v525, %v2782
        %vm2871 = vcmp.eq.s32.totalorder %v526, %v2778
        %vm2872 = vcmp.eq.s32.totalorder %v526, %v2782
        %vm2873 = vcmp.eq.s32.totalorder %v527, %v2778
        %vm2874 = vcmp.eq.s32.totalorder %v527, %v2782
        %vm2875 = vcmp.eq.s32.totalorder %v528, %v2778
        %vm2876 = vcmp.eq.s32.totalorder %v528, %v2782
        %vm2877 = vcmp.eq.s32.totalorder %v529, %v2778
        %vm2878 = vcmp.eq.s32.totalorder %v529, %v2782
        %vm2879 = vcmp.eq.s32.totalorder %v530, %v2778
        %vm2880 = vcmp.eq.s32.totalorder %v530, %v2782
        %vm2881 = vcmp.eq.s32.totalorder %v531, %v2778
        %vm2882 = vcmp.eq.s32.totalorder %v531, %v2782
        %vm2883 = vcmp.eq.s32.totalorder %v532, %v2778
        %vm2884 = vcmp.eq.s32.totalorder %v532, %v2782
        %vm2885 = vcmp.eq.s32.totalorder %v533, %v2778
        %vm2886 = vcmp.eq.s32.totalorder %v533, %v2782
        %vm2887 = vcmp.eq.s32.totalorder %v534, %v2778
        %vm2888 = vcmp.eq.s32.totalorder %v534, %v2782
        %vm2889 = vcmp.eq.s32.totalorder %v535, %v2778
        %vm2890 = vcmp.eq.s32.totalorder %v535, %v2782
        %vm2891 = vcmp.eq.s32.totalorder %v536, %v2778
        %vm2892 = vcmp.eq.s32.totalorder %v536, %v2782
        %vm2893 = vcmp.eq.s32.totalorder %v537, %v2778
        %vm2894 = vcmp.eq.s32.totalorder %v537, %v2782
        %vm2895 = vcmp.eq.s32.totalorder %v538, %v2778
        %vm2896 = vcmp.eq.s32.totalorder %v538, %v2782
        %vm2897 = vcmp.eq.s32.totalorder %v539, %v2778
        %vm2898 = vcmp.eq.s32.totalorder %v539, %v2782
        %vm2899 = vcmp.eq.s32.totalorder %v540, %v2778
        %vm2900 = vcmp.eq.s32.totalorder %v540, %v2782
        %vm2901 = vcmp.eq.s32.totalorder %v541, %v2778
        %vm2902 = vcmp.eq.s32.totalorder %v541, %v2782
        %vm2903 = vcmp.eq.s32.totalorder %v542, %v2778
        %vm2904 = vcmp.eq.s32.totalorder %v542, %v2782
        %vm2905 = vcmp.eq.s32.totalorder %v543, %v2778
        %vm2906 = vcmp.eq.s32.totalorder %v543, %v2782
        %vm2907 = vcmp.eq.s32.totalorder %v544, %v2778
        %vm2908 = vcmp.eq.s32.totalorder %v544, %v2782
        %vm2909 = vcmp.eq.s32.totalorder %v545, %v2778
        %vm2910 = vcmp.eq.s32.totalorder %v545, %v2782
        %vm2911 = vcmp.eq.s32.totalorder %v546, %v2778
        %vm2912 = vcmp.eq.s32.totalorder %v546, %v2782
        %vm2913 = vcmp.eq.s32.totalorder %v547, %v2778
        %vm2914 = vcmp.eq.s32.totalorder %v547, %v2782
        %vm2915 = vcmp.eq.s32.totalorder %v548, %v2778
        %vm2916 = vcmp.eq.s32.totalorder %v548, %v2782
        %vm2917 = vcmp.eq.s32.totalorder %v549, %v2778
        %vm2918 = vcmp.eq.s32.totalorder %v549, %v2782
        %vm2919 = vcmp.eq.s32.totalorder %v550, %v2778
        %vm2920 = vcmp.eq.s32.totalorder %v550, %v2782
        %vm2921 = vcmp.eq.s32.totalorder %v551, %v2778
        %vm2922 = vcmp.eq.s32.totalorder %v551, %v2782
        %vm2923 = vcmp.eq.s32.totalorder %v552, %v2778
        %vm2924 = vcmp.eq.s32.totalorder %v552, %v2782
        %vm2925 = vcmp.eq.s32.totalorder %v553, %v2778
        %vm2926 = vcmp.eq.s32.totalorder %v553, %v2782
        %vm2927 = vcmp.eq.s32.totalorder %v554, %v2778
        %vm2928 = vcmp.eq.s32.totalorder %v554, %v2782
        %vm2929 = vcmp.eq.s32.totalorder %v555, %v2778
        %vm2930 = vcmp.eq.s32.totalorder %v555, %v2782
        %vm2931 = vcmp.eq.s32.totalorder %v556, %v2778
        %vm2932 = vcmp.eq.s32.totalorder %v556, %v2782
        %vm2933 = vcmp.eq.s32.totalorder %v557, %v2778
        %vm2934 = vcmp.eq.s32.totalorder %v557, %v2782
        %vm2935 = vcmp.eq.s32.totalorder %v558, %v2778
        %vm2936 = vcmp.eq.s32.totalorder %v558, %v2782
        %vm2937 = vcmp.eq.s32.totalorder %v559, %v2778
        %vm2938 = vcmp.eq.s32.totalorder %v559, %v2782
        %vm2939 = vcmp.eq.s32.totalorder %v560, %v2778
        %vm2940 = vcmp.eq.s32.totalorder %v560, %v2782
        %vm2941 = vcmp.eq.s32.totalorder %v561, %v2778
        %vm2942 = vcmp.eq.s32.totalorder %v561, %v2782
        %vm2943 = vcmp.eq.s32.totalorder %v562, %v2778
        %vm2944 = vcmp.eq.s32.totalorder %v562, %v2782
        %vm2945 = vcmp.eq.s32.totalorder %v563, %v2778
        %vm2946 = vcmp.eq.s32.totalorder %v563, %v2782
        %vm2947 = vcmp.eq.s32.totalorder %v564, %v2778
        %vm2948 = vcmp.eq.s32.totalorder %v564, %v2782
        %vm2949 = vcmp.eq.s32.totalorder %v565, %v2778
        %vm2950 = vcmp.eq.s32.totalorder %v565, %v2782
        %vm2951 = vcmp.eq.s32.totalorder %v566, %v2778
        %vm2952 = vcmp.eq.s32.totalorder %v566, %v2782
        %vm2953 = vcmp.eq.s32.totalorder %v567, %v2778
        %vm2954 = vcmp.eq.s32.totalorder %v567, %v2782
        %vm2955 = vcmp.eq.s32.totalorder %v568, %v2778
        %vm2956 = vcmp.eq.s32.totalorder %v568, %v2782
        %vm2957 = vcmp.eq.s32.totalorder %v569, %v2778
        %vm2958 = vcmp.eq.s32.totalorder %v569, %v2782
        %vm2959 = vcmp.eq.s32.totalorder %v570, %v2778
        %vm2960 = vcmp.eq.s32.totalorder %v570, %v2782
        %vm2961 = vcmp.eq.s32.totalorder %v571, %v2778
        %vm2962 = vcmp.eq.s32.totalorder %v571, %v2782
        %vm2963 = vcmp.eq.s32.totalorder %v572, %v2778
        %vm2964 = vcmp.eq.s32.totalorder %v572, %v2782
        %vm2965 = vcmp.eq.s32.totalorder %v573, %v2778
        %vm2966 = vcmp.eq.s32.totalorder %v573, %v2782
        %vm2967 = vcmp.eq.s32.totalorder %v574, %v2778
        %vm2968 = vcmp.eq.s32.totalorder %v574, %v2782
        %vm2969 = vcmp.eq.s32.totalorder %v575, %v2778
        %vm2970 = vcmp.eq.s32.totalorder %v575, %v2782
        %vm2971 = vcmp.eq.s32.totalorder %v576, %v2778
        %vm2972 = vcmp.eq.s32.totalorder %v576, %v2782
        %vm2973 = vcmp.eq.s32.totalorder %v577, %v2778
        %vm2974 = vcmp.eq.s32.totalorder %v577, %v2782
        %vm2975 = vcmp.eq.s32.totalorder %v578, %v2778
        %vm2976 = vcmp.eq.s32.totalorder %v578, %v2782
        %vm2977 = vcmp.eq.s32.totalorder %v579, %v2778
        %vm2978 = vcmp.eq.s32.totalorder %v579, %v2782
        %vm2979 = vcmp.eq.s32.totalorder %v580, %v2778
        %vm2980 = vcmp.eq.s32.totalorder %v580, %v2782
        %vm2981 = vcmp.eq.s32.totalorder %v581, %v2778
        %vm2982 = vcmp.eq.s32.totalorder %v581, %v2782
        %vm2983 = vcmp.eq.s32.totalorder %v582, %v2778
        %vm2984 = vcmp.eq.s32.totalorder %v582, %v2782
        %vm2985 = vcmp.eq.s32.totalorder %v583, %v2778
        %vm2986 = vcmp.eq.s32.totalorder %v583, %v2782
        %vm2987 = vcmp.eq.s32.totalorder %v584, %v2778
        %vm2988 = vcmp.eq.s32.totalorder %v584, %v2782
        %vm2989 = vcmp.eq.s32.totalorder %v585, %v2778
        %vm2990 = vcmp.eq.s32.totalorder %v585, %v2782
        %vm2991 = vcmp.eq.s32.totalorder %v586, %v2778
        %vm2992 = vcmp.eq.s32.totalorder %v586, %v2782
        %vm2993 = vcmp.eq.s32.totalorder %v587, %v2778
        %vm2994 = vcmp.eq.s32.totalorder %v587, %v2782
        %vm2995 = vcmp.eq.s32.totalorder %v588, %v2778
        %vm2996 = vcmp.eq.s32.totalorder %v588, %v2782
        %vm2997 = vcmp.eq.s32.totalorder %v589, %v2778
        %vm2998 = vcmp.eq.s32.totalorder %v589, %v2782
        %vm2999 = vcmp.eq.s32.totalorder %v590, %v2778
        %vm3000 = vcmp.eq.s32.totalorder %v590, %v2782
        %vm3001 = vcmp.eq.s32.totalorder %v591, %v2778
        %vm3002 = vcmp.eq.s32.totalorder %v591, %v2782
        %vm3003 = vcmp.eq.s32.totalorder %v592, %v2778
        %vm3004 = vcmp.eq.s32.totalorder %v592, %v2782
        %vm3005 = vcmp.eq.s32.totalorder %v593, %v2778
        %vm3006 = vcmp.eq.s32.totalorder %v593, %v2782
        %vm3007 = vcmp.eq.s32.totalorder %v594, %v2778
        %vm3008 = vcmp.eq.s32.totalorder %v594, %v2782
        %vm3009 = vcmp.eq.s32.totalorder %v595, %v2778
        %vm3010 = vcmp.eq.s32.totalorder %v595, %v2782
        %vm3011 = vcmp.eq.s32.totalorder %v596, %v2778
        %vm3012 = vcmp.eq.s32.totalorder %v596, %v2782
        %vm3013 = vcmp.eq.s32.totalorder %v597, %v2778
        %vm3014 = vcmp.eq.s32.totalorder %v597, %v2782
        %vm3015 = vcmp.eq.s32.totalorder %v598, %v2778
        %vm3016 = vcmp.eq.s32.totalorder %v598, %v2782
        %vm3017 = vcmp.eq.s32.totalorder %v599, %v2778
        %vm3018 = vcmp.eq.s32.totalorder %v599, %v2782
        %vm3019 = vcmp.eq.s32.totalorder %v600, %v2778
        %vm3020 = vcmp.eq.s32.totalorder %v600, %v2782
        %vm3021 = vcmp.eq.s32.totalorder %v601, %v2778
        %vm3022 = vcmp.eq.s32.totalorder %v601, %v2782
        %vm3023 = vcmp.eq.s32.totalorder %v602, %v2778
        %vm3024 = vcmp.eq.s32.totalorder %v602, %v2782
        %vm3025 = vcmp.eq.s32.totalorder %v603, %v2778
        %vm3026 = vcmp.eq.s32.totalorder %v603, %v2782
        %vm3027 = vcmp.eq.s32.totalorder %v604, %v2778
        %vm3028 = vcmp.eq.s32.totalorder %v604, %v2782
        %vm3029 = vcmp.eq.s32.totalorder %v605, %v2778
        %vm3030 = vcmp.eq.s32.totalorder %v605, %v2782
        %vm3031 = vcmp.eq.s32.totalorder %v606, %v2778
        %vm3032 = vcmp.eq.s32.totalorder %v606, %v2782
        %vm3033 = vcmp.eq.s32.totalorder %v607, %v2778
        %vm3034 = vcmp.eq.s32.totalorder %v607, %v2782
        %vm3035 = vcmp.eq.s32.totalorder %v608, %v2778
        %vm3036 = vcmp.eq.s32.totalorder %v608, %v2782
        %vm3037 = vcmp.eq.s32.totalorder %v609, %v2778
        %vm3038 = vcmp.eq.s32.totalorder %v609, %v2782
        %v3040 = vlaneseq
        %v3041 = vshrl.u32 %v3040, 7
        %v3042 = vsub.s32 0, %v3041
        %v3043 = vrot.slane %v2773, %v3042
        %v3044 = vlaneseq
        %v3045 = vshrl.u32 %v3044, 7
        %v3046 = vsub.s32 1, %v3045
        %v3047 = vrot.slane %v2773, %v3046
        %v3050 = vsel %vm2783, %v3043, 0.0
        %v3051 = vsel %vm2784, %v3047, 0.0
        %v3052 = vsel %vm2785, %v3043, 0.0
        %v3053 = vsel %vm2786, %v3047, 0.0
        %v3054 = vsel %vm2787, %v3043, 0.0
        %v3055 = vsel %vm2788, %v3047, 0.0
        %v3056 = vsel %vm2789, %v3043, 0.0
        %v3057 = vsel %vm2790, %v3047, 0.0
        %v3058 = vsel %vm2791, %v3043, 0.0
        %v3059 = vsel %vm2792, %v3047, 0.0
        %v3060 = vsel %vm2793, %v3043, 0.0
        %v3061 = vsel %vm2794, %v3047, 0.0
        %v3062 = vsel %vm2795, %v3043, 0.0
        %v3063 = vsel %vm2796, %v3047, 0.0
        %v3064 = vsel %vm2797, %v3043, 0.0
        %v3065 = vsel %vm2798, %v3047, 0.0
        %v3066 = vsel %vm2799, %v3043, 0.0
        %v3067 = vsel %vm2800, %v3047, 0.0
        %v3068 = vsel %vm2801, %v3043, 0.0
        %v3069 = vsel %vm2802, %v3047, 0.0
        %v3070 = vsel %vm2803, %v3043, 0.0
        %v3071 = vsel %vm2804, %v3047, 0.0
        %v3072 = vsel %vm2805, %v3043, 0.0
        %v3073 = vsel %vm2806, %v3047, 0.0
        %v3074 = vsel %vm2807, %v3043, 0.0
        %v3075 = vsel %vm2808, %v3047, 0.0
        %v3076 = vsel %vm2809, %v3043, 0.0
        %v3077 = vsel %vm2810, %v3047, 0.0
        %v3078 = vsel %vm2811, %v3043, 0.0
        %v3079 = vsel %vm2812, %v3047, 0.0
        %v3080 = vsel %vm2813, %v3043, 0.0
        %v3081 = vsel %vm2814, %v3047, 0.0
        %v3082 = vsel %vm2815, %v3043, 0.0
        %v3083 = vsel %vm2816, %v3047, 0.0
        %v3084 = vsel %vm2817, %v3043, 0.0
        %v3085 = vsel %vm2818, %v3047, 0.0
        %v3086 = vsel %vm2819, %v3043, 0.0
        %v3087 = vsel %vm2820, %v3047, 0.0
        %v3088 = vsel %vm2821, %v3043, 0.0
        %v3089 = vsel %vm2822, %v3047, 0.0
        %v3090 = vsel %vm2823, %v3043, 0.0
        %v3091 = vsel %vm2824, %v3047, 0.0
        %v3092 = vsel %vm2825, %v3043, 0.0
        %v3093 = vsel %vm2826, %v3047, 0.0
        %v3094 = vsel %vm2827, %v3043, 0.0
        %v3095 = vsel %vm2828, %v3047, 0.0
        %v3096 = vsel %vm2829, %v3043, 0.0
        %v3097 = vsel %vm2830, %v3047, 0.0
        %v3098 = vsel %vm2831, %v3043, 0.0
        %v3099 = vsel %vm2832, %v3047, 0.0
        %v3100 = vsel %vm2833, %v3043, 0.0
        %v3101 = vsel %vm2834, %v3047, 0.0
        %v3102 = vsel %vm2835, %v3043, 0.0
        %v3103 = vsel %vm2836, %v3047, 0.0
        %v3104 = vsel %vm2837, %v3043, 0.0
        %v3105 = vsel %vm2838, %v3047, 0.0
        %v3106 = vsel %vm2839, %v3043, 0.0
        %v3107 = vsel %vm2840, %v3047, 0.0
        %v3108 = vsel %vm2841, %v3043, 0.0
        %v3109 = vsel %vm2842, %v3047, 0.0
        %v3110 = vsel %vm2843, %v3043, 0.0
        %v3111 = vsel %vm2844, %v3047, 0.0
        %v3112 = vsel %vm2845, %v3043, 0.0
        %v3113 = vsel %vm2846, %v3047, 0.0
        %v3114 = vsel %vm2847, %v3043, 0.0
        %v3115 = vsel %vm2848, %v3047, 0.0
        %v3116 = vsel %vm2849, %v3043, 0.0
        %v3117 = vsel %vm2850, %v3047, 0.0
        %v3118 = vsel %vm2851, %v3043, 0.0
        %v3119 = vsel %vm2852, %v3047, 0.0
        %v3120 = vsel %vm2853, %v3043, 0.0
        %v3121 = vsel %vm2854, %v3047, 0.0
        %v3122 = vsel %vm2855, %v3043, 0.0
        %v3123 = vsel %vm2856, %v3047, 0.0
        %v3124 = vsel %vm2857, %v3043, 0.0
        %v3125 = vsel %vm2858, %v3047, 0.0
        %v3126 = vsel %vm2859, %v3043, 0.0
        %v3127 = vsel %vm2860, %v3047, 0.0
        %v3128 = vsel %vm2861, %v3043, 0.0
        %v3129 = vsel %vm2862, %v3047, 0.0
        %v3130 = vsel %vm2863, %v3043, 0.0
        %v3131 = vsel %vm2864, %v3047, 0.0
        %v3132 = vsel %vm2865, %v3043, 0.0
        %v3133 = vsel %vm2866, %v3047, 0.0
        %v3134 = vsel %vm2867, %v3043, 0.0
        %v3135 = vsel %vm2868, %v3047, 0.0
        %v3136 = vsel %vm2869, %v3043, 0.0
        %v3137 = vsel %vm2870, %v3047, 0.0
        %v3138 = vsel %vm2871, %v3043, 0.0
        %v3139 = vsel %vm2872, %v3047, 0.0
        %v3140 = vsel %vm2873, %v3043, 0.0
        %v3141 = vsel %vm2874, %v3047, 0.0
        %v3142 = vsel %vm2875, %v3043, 0.0
        %v3143 = vsel %vm2876, %v3047, 0.0
        %v3144 = vsel %vm2877, %v3043, 0.0
        %v3145 = vsel %vm2878, %v3047, 0.0
        %v3146 = vsel %vm2879, %v3043, 0.0
        %v3147 = vsel %vm2880, %v3047, 0.0
        %v3148 = vsel %vm2881, %v3043, 0.0
        %v3149 = vsel %vm2882, %v3047, 0.0
        %v3150 = vsel %vm2883, %v3043, 0.0
        %v3151 = vsel %vm2884, %v3047, 0.0
        %v3152 = vsel %vm2885, %v3043, 0.0
        %v3153 = vsel %vm2886, %v3047, 0.0
        %v3154 = vsel %vm2887, %v3043, 0.0
        %v3155 = vsel %vm2888, %v3047, 0.0
        %v3156 = vsel %vm2889, %v3043, 0.0
        %v3157 = vsel %vm2890, %v3047, 0.0
        %v3158 = vsel %vm2891, %v3043, 0.0
        %v3159 = vsel %vm2892, %v3047, 0.0
        %v3160 = vsel %vm2893, %v3043, 0.0
        %v3161 = vsel %vm2894, %v3047, 0.0
        %v3162 = vsel %vm2895, %v3043, 0.0
        %v3163 = vsel %vm2896, %v3047, 0.0
        %v3164 = vsel %vm2897, %v3043, 0.0
        %v3165 = vsel %vm2898, %v3047, 0.0
        %v3166 = vsel %vm2899, %v3043, 0.0
        %v3167 = vsel %vm2900, %v3047, 0.0
        %v3168 = vsel %vm2901, %v3043, 0.0
        %v3169 = vsel %vm2902, %v3047, 0.0
        %v3170 = vsel %vm2903, %v3043, 0.0
        %v3171 = vsel %vm2904, %v3047, 0.0
        %v3172 = vsel %vm2905, %v3043, 0.0
        %v3173 = vsel %vm2906, %v3047, 0.0
        %v3174 = vsel %vm2907, %v3043, 0.0
        %v3175 = vsel %vm2908, %v3047, 0.0
        %v3176 = vsel %vm2909, %v3043, 0.0
        %v3177 = vsel %vm2910, %v3047, 0.0
        %v3178 = vsel %vm2911, %v3043, 0.0
        %v3179 = vsel %vm2912, %v3047, 0.0
        %v3180 = vsel %vm2913, %v3043, 0.0
        %v3181 = vsel %vm2914, %v3047, 0.0
        %v3182 = vsel %vm2915, %v3043, 0.0
        %v3183 = vsel %vm2916, %v3047, 0.0
        %v3184 = vsel %vm2917, %v3043, 0.0
        %v3185 = vsel %vm2918, %v3047, 0.0
        %v3186 = vsel %vm2919, %v3043, 0.0
        %v3187 = vsel %vm2920, %v3047, 0.0
        %v3188 = vsel %vm2921, %v3043, 0.0
        %v3189 = vsel %vm2922, %v3047, 0.0
        %v3190 = vsel %vm2923, %v3043, 0.0
        %v3191 = vsel %vm2924, %v3047, 0.0
        %v3192 = vsel %vm2925, %v3043, 0.0
        %v3193 = vsel %vm2926, %v3047, 0.0
        %v3194 = vsel %vm2927, %v3043, 0.0
        %v3195 = vsel %vm2928, %v3047, 0.0
        %v3196 = vsel %vm2929, %v3043, 0.0
        %v3197 = vsel %vm2930, %v3047, 0.0
        %v3198 = vsel %vm2931, %v3043, 0.0
        %v3199 = vsel %vm2932, %v3047, 0.0
        %v3200 = vsel %vm2933, %v3043, 0.0
        %v3201 = vsel %vm2934, %v3047, 0.0
        %v3202 = vsel %vm2935, %v3043, 0.0
        %v3203 = vsel %vm2936, %v3047, 0.0
        %v3204 = vsel %vm2937, %v3043, 0.0
        %v3205 = vsel %vm2938, %v3047, 0.0
        %v3206 = vsel %vm2939, %v3043, 0.0
        %v3207 = vsel %vm2940, %v3047, 0.0
        %v3208 = vsel %vm2941, %v3043, 0.0
        %v3209 = vsel %vm2942, %v3047, 0.0
        %v3210 = vsel %vm2943, %v3043, 0.0
        %v3211 = vsel %vm2944, %v3047, 0.0
        %v3212 = vsel %vm2945, %v3043, 0.0
        %v3213 = vsel %vm2946, %v3047, 0.0
        %v3214 = vsel %vm2947, %v3043, 0.0
        %v3215 = vsel %vm2948, %v3047, 0.0
        %v3216 = vsel %vm2949, %v3043, 0.0
        %v3217 = vsel %vm2950, %v3047, 0.0
        %v3218 = vsel %vm2951, %v3043, 0.0
        %v3219 = vsel %vm2952, %v3047, 0.0
        %v3220 = vsel %vm2953, %v3043, 0.0
        %v3221 = vsel %vm2954, %v3047, 0.0
        %v3222 = vsel %vm2955, %v3043, 0.0
        %v3223 = vsel %vm2956, %v3047, 0.0
        %v3224 = vsel %vm2957, %v3043, 0.0
        %v3225 = vsel %vm2958, %v3047, 0.0
        %v3226 = vsel %vm2959, %v3043, 0.0
        %v3227 = vsel %vm2960, %v3047, 0.0
        %v3228 = vsel %vm2961, %v3043, 0.0
        %v3229 = vsel %vm2962, %v3047, 0.0
        %v3230 = vsel %vm2963, %v3043, 0.0
        %v3231 = vsel %vm2964, %v3047, 0.0
        %v3232 = vsel %vm2965, %v3043, 0.0
        %v3233 = vsel %vm2966, %v3047, 0.0
        %v3234 = vsel %vm2967, %v3043, 0.0
        %v3235 = vsel %vm2968, %v3047, 0.0
        %v3236 = vsel %vm2969, %v3043, 0.0
        %v3237 = vsel %vm2970, %v3047, 0.0
        %v3238 = vsel %vm2971, %v3043, 0.0
        %v3239 = vsel %vm2972, %v3047, 0.0
        %v3240 = vsel %vm2973, %v3043, 0.0
        %v3241 = vsel %vm2974, %v3047, 0.0
        %v3242 = vsel %vm2975, %v3043, 0.0
        %v3243 = vsel %vm2976, %v3047, 0.0
        %v3244 = vsel %vm2977, %v3043, 0.0
        %v3245 = vsel %vm2978, %v3047, 0.0
        %v3246 = vsel %vm2979, %v3043, 0.0
        %v3247 = vsel %vm2980, %v3047, 0.0
        %v3248 = vsel %vm2981, %v3043, 0.0
        %v3249 = vsel %vm2982, %v3047, 0.0
        %v3250 = vsel %vm2983, %v3043, 0.0
        %v3251 = vsel %vm2984, %v3047, 0.0
        %v3252 = vsel %vm2985, %v3043, 0.0
        %v3253 = vsel %vm2986, %v3047, 0.0
        %v3254 = vsel %vm2987, %v3043, 0.0
        %v3255 = vsel %vm2988, %v3047, 0.0
        %v3256 = vsel %vm2989, %v3043, 0.0
        %v3257 = vsel %vm2990, %v3047, 0.0
        %v3258 = vsel %vm2991, %v3043, 0.0
        %v3259 = vsel %vm2992, %v3047, 0.0
        %v3260 = vsel %vm2993, %v3043, 0.0
        %v3261 = vsel %vm2994, %v3047, 0.0
        %v3262 = vsel %vm2995, %v3043, 0.0
        %v3263 = vsel %vm2996, %v3047, 0.0
        %v3264 = vsel %vm2997, %v3043, 0.0
        %v3265 = vsel %vm2998, %v3047, 0.0
        %v3266 = vsel %vm2999, %v3043, 0.0
        %v3267 = vsel %vm3000, %v3047, 0.0
        %v3268 = vsel %vm3001, %v3043, 0.0
        %v3269 = vsel %vm3002, %v3047, 0.0
        %v3270 = vsel %vm3003, %v3043, 0.0
        %v3271 = vsel %vm3004, %v3047, 0.0
        %v3272 = vsel %vm3005, %v3043, 0.0
        %v3273 = vsel %vm3006, %v3047, 0.0
        %v3274 = vsel %vm3007, %v3043, 0.0
        %v3275 = vsel %vm3008, %v3047, 0.0
        %v3276 = vsel %vm3009, %v3043, 0.0
        %v3277 = vsel %vm3010, %v3047, 0.0
        %v3278 = vsel %vm3011, %v3043, 0.0
        %v3279 = vsel %vm3012, %v3047, 0.0
        %v3280 = vsel %vm3013, %v3043, 0.0
        %v3281 = vsel %vm3014, %v3047, 0.0
        %v3282 = vsel %vm3015, %v3043, 0.0
        %v3283 = vsel %vm3016, %v3047, 0.0
        %v3284 = vsel %vm3017, %v3043, 0.0
        %v3285 = vsel %vm3018, %v3047, 0.0
        %v3286 = vsel %vm3019, %v3043, 0.0
        %v3287 = vsel %vm3020, %v3047, 0.0
        %v3288 = vsel %vm3021, %v3043, 0.0
        %v3289 = vsel %vm3022, %v3047, 0.0
        %v3290 = vsel %vm3023, %v3043, 0.0
        %v3291 = vsel %vm3024, %v3047, 0.0
        %v3292 = vsel %vm3025, %v3043, 0.0
        %v3293 = vsel %vm3026, %v3047, 0.0
        %v3294 = vsel %vm3027, %v3043, 0.0
        %v3295 = vsel %vm3028, %v3047, 0.0
        %v3296 = vsel %vm3029, %v3043, 0.0
        %v3297 = vsel %vm3030, %v3047, 0.0
        %v3298 = vsel %vm3031, %v3043, 0.0
        %v3299 = vsel %vm3032, %v3047, 0.0
        %v3300 = vsel %vm3033, %v3043, 0.0
        %v3301 = vsel %vm3034, %v3047, 0.0
        %v3302 = vsel %vm3035, %v3043, 0.0
        %v3303 = vsel %vm3036, %v3047, 0.0
        %v3304 = vsel %vm3037, %v3043, 0.0
        %v3305 = vsel %vm3038, %v3047, 0.0
        %v3306 = vadd.f32 %v2514, %v3050
        %v3307 = vadd.f32 %v2515, %v3051
        %v3308 = vadd.f32 %v2516, %v3052
        %v3309 = vadd.f32 %v2517, %v3053
        %v3310 = vadd.f32 %v2518, %v3054
        %v3311 = vadd.f32 %v2519, %v3055
        %v3312 = vadd.f32 %v2520, %v3056
        %v3313 = vadd.f32 %v2521, %v3057
        %v3314 = vadd.f32 %v2522, %v3058
        %v3315 = vadd.f32 %v2523, %v3059
        %v3316 = vadd.f32 %v2524, %v3060
        %v3317 = vadd.f32 %v2525, %v3061
        %v3318 = vadd.f32 %v2526, %v3062
        %v3319 = vadd.f32 %v2527, %v3063
        %v3320 = vadd.f32 %v2528, %v3064
        %v3321 = vadd.f32 %v2529, %v3065
        %v3322 = vadd.f32 %v2530, %v3066
        %v3323 = vadd.f32 %v2531, %v3067
        %v3324 = vadd.f32 %v2532, %v3068
        %v3325 = vadd.f32 %v2533, %v3069
        %v3326 = vadd.f32 %v2534, %v3070
        %v3327 = vadd.f32 %v2535, %v3071
        %v3328 = vadd.f32 %v2536, %v3072
        %v3329 = vadd.f32 %v2537, %v3073
        %v3330 = vadd.f32 %v2538, %v3074
        %v3331 = vadd.f32 %v2539, %v3075
        %v3332 = vadd.f32 %v2540, %v3076
        %v3333 = vadd.f32 %v2541, %v3077
        %v3334 = vadd.f32 %v2542, %v3078
        %v3335 = vadd.f32 %v2543, %v3079
        %v3336 = vadd.f32 %v2544, %v3080
        %v3337 = vadd.f32 %v2545, %v3081
        %v3338 = vadd.f32 %v2546, %v3082
        %v3339 = vadd.f32 %v2547, %v3083
        %v3340 = vadd.f32 %v2548, %v3084
        %v3341 = vadd.f32 %v2549, %v3085
        %v3342 = vadd.f32 %v2550, %v3086
        %v3343 = vadd.f32 %v2551, %v3087
        %v3344 = vadd.f32 %v2552, %v3088
        %v3345 = vadd.f32 %v2553, %v3089
        %v3346 = vadd.f32 %v2554, %v3090
        %v3347 = vadd.f32 %v2555, %v3091
        %v3348 = vadd.f32 %v2556, %v3092
        %v3349 = vadd.f32 %v2557, %v3093
        %v3350 = vadd.f32 %v2558, %v3094
        %v3351 = vadd.f32 %v2559, %v3095
        %v3352 = vadd.f32 %v2560, %v3096
        %v3353 = vadd.f32 %v2561, %v3097
        %v3354 = vadd.f32 %v2562, %v3098
        %v3355 = vadd.f32 %v2563, %v3099
        %v3356 = vadd.f32 %v2564, %v3100
        %v3357 = vadd.f32 %v2565, %v3101
        %v3358 = vadd.f32 %v2566, %v3102
        %v3359 = vadd.f32 %v2567, %v3103
        %v3360 = vadd.f32 %v2568, %v3104
        %v3361 = vadd.f32 %v2569, %v3105
        %v3362 = vadd.f32 %v2570, %v3106
        %v3363 = vadd.f32 %v2571, %v3107
        %v3364 = vadd.f32 %v2572, %v3108
        %v3365 = vadd.f32 %v2573, %v3109
        %v3366 = vadd.f32 %v2574, %v3110
        %v3367 = vadd.f32 %v2575, %v3111
        %v3368 = vadd.f32 %v2576, %v3112
        %v3369 = vadd.f32 %v2577, %v3113
        %v3370 = vadd.f32 %v2578, %v3114
        %v3371 = vadd.f32 %v2579, %v3115
        %v3372 = vadd.f32 %v2580, %v3116
        %v3373 = vadd.f32 %v2581, %v3117
        %v3374 = vadd.f32 %v2582, %v3118
        %v3375 = vadd.f32 %v2583, %v3119
        %v3376 = vadd.f32 %v2584, %v3120
        %v3377 = vadd.f32 %v2585, %v3121
        %v3378 = vadd.f32 %v2586, %v3122
        %v3379 = vadd.f32 %v2587, %v3123
        %v3380 = vadd.f32 %v2588, %v3124
        %v3381 = vadd.f32 %v2589, %v3125
        %v3382 = vadd.f32 %v2590, %v3126
        %v3383 = vadd.f32 %v2591, %v3127
        %v3384 = vadd.f32 %v2592, %v3128
        %v3385 = vadd.f32 %v2593, %v3129
        %v3386 = vadd.f32 %v2594, %v3130
        %v3387 = vadd.f32 %v2595, %v3131
        %v3388 = vadd.f32 %v2596, %v3132
        %v3389 = vadd.f32 %v2597, %v3133
        %v3390 = vadd.f32 %v2598, %v3134
        %v3391 = vadd.f32 %v2599, %v3135
        %v3392 = vadd.f32 %v2600, %v3136
        %v3393 = vadd.f32 %v2601, %v3137
        %v3394 = vadd.f32 %v2602, %v3138
        %v3395 = vadd.f32 %v2603, %v3139
        %v3396 = vadd.f32 %v2604, %v3140
        %v3397 = vadd.f32 %v2605, %v3141
        %v3398 = vadd.f32 %v2606, %v3142
        %v3399 = vadd.f32 %v2607, %v3143
        %v3400 = vadd.f32 %v2608, %v3144
        %v3401 = vadd.f32 %v2609, %v3145
        %v3402 = vadd.f32 %v2610, %v3146
        %v3403 = vadd.f32 %v2611, %v3147
        %v3404 = vadd.f32 %v2612, %v3148
        %v3405 = vadd.f32 %v2613, %v3149
        %v3406 = vadd.f32 %v2614, %v3150
        %v3407 = vadd.f32 %v2615, %v3151
        %v3408 = vadd.f32 %v2616, %v3152
        %v3409 = vadd.f32 %v2617, %v3153
        %v3410 = vadd.f32 %v2618, %v3154
        %v3411 = vadd.f32 %v2619, %v3155
        %v3412 = vadd.f32 %v2620, %v3156
        %v3413 = vadd.f32 %v2621, %v3157
        %v3414 = vadd.f32 %v2622, %v3158
        %v3415 = vadd.f32 %v2623, %v3159
        %v3416 = vadd.f32 %v2624, %v3160
        %v3417 = vadd.f32 %v2625, %v3161
        %v3418 = vadd.f32 %v2626, %v3162
        %v3419 = vadd.f32 %v2627, %v3163
        %v3420 = vadd.f32 %v2628, %v3164
        %v3421 = vadd.f32 %v2629, %v3165
        %v3422 = vadd.f32 %v2630, %v3166
        %v3423 = vadd.f32 %v2631, %v3167
        %v3424 = vadd.f32 %v2632, %v3168
        %v3425 = vadd.f32 %v2633, %v3169
        %v3426 = vadd.f32 %v2634, %v3170
        %v3427 = vadd.f32 %v2635, %v3171
        %v3428 = vadd.f32 %v2636, %v3172
        %v3429 = vadd.f32 %v2637, %v3173
        %v3430 = vadd.f32 %v2638, %v3174
        %v3431 = vadd.f32 %v2639, %v3175
        %v3432 = vadd.f32 %v2640, %v3176
        %v3433 = vadd.f32 %v2641, %v3177
        %v3434 = vadd.f32 %v2642, %v3178
        %v3435 = vadd.f32 %v2643, %v3179
        %v3436 = vadd.f32 %v2644, %v3180
        %v3437 = vadd.f32 %v2645, %v3181
        %v3438 = vadd.f32 %v2646, %v3182
        %v3439 = vadd.f32 %v2647, %v3183
        %v3440 = vadd.f32 %v2648, %v3184
        %v3441 = vadd.f32 %v2649, %v3185
        %v3442 = vadd.f32 %v2650, %v3186
        %v3443 = vadd.f32 %v2651, %v3187
        %v3444 = vadd.f32 %v2652, %v3188
        %v3445 = vadd.f32 %v2653, %v3189
        %v3446 = vadd.f32 %v2654, %v3190
        %v3447 = vadd.f32 %v2655, %v3191
        %v3448 = vadd.f32 %v2656, %v3192
        %v3449 = vadd.f32 %v2657, %v3193
        %v3450 = vadd.f32 %v2658, %v3194
        %v3451 = vadd.f32 %v2659, %v3195
        %v3452 = vadd.f32 %v2660, %v3196
        %v3453 = vadd.f32 %v2661, %v3197
        %v3454 = vadd.f32 %v2662, %v3198
        %v3455 = vadd.f32 %v2663, %v3199
        %v3456 = vadd.f32 %v2664, %v3200
        %v3457 = vadd.f32 %v2665, %v3201
        %v3458 = vadd.f32 %v2666, %v3202
        %v3459 = vadd.f32 %v2667, %v3203
        %v3460 = vadd.f32 %v2668, %v3204
        %v3461 = vadd.f32 %v2669, %v3205
        %v3462 = vadd.f32 %v2670, %v3206
        %v3463 = vadd.f32 %v2671, %v3207
        %v3464 = vadd.f32 %v2672, %v3208
        %v3465 = vadd.f32 %v2673, %v3209
        %v3466 = vadd.f32 %v2674, %v3210
        %v3467 = vadd.f32 %v2675, %v3211
        %v3468 = vadd.f32 %v2676, %v3212
        %v3469 = vadd.f32 %v2677, %v3213
        %v3470 = vadd.f32 %v2678, %v3214
        %v3471 = vadd.f32 %v2679, %v3215
        %v3472 = vadd.f32 %v2680, %v3216
        %v3473 = vadd.f32 %v2681, %v3217
        %v3474 = vadd.f32 %v2682, %v3218
        %v3475 = vadd.f32 %v2683, %v3219
        %v3476 = vadd.f32 %v2684, %v3220
        %v3477 = vadd.f32 %v2685, %v3221
        %v3478 = vadd.f32 %v2686, %v3222
        %v3479 = vadd.f32 %v2687, %v3223
        %v3480 = vadd.f32 %v2688, %v3224
        %v3481 = vadd.f32 %v2689, %v3225
        %v3482 = vadd.f32 %v2690, %v3226
        %v3483 = vadd.f32 %v2691, %v3227
        %v3484 = vadd.f32 %v2692, %v3228
        %v3485 = vadd.f32 %v2693, %v3229
        %v3486 = vadd.f32 %v2694, %v3230
        %v3487 = vadd.f32 %v2695, %v3231
        %v3488 = vadd.f32 %v2696, %v3232
        %v3489 = vadd.f32 %v2697, %v3233
        %v3490 = vadd.f32 %v2698, %v3234
        %v3491 = vadd.f32 %v2699, %v3235
        %v3492 = vadd.f32 %v2700, %v3236
        %v3493 = vadd.f32 %v2701, %v3237
        %v3494 = vadd.f32 %v2702, %v3238
        %v3495 = vadd.f32 %v2703, %v3239
        %v3496 = vadd.f32 %v2704, %v3240
        %v3497 = vadd.f32 %v2705, %v3241
        %v3498 = vadd.f32 %v2706, %v3242
        %v3499 = vadd.f32 %v2707, %v3243
        %v3500 = vadd.f32 %v2708, %v3244
        %v3501 = vadd.f32 %v2709, %v3245
        %v3502 = vadd.f32 %v2710, %v3246
        %v3503 = vadd.f32 %v2711, %v3247
        %v3504 = vadd.f32 %v2712, %v3248
        %v3505 = vadd.f32 %v2713, %v3249
        %v3506 = vadd.f32 %v2714, %v3250
        %v3507 = vadd.f32 %v2715, %v3251
        %v3508 = vadd.f32 %v2716, %v3252
        %v3509 = vadd.f32 %v2717, %v3253
        %v3510 = vadd.f32 %v2718, %v3254
        %v3511 = vadd.f32 %v2719, %v3255
        %v3512 = vadd.f32 %v2720, %v3256
        %v3513 = vadd.f32 %v2721, %v3257
        %v3514 = vadd.f32 %v2722, %v3258
        %v3515 = vadd.f32 %v2723, %v3259
        %v3516 = vadd.f32 %v2724, %v3260
        %v3517 = vadd.f32 %v2725, %v3261
        %v3518 = vadd.f32 %v2726, %v3262
        %v3519 = vadd.f32 %v2727, %v3263
        %v3520 = vadd.f32 %v2728, %v3264
        %v3521 = vadd.f32 %v2729, %v3265
        %v3522 = vadd.f32 %v2730, %v3266
        %v3523 = vadd.f32 %v2731, %v3267
        %v3524 = vadd.f32 %v2732, %v3268
        %v3525 = vadd.f32 %v2733, %v3269
        %v3526 = vadd.f32 %v2734, %v3270
        %v3527 = vadd.f32 %v2735, %v3271
        %v3528 = vadd.f32 %v2736, %v3272
        %v3529 = vadd.f32 %v2737, %v3273
        %v3530 = vadd.f32 %v2738, %v3274
        %v3531 = vadd.f32 %v2739, %v3275
        %v3532 = vadd.f32 %v2740, %v3276
        %v3533 = vadd.f32 %v2741, %v3277
        %v3534 = vadd.f32 %v2742, %v3278
        %v3535 = vadd.f32 %v2743, %v3279
        %v3536 = vadd.f32 %v2744, %v3280
        %v3537 = vadd.f32 %v2745, %v3281
        %v3538 = vadd.f32 %v2746, %v3282
        %v3539 = vadd.f32 %v2747, %v3283
        %v3540 = vadd.f32 %v2748, %v3284
        %v3541 = vadd.f32 %v2749, %v3285
        %v3542 = vadd.f32 %v2750, %v3286
        %v3543 = vadd.f32 %v2751, %v3287
        %v3544 = vadd.f32 %v2752, %v3288
        %v3545 = vadd.f32 %v2753, %v3289
        %v3546 = vadd.f32 %v2754, %v3290
        %v3547 = vadd.f32 %v2755, %v3291
        %v3548 = vadd.f32 %v2756, %v3292
        %v3549 = vadd.f32 %v2757, %v3293
        %v3550 = vadd.f32 %v2758, %v3294
        %v3551 = vadd.f32 %v2759, %v3295
        %v3552 = vadd.f32 %v2760, %v3296
        %v3553 = vadd.f32 %v2761, %v3297
        %v3554 = vadd.f32 %v2762, %v3298
        %v3555 = vadd.f32 %v2763, %v3299
        %v3556 = vadd.f32 %v2764, %v3300
        %v3557 = vadd.f32 %v2765, %v3301
        %v3558 = vadd.f32 %v2766, %v3302
        %v3559 = vadd.f32 %v2767, %v3303
        %v3560 = vadd.f32 %v2768, %v3304
        %v3561 = vadd.f32 %v2769, %v3305
        %v3562 = vld [vmem:[%s418] sm:$0x77]
        %v3563 = vld [vmem:[%s418 + $0x8] sm:$0x77]
        %v3564 = vld [vmem:[%s418 + $0x10] sm:$0x77]
        %v3565 = vld [vmem:[%s418 + $0x18] sm:$0x77]
        %v3566 = vpack.c.bf16 %v3308, %v3306
        %v3567 = vpack.c.bf16 %v3309, %v3307
        %v3568 = vpack.c.bf16 %v3312, %v3310
        %v3569 = vpack.c.bf16 %v3313, %v3311
        %v3570 = vpack.c.bf16 %v3316, %v3314
        %v3571 = vpack.c.bf16 %v3317, %v3315
        %v3572 = vpack.c.bf16 %v3320, %v3318
        %v3573 = vpack.c.bf16 %v3321, %v3319
        %v3574 = vpack.c.bf16 %v3324, %v3322
        %v3575 = vpack.c.bf16 %v3325, %v3323
        %v3576 = vpack.c.bf16 %v3328, %v3326
        %v3577 = vpack.c.bf16 %v3329, %v3327
        %v3578 = vpack.c.bf16 %v3332, %v3330
        %v3579 = vpack.c.bf16 %v3333, %v3331
        %v3580 = vpack.c.bf16 %v3336, %v3334
        %v3581 = vpack.c.bf16 %v3337, %v3335
        %v3582 = vpack.c.bf16 %v3340, %v3338
        %v3583 = vpack.c.bf16 %v3341, %v3339
        %v3584 = vpack.c.bf16 %v3344, %v3342
        %v3585 = vpack.c.bf16 %v3345, %v3343
        %v3586 = vpack.c.bf16 %v3348, %v3346
        %v3587 = vpack.c.bf16 %v3349, %v3347
        %v3588 = vpack.c.bf16 %v3352, %v3350
        %v3589 = vpack.c.bf16 %v3353, %v3351
        %v3590 = vpack.c.bf16 %v3356, %v3354
        %v3591 = vpack.c.bf16 %v3357, %v3355
        %v3592 = vpack.c.bf16 %v3360, %v3358
        %v3593 = vpack.c.bf16 %v3361, %v3359
        %v3594 = vpack.c.bf16 %v3364, %v3362
        %v3595 = vpack.c.bf16 %v3365, %v3363
        %v3596 = vpack.c.bf16 %v3368, %v3366
        %v3597 = vpack.c.bf16 %v3369, %v3367
        %v3598 = vpack.c.bf16 %v3372, %v3370
        %v3599 = vpack.c.bf16 %v3373, %v3371
        %v3600 = vpack.c.bf16 %v3376, %v3374
        %v3601 = vpack.c.bf16 %v3377, %v3375
        %v3602 = vpack.c.bf16 %v3380, %v3378
        %v3603 = vpack.c.bf16 %v3381, %v3379
        %v3604 = vpack.c.bf16 %v3384, %v3382
        %v3605 = vpack.c.bf16 %v3385, %v3383
        %v3606 = vpack.c.bf16 %v3388, %v3386
        %v3607 = vpack.c.bf16 %v3389, %v3387
        %v3608 = vpack.c.bf16 %v3392, %v3390
        %v3609 = vpack.c.bf16 %v3393, %v3391
        %v3610 = vpack.c.bf16 %v3396, %v3394
        %v3611 = vpack.c.bf16 %v3397, %v3395
        %v3612 = vpack.c.bf16 %v3400, %v3398
        %v3613 = vpack.c.bf16 %v3401, %v3399
        %v3614 = vpack.c.bf16 %v3404, %v3402
        %v3615 = vpack.c.bf16 %v3405, %v3403
        %v3616 = vpack.c.bf16 %v3408, %v3406
        %v3617 = vpack.c.bf16 %v3409, %v3407
        %v3618 = vpack.c.bf16 %v3412, %v3410
        %v3619 = vpack.c.bf16 %v3413, %v3411
        %v3620 = vpack.c.bf16 %v3416, %v3414
        %v3621 = vpack.c.bf16 %v3417, %v3415
        %v3622 = vpack.c.bf16 %v3420, %v3418
        %v3623 = vpack.c.bf16 %v3421, %v3419
        %v3624 = vpack.c.bf16 %v3424, %v3422
        %v3625 = vpack.c.bf16 %v3425, %v3423
        %v3626 = vpack.c.bf16 %v3428, %v3426
        %v3627 = vpack.c.bf16 %v3429, %v3427
        %v3628 = vpack.c.bf16 %v3432, %v3430
        %v3629 = vpack.c.bf16 %v3433, %v3431
        %v3630 = vpack.c.bf16 %v3436, %v3434
        %v3631 = vpack.c.bf16 %v3437, %v3435
        %v3632 = vpack.c.bf16 %v3440, %v3438
        %v3633 = vpack.c.bf16 %v3441, %v3439
        %v3634 = vpack.c.bf16 %v3444, %v3442
        %v3635 = vpack.c.bf16 %v3445, %v3443
        %v3636 = vpack.c.bf16 %v3448, %v3446
        %v3637 = vpack.c.bf16 %v3449, %v3447
        %v3638 = vpack.c.bf16 %v3452, %v3450
        %v3639 = vpack.c.bf16 %v3453, %v3451
        %v3640 = vpack.c.bf16 %v3456, %v3454
        %v3641 = vpack.c.bf16 %v3457, %v3455
        %v3642 = vpack.c.bf16 %v3460, %v3458
        %v3643 = vpack.c.bf16 %v3461, %v3459
        %v3644 = vpack.c.bf16 %v3464, %v3462
        %v3645 = vpack.c.bf16 %v3465, %v3463
        %v3646 = vpack.c.bf16 %v3468, %v3466
        %v3647 = vpack.c.bf16 %v3469, %v3467
        %v3648 = vpack.c.bf16 %v3472, %v3470
        %v3649 = vpack.c.bf16 %v3473, %v3471
        %v3650 = vpack.c.bf16 %v3476, %v3474
        %v3651 = vpack.c.bf16 %v3477, %v3475
        %v3652 = vpack.c.bf16 %v3480, %v3478
        %v3653 = vpack.c.bf16 %v3481, %v3479
        %v3654 = vpack.c.bf16 %v3484, %v3482
        %v3655 = vpack.c.bf16 %v3485, %v3483
        %v3656 = vpack.c.bf16 %v3488, %v3486
        %v3657 = vpack.c.bf16 %v3489, %v3487
        %v3658 = vpack.c.bf16 %v3492, %v3490
        %v3659 = vpack.c.bf16 %v3493, %v3491
        %v3660 = vpack.c.bf16 %v3496, %v3494
        %v3661 = vpack.c.bf16 %v3497, %v3495
        %v3662 = vpack.c.bf16 %v3500, %v3498
        %v3663 = vpack.c.bf16 %v3501, %v3499
        %v3664 = vpack.c.bf16 %v3504, %v3502
        %v3665 = vpack.c.bf16 %v3505, %v3503
        %v3666 = vpack.c.bf16 %v3508, %v3506
        %v3667 = vpack.c.bf16 %v3509, %v3507
        %v3668 = vpack.c.bf16 %v3512, %v3510
        %v3669 = vpack.c.bf16 %v3513, %v3511
        %v3670 = vpack.c.bf16 %v3516, %v3514
        %v3671 = vpack.c.bf16 %v3517, %v3515
        %v3672 = vpack.c.bf16 %v3520, %v3518
        %v3673 = vpack.c.bf16 %v3521, %v3519
        %v3674 = vpack.c.bf16 %v3524, %v3522
        %v3675 = vpack.c.bf16 %v3525, %v3523
        %v3676 = vpack.c.bf16 %v3528, %v3526
        %v3677 = vpack.c.bf16 %v3529, %v3527
        %v3678 = vpack.c.bf16 %v3532, %v3530
        %v3679 = vpack.c.bf16 %v3533, %v3531
        %v3680 = vpack.c.bf16 %v3536, %v3534
        %v3681 = vpack.c.bf16 %v3537, %v3535
        %v3682 = vpack.c.bf16 %v3540, %v3538
        %v3683 = vpack.c.bf16 %v3541, %v3539
        %v3684 = vpack.c.bf16 %v3544, %v3542
        %v3685 = vpack.c.bf16 %v3545, %v3543
        %v3686 = vpack.c.bf16 %v3548, %v3546
        %v3687 = vpack.c.bf16 %v3549, %v3547
        %v3688 = vpack.c.bf16 %v3552, %v3550
        %v3689 = vpack.c.bf16 %v3553, %v3551
        %v3690 = vpack.c.bf16 %v3556, %v3554
        %v3691 = vpack.c.bf16 %v3557, %v3555
        %v3692 = vpack.c.bf16 %v3560, %v3558
        %v3693 = vpack.c.bf16 %v3561, %v3559
        %v3698 = vunpack.c.l.b16 %v3562
        %v3699 = vunpack.c.h.b16 %v3562
        %v3700 = vunpack.c.l.b16 %v3563
        %v3701 = vunpack.c.h.b16 %v3563
        %v3702 = vunpack.c.l.b16 %v3564
        %v3703 = vunpack.c.h.b16 %v3564
        %v3704 = vunpack.c.l.b16 %v3565
        %v3705 = vunpack.c.h.b16 %v3565
        %v3706 = vpack.c.b16 %v3698, %v3698
        %v3707 = vpack.c.b16 %v3699, %v3699
        %v3708 = vpack.c.b16 %v3700, %v3700
        %v3709 = vpack.c.b16 %v3701, %v3701
        %v3710 = vpack.c.b16 %v3702, %v3702
        %v3711 = vpack.c.b16 %v3703, %v3703
        %v3712 = vpack.c.b16 %v3704, %v3704
        %v3713 = vpack.c.b16 %v3705, %v3705
        %3722 = vmatprep.subr.bf16.mxu0 %v3581
        %3723 = vmatpush1.bf16.msra.mxu0 %v3580
        %3724 = vmatprep.subr.bf16.mxu0 %v3579
        %3725 = vmatpush1.bf16.msra.mxu0 %v3578
        %3726 = vmatprep.subr.bf16.mxu0 %v3577
        %3727 = vmatpush1.bf16.msra.mxu0 %v3576
        %3728 = vmatprep.subr.bf16.mxu0 %v3575
        %3729 = vmatpush1.bf16.msra.mxu0 %v3574
        %3730 = vmatprep.subr.bf16.mxu0 %v3573
        %3731 = vmatpush1.bf16.msra.mxu0 %v3572
        %3732 = vmatprep.subr.bf16.mxu0 %v3571
        %3733 = vmatpush1.bf16.msra.mxu0 %v3570
        %3734 = vmatprep.subr.bf16.mxu0 %v3569
        %3735 = vmatpush1.bf16.msra.mxu0 %v3568
        %3736 = vmatprep.subr.bf16.mxu0 %v3567
        %3737 = vmatpush1.bf16.msra.mxu0 %v3566
        %3738 = vmatprep.subr.bf16.mxu0 %v3597
        %3739 = vmatpush2.bf16.msra.mxu0 %v3596
        %3740 = vmatprep.subr.bf16.mxu0 %v3595
        %3741 = vmatpush2.bf16.msra.mxu0 %v3594
        %3742 = vmatprep.subr.bf16.mxu0 %v3593
        %3743 = vmatpush2.bf16.msra.mxu0 %v3592
        %3744 = vmatprep.subr.bf16.mxu0 %v3591
        %3745 = vmatpush2.bf16.msra.mxu0 %v3590
        %3746 = vmatprep.subr.bf16.mxu0 %v3589
        %3747 = vmatpush2.bf16.msra.mxu0 %v3588
        %3748 = vmatprep.subr.bf16.mxu0 %v3587
        %3749 = vmatpush2.bf16.msra.mxu0 %v3586
        %3750 = vmatprep.subr.bf16.mxu0 %v3585
        %3751 = vmatpush2.bf16.msra.mxu0 %v3584
        %3752 = vmatprep.subr.bf16.mxu0 %v3583
        %3753 = vmatpush2.bf16.msra.mxu0 %v3582
        %3754 = vmatprep.mubr.bf16.mxu0 %v3707
        %3755 = vmatmul.mubr.bf16.gmra.mxu0 %v3706
        %v3756 = vpop.f32.mrf.mxu0
        %v3757 = vadd.f32 0.0, %v3756
        %v3758 = vpop.f32.mrf.mxu0
        %v3759 = vadd.f32 0.0, %v3758
        %v3760 = vpop.f32.mrf.mxu0
        %v3761 = vpop.f32.mrf.mxu0
        %3762 = vdwg.mxu0
        %3763 = vmatprep.subr.bf16.mxu0 %v3613
        %3764 = vmatpush1.bf16.msra.mxu0 %v3612
        %3765 = vmatprep.subr.bf16.mxu0 %v3611
        %3766 = vmatpush1.bf16.msra.mxu0 %v3610
        %3767 = vmatprep.subr.bf16.mxu0 %v3609
        %3768 = vmatpush1.bf16.msra.mxu0 %v3608
        %3769 = vmatprep.subr.bf16.mxu0 %v3607
        %3770 = vmatpush1.bf16.msra.mxu0 %v3606
        %3771 = vmatprep.subr.bf16.mxu0 %v3605
        %3772 = vmatpush1.bf16.msra.mxu0 %v3604
        %3773 = vmatprep.subr.bf16.mxu0 %v3603
        %3774 = vmatpush1.bf16.msra.mxu0 %v3602
        %3775 = vmatprep.subr.bf16.mxu0 %v3601
        %3776 = vmatpush1.bf16.msra.mxu0 %v3600
        %3777 = vmatprep.subr.bf16.mxu0 %v3599
        %3778 = vmatpush1.bf16.msra.mxu0 %v3598
        %3779 = vmatprep.subr.bf16.mxu0 %v3629
        %3780 = vmatpush2.bf16.msra.mxu0 %v3628
        %3781 = vmatprep.subr.bf16.mxu0 %v3627
        %3782 = vmatpush2.bf16.msra.mxu0 %v3626
        %3783 = vmatprep.subr.bf16.mxu0 %v3625
        %3784 = vmatpush2.bf16.msra.mxu0 %v3624
        %3785 = vmatprep.subr.bf16.mxu0 %v3623
        %3786 = vmatpush2.bf16.msra.mxu0 %v3622
        %3787 = vmatprep.subr.bf16.mxu0 %v3621
        %3788 = vmatpush2.bf16.msra.mxu0 %v3620
        %3789 = vmatprep.subr.bf16.mxu0 %v3619
        %3790 = vmatpush2.bf16.msra.mxu0 %v3618
        %3791 = vmatprep.subr.bf16.mxu0 %v3617
        %3792 = vmatpush2.bf16.msra.mxu0 %v3616
        %3793 = vmatprep.subr.bf16.mxu0 %v3615
        %3794 = vmatpush2.bf16.msra.mxu0 %v3614
        %3795 = vmatprep.mubr.bf16.mxu0 %v3709
        %3796 = vmatmul.mubr.bf16.gmra.mxu0 %v3708
        %v3797 = vpop.f32.mrf.mxu0
        %v3798 = vadd.f32 %v3757, %v3797
        %v3799 = vpop.f32.mrf.mxu0
        %v3800 = vadd.f32 %v3759, %v3799
        %v3801 = vpop.f32.mrf.mxu0
        %v3802 = vpop.f32.mrf.mxu0
        %3803 = vdwg.mxu0
        %3804 = vmatprep.subr.bf16.mxu0 %v3645
        %3805 = vmatpush1.bf16.msra.mxu0 %v3644
        %3806 = vmatprep.subr.bf16.mxu0 %v3643
        %3807 = vmatpush1.bf16.msra.mxu0 %v3642
        %3808 = vmatprep.subr.bf16.mxu0 %v3641
        %3809 = vmatpush1.bf16.msra.mxu0 %v3640
        %3810 = vmatprep.subr.bf16.mxu0 %v3639
        %3811 = vmatpush1.bf16.msra.mxu0 %v3638
        %3812 = vmatprep.subr.bf16.mxu0 %v3637
        %3813 = vmatpush1.bf16.msra.mxu0 %v3636
        %3814 = vmatprep.subr.bf16.mxu0 %v3635
        %3815 = vmatpush1.bf16.msra.mxu0 %v3634
        %3816 = vmatprep.subr.bf16.mxu0 %v3633
        %3817 = vmatpush1.bf16.msra.mxu0 %v3632
        %3818 = vmatprep.subr.bf16.mxu0 %v3631
        %3819 = vmatpush1.bf16.msra.mxu0 %v3630
        %3820 = vmatprep.subr.bf16.mxu0 %v3661
        %3821 = vmatpush2.bf16.msra.mxu0 %v3660
        %3822 = vmatprep.subr.bf16.mxu0 %v3659
        %3823 = vmatpush2.bf16.msra.mxu0 %v3658
        %3824 = vmatprep.subr.bf16.mxu0 %v3657
        %3825 = vmatpush2.bf16.msra.mxu0 %v3656
        %3826 = vmatprep.subr.bf16.mxu0 %v3655
        %3827 = vmatpush2.bf16.msra.mxu0 %v3654
        %3828 = vmatprep.subr.bf16.mxu0 %v3653
        %3829 = vmatpush2.bf16.msra.mxu0 %v3652
        %3830 = vmatprep.subr.bf16.mxu0 %v3651
        %3831 = vmatpush2.bf16.msra.mxu0 %v3650
        %3832 = vmatprep.subr.bf16.mxu0 %v3649
        %3833 = vmatpush2.bf16.msra.mxu0 %v3648
        %3834 = vmatprep.subr.bf16.mxu0 %v3647
        %3835 = vmatpush2.bf16.msra.mxu0 %v3646
        %3836 = vmatprep.mubr.bf16.mxu0 %v3711
        %3837 = vmatmul.mubr.bf16.gmra.mxu0 %v3710
        %v3838 = vpop.f32.mrf.mxu0
        %v3839 = vadd.f32 %v3798, %v3838
        %v3840 = vpop.f32.mrf.mxu0
        %v3841 = vadd.f32 %v3800, %v3840
        %v3842 = vpop.f32.mrf.mxu0
        %v3843 = vpop.f32.mrf.mxu0
        %3844 = vdwg.mxu0
        %3845 = vmatprep.subr.bf16.mxu0 %v3677
        %3846 = vmatpush1.bf16.msra.mxu0 %v3676
        %3847 = vmatprep.subr.bf16.mxu0 %v3675
        %3848 = vmatpush1.bf16.msra.mxu0 %v3674
        %3849 = vmatprep.subr.bf16.mxu0 %v3673
        %3850 = vmatpush1.bf16.msra.mxu0 %v3672
        %3851 = vmatprep.subr.bf16.mxu0 %v3671
        %3852 = vmatpush1.bf16.msra.mxu0 %v3670
        %3853 = vmatprep.subr.bf16.mxu0 %v3669
        %3854 = vmatpush1.bf16.msra.mxu0 %v3668
        %3855 = vmatprep.subr.bf16.mxu0 %v3667
        %3856 = vmatpush1.bf16.msra.mxu0 %v3666
        %3857 = vmatprep.subr.bf16.mxu0 %v3665
        %3858 = vmatpush1.bf16.msra.mxu0 %v3664
        %3859 = vmatprep.subr.bf16.mxu0 %v3663
        %3860 = vmatpush1.bf16.msra.mxu0 %v3662
        %3861 = vmatprep.subr.bf16.mxu0 %v3693
        %3862 = vmatpush2.bf16.msra.mxu0 %v3692
        %3863 = vmatprep.subr.bf16.mxu0 %v3691
        %3864 = vmatpush2.bf16.msra.mxu0 %v3690
        %3865 = vmatprep.subr.bf16.mxu0 %v3689
        %3866 = vmatpush2.bf16.msra.mxu0 %v3688
        %3867 = vmatprep.subr.bf16.mxu0 %v3687
        %3868 = vmatpush2.bf16.msra.mxu0 %v3686
        %3869 = vmatprep.subr.bf16.mxu0 %v3685
        %3870 = vmatpush2.bf16.msra.mxu0 %v3684
        %3871 = vmatprep.subr.bf16.mxu0 %v3683
        %3872 = vmatpush2.bf16.msra.mxu0 %v3682
        %3873 = vmatprep.subr.bf16.mxu0 %v3681
        %3874 = vmatpush2.bf16.msra.mxu0 %v3680
        %3875 = vmatprep.subr.bf16.mxu0 %v3679
        %3876 = vmatpush2.bf16.msra.mxu0 %v3678
        %3877 = vmatprep.mubr.bf16.mxu0 %v3713
        %3878 = vmatmul.mubr.bf16.gmra.mxu0 %v3712
        %v3879 = vpop.f32.mrf.mxu0
        %v3880 = vadd.f32 %v3839, %v3879
        %v3881 = vpop.f32.mrf.mxu0
        %v3882 = vadd.f32 %v3841, %v3881
        %v3883 = vpop.f32.mrf.mxu0
        %v3884 = vpop.f32.mrf.mxu0
        %3885 = vdwg.mxu0
        %v3886 = vld [vmem:[%s427] ss:$4 sm:$0x3]
        %s3887 = scalar_lea.vmem %s427, 1
        %v3888 = vld [vmem:[%s3887] ss:$4 sm:$0x3]
        %s3889 = scalar_lea.vmem %s427, 2
        %v3890 = vld [vmem:[%s3889] ss:$4 sm:$0x3]
        %v3891 = vmul.f32 %v3886, %v3888
        %v3892 = vmul.f32 %v3886, %v3890
        %v3893 = vmul.f32 %v3888, %v3890
        %v3894 = vmul.f32 %v3886, %v3886
        %v3895 = vmul.f32 %v3888, %v3888
        %v3896 = vsub.f32 %v3894, %v3895
        %v3897 = vmul.f32 %v3890, 3.0
        %v3898 = vmul.f32 %v3897, %v3890
        %v3899 = vsub.f32 %v3898, 1.0
        %v3900 = vld [vmem:[%s436] sm:$0x3]
        %s3901 = smul.u32 %s24, 128
        %s3902 = sld [smem:[#allocation2 + %s3901]]
        %v3903 = vstv %s3902
        %s3904 = sadd.s32 %s3901, 3
        %s3905 = sld [smem:[#allocation2 + %s3904]]
        %v3906 = vstv %s3905
        %v3907 = vmul.f32 %v3886, %v3906
        %v3908 = vadd.f32 %v3903, %v3907
        %s3909 = sadd.s32 %s3901, 6
        %s3910 = sld [smem:[#allocation2 + %s3909]]
        %v3911 = vstv %s3910
        %v3912 = vmul.f32 %v3888, %v3911
        %v3913 = vadd.f32 %v3908, %v3912
        %s3914 = sadd.s32 %s3901, 9
        %s3915 = sld [smem:[#allocation2 + %s3914]]
        %v3916 = vstv %s3915
        %v3917 = vmul.f32 %v3890, %v3916
        %v3918 = vadd.f32 %v3913, %v3917
        %s3919 = sadd.s32 %s3901, 12
        %s3920 = sld [smem:[#allocation2 + %s3919]]
        %v3921 = vstv %s3920
        %v3922 = vmul.f32 %v3891, %v3921
        %v3923 = vadd.f32 %v3918, %v3922
        %s3924 = sadd.s32 %s3901, 15
        %s3925 = sld [smem:[#allocation2 + %s3924]]
        %v3926 = vstv %s3925
        %v3927 = vmul.f32 %v3892, %v3926
        %v3928 = vadd.f32 %v3923, %v3927
        %s3929 = sadd.s32 %s3901, 18
        %s3930 = sld [smem:[#allocation2 + %s3929]]
        %v3931 = vstv %s3930
        %v3932 = vmul.f32 %v3893, %v3931
        %v3933 = vadd.f32 %v3928, %v3932
        %s3934 = sadd.s32 %s3901, 21
        %s3935 = sld [smem:[#allocation2 + %s3934]]
        %v3936 = vstv %s3935
        %v3937 = vmul.f32 %v3896, %v3936
        %v3938 = vadd.f32 %v3933, %v3937
        %s3939 = sadd.s32 %s3901, 24
        %s3940 = sld [smem:[#allocation2 + %s3939]]
        %v3941 = vstv %s3940
        %v3942 = vmul.f32 %v3899, %v3941
        %v3943 = vadd.f32 %v3938, %v3942
        %v3945 = vlaneseq
        %v3946 = vshrl.u32 %v3945, 7
        %v3947 = vsub.s32 0, %v3946
        %v3948 = vrot.slane %v3943, %v3947
        %v3949 = vlaneseq
        %v3950 = vshrl.u32 %v3949, 7
        %v3951 = vsub.s32 1, %v3950
        %v3952 = vrot.slane %v3943, %v3951
        %v3955 = vmul.f32 %v3880, %v3948
        %v3956 = vmul.f32 %v3882, %v3952
        %v3958 = vlaneseq
        %v3959 = vshrl.u32 %v3958, 7
        %v3960 = vsub.s32 0, %v3959
        %v3961 = vrot.slane %v3900, %v3960
        %v3962 = vlaneseq
        %v3963 = vshrl.u32 %v3962, 7
        %v3964 = vsub.s32 1, %v3963
        %v3965 = vrot.slane %v3900, %v3964
        %v3968 = vmul.f32 %v3955, %v3961
        %v3969 = vmul.f32 %v3956, %v3965
        %v3972 = vcombine.low %v3968, %v3969
        %v3974 = vunpack.c.l.s4 1966171168
        %v3975 = vunpack.c.0.s8 %v3974
        %v3976 = vlaneseq
        %v3977 = vshrl.u32 %v3976, 7
        %v3978 = vsub.s32 %v3975, %v3977
        %v3979 = vrot.slane %v3972, %v3978
        %v3981 = vunpack.c.l.s4 1966171168
        %v3982 = vunpack.c.0.s8 %v3981
        %v3983 = vlaneseq
        %v3984 = vshrl.u32 %v3983, 7
        %v3985 = vsub.s32 %v3982, %v3984
        %v3986 = vrot.slane %v3979, %v3985
        %v3988 = vlaneseq
        %vm3989 = vcmp.ge.s32.totalorder %v3988, 0
        %vm3990 = vcmp.lt.s32.totalorder %v3988, 256
        %vm3991 = vmand %vm3989, %vm3990
        %3992 = vst.msk [vmem:[%s446] ss:$4 sm:$0x3] %vm3991, %v3986
        %s3993 = sadd.s32 %s3901, 1
        %s3994 = sld [smem:[#allocation2 + %s3993]]
        %v3995 = vstv %s3994
        %s3996 = sadd.s32 %s3901, 4
        %s3997 = sld [smem:[#allocation2 + %s3996]]
        %v3998 = vstv %s3997
        %v3999 = vmul.f32 %v3886, %v3998
        %v4000 = vadd.f32 %v3995, %v3999
        %s4001 = sadd.s32 %s3901, 7
        %s4002 = sld [smem:[#allocation2 + %s4001]]
        %v4003 = vstv %s4002
        %v4004 = vmul.f32 %v3888, %v4003
        %v4005 = vadd.f32 %v4000, %v4004
        %s4006 = sadd.s32 %s3901, 10
        %s4007 = sld [smem:[#allocation2 + %s4006]]
        %v4008 = vstv %s4007
        %v4009 = vmul.f32 %v3890, %v4008
        %v4010 = vadd.f32 %v4005, %v4009
        %s4011 = sadd.s32 %s3901, 13
        %s4012 = sld [smem:[#allocation2 + %s4011]]
        %v4013 = vstv %s4012
        %v4014 = vmul.f32 %v3891, %v4013
        %v4015 = vadd.f32 %v4010, %v4014
        %s4016 = sadd.s32 %s3901, 16
        %s4017 = sld [smem:[#allocation2 + %s4016]]
        %v4018 = vstv %s4017
        %v4019 = vmul.f32 %v3892, %v4018
        %v4020 = vadd.f32 %v4015, %v4019
        %s4021 = sadd.s32 %s3901, 19
        %s4022 = sld [smem:[#allocation2 + %s4021]]
        %v4023 = vstv %s4022
        %v4024 = vmul.f32 %v3893, %v4023
        %v4025 = vadd.f32 %v4020, %v4024
        %s4026 = sadd.s32 %s3901, 22
        %s4027 = sld [smem:[#allocation2 + %s4026]]
        %v4028 = vstv %s4027
        %v4029 = vmul.f32 %v3896, %v4028
        %v4030 = vadd.f32 %v4025, %v4029
        %s4031 = sadd.s32 %s3901, 25
        %s4032 = sld [smem:[#allocation2 + %s4031]]
        %v4033 = vstv %s4032
        %v4034 = vmul.f32 %v3899, %v4033
        %v4035 = vadd.f32 %v4030, %v4034
        %v4037 = vlaneseq
        %v4038 = vshrl.u32 %v4037, 7
        %v4039 = vsub.s32 0, %v4038
        %v4040 = vrot.slane %v4035, %v4039
        %v4041 = vlaneseq
        %v4042 = vshrl.u32 %v4041, 7
        %v4043 = vsub.s32 1, %v4042
        %v4044 = vrot.slane %v4035, %v4043
        %v4047 = vmul.f32 %v3880, %v4040
        %v4048 = vmul.f32 %v3882, %v4044
        %v4049 = vmul.f32 %v4047, %v3961
        %v4050 = vmul.f32 %v4048, %v3965
        %v4053 = vcombine.low %v4049, %v4050
        %v4055 = vunpack.c.l.s4 1966171168
        %v4056 = vunpack.c.0.s8 %v4055
        %v4057 = vlaneseq
        %v4058 = vshrl.u32 %v4057, 7
        %v4059 = vsub.s32 %v4056, %v4058
        %v4060 = vrot.slane %v4053, %v4059
        %v4061 = vcombine.high %v4060, %v4060
        %v4063 = vunpack.c.l.s4 1966171168
        %v4064 = vunpack.c.0.s8 %v4063
        %v4065 = vlaneseq
        %v4066 = vshrl.u32 %v4065, 7
        %v4067 = vsub.s32 %v4064, %v4066
        %v4068 = vrot.slane %v4061, %v4067
        %s4070 = scalar_lea.vmem %s446, 1
        %4071 = vst.msk [vmem:[%s4070] ss:$4 sm:$0x3] %vm3991, %v4068
        %s4072 = sadd.s32 %s3901, 2
        %s4073 = sld [smem:[#allocation2 + %s4072]]
        %v4074 = vstv %s4073
        %s4075 = sadd.s32 %s3901, 5
        %s4076 = sld [smem:[#allocation2 + %s4075]]
        %v4077 = vstv %s4076
        %v4078 = vmul.f32 %v3886, %v4077
        %v4079 = vadd.f32 %v4074, %v4078
        %s4080 = sadd.s32 %s3901, 8
        %s4081 = sld [smem:[#allocation2 + %s4080]]
        %v4082 = vstv %s4081
        %v4083 = vmul.f32 %v3888, %v4082
        %v4084 = vadd.f32 %v4079, %v4083
        %s4085 = sadd.s32 %s3901, 11
        %s4086 = sld [smem:[#allocation2 + %s4085]]
        %v4087 = vstv %s4086
        %v4088 = vmul.f32 %v3890, %v4087
        %v4089 = vadd.f32 %v4084, %v4088
        %s4090 = sadd.s32 %s3901, 14
        %s4091 = sld [smem:[#allocation2 + %s4090]]
        %v4092 = vstv %s4091
        %v4093 = vmul.f32 %v3891, %v4092
        %v4094 = vadd.f32 %v4089, %v4093
        %s4095 = sadd.s32 %s3901, 17
        %s4096 = sld [smem:[#allocation2 + %s4095]]
        %v4097 = vstv %s4096
        %v4098 = vmul.f32 %v3892, %v4097
        %v4099 = vadd.f32 %v4094, %v4098
        %s4100 = sadd.s32 %s3901, 20
        %s4101 = sld [smem:[#allocation2 + %s4100]]
        %v4102 = vstv %s4101
        %v4103 = vmul.f32 %v3893, %v4102
        %v4104 = vadd.f32 %v4099, %v4103
        %s4105 = sadd.s32 %s3901, 23
        %s4106 = sld [smem:[#allocation2 + %s4105]]
        %v4107 = vstv %s4106
        %v4108 = vmul.f32 %v3896, %v4107
        %v4109 = vadd.f32 %v4104, %v4108
        %s4110 = sadd.s32 %s3901, 26
        %s4111 = sld [smem:[#allocation2 + %s4110]]
        %v4112 = vstv %s4111
        %v4113 = vmul.f32 %v3899, %v4112
        %v4114 = vadd.f32 %v4109, %v4113
        %v4116 = vlaneseq
        %v4117 = vshrl.u32 %v4116, 7
        %v4118 = vsub.s32 0, %v4117
        %v4119 = vrot.slane %v4114, %v4118
        %v4120 = vlaneseq
        %v4121 = vshrl.u32 %v4120, 7
        %v4122 = vsub.s32 1, %v4121
        %v4123 = vrot.slane %v4114, %v4122
        %v4126 = vmul.f32 %v3880, %v4119
        %v4127 = vmul.f32 %v3882, %v4123
        %v4128 = vmul.f32 %v4126, %v3961
        %v4129 = vmul.f32 %v4127, %v3965
        %v4132 = vcombine.low %v4128, %v4129
        %v4134 = vunpack.c.l.s4 1966171168
        %v4135 = vunpack.c.0.s8 %v4134
        %v4136 = vlaneseq
        %v4137 = vshrl.u32 %v4136, 7
        %v4138 = vsub.s32 %v4135, %v4137
        %v4139 = vrot.slane %v4132, %v4138
        %v4141 = vunpack.c.l.s4 1966171168
        %v4142 = vunpack.c.0.s8 %v4141
        %v4143 = vlaneseq
        %v4144 = vshrl.u32 %v4143, 7
        %v4145 = vsub.s32 %v4142, %v4144
        %v4146 = vrot.slane %v4139, %v4145
        %v4147 = vcombine.high %v4146, %v4146
        %s4149 = scalar_lea.vmem %s446, 2
        %4150 = vst.msk [vmem:[%s4149] ss:$4 sm:$0x3] %vm3991, %v4147
        %v4153 = vcombine.low %v3880, %v3882
        %4155 = vst [vmem:[%s456] sm:$0x77] %v4153
        %v4156 = vmul.f32 %v3880, %v3961
        %v4157 = vmul.f32 %v3882, %v3965
        %vm4158 = vcmp.gt.f32.partialorder %v4156, 0.0
        %vm4159 = vcmp.gt.f32.partialorder %v4157, 0.0
        %v4160 = vsel %vm4158, 1, 0
        %v4161 = vsel %vm4159, 1, 0
        %v4162 = vcvt.s32.f32 %v4160
        %v4163 = vcvt.s32.f32 %v4161
        %v4166 = vcombine.low %v4162, %v4163
        %v4167 = vcombine.high %v4162, %v4163
        %vm4168 = vcmask 1040384
        %vm4169 = vcmask 1044484
        %vm4170 = vmor %vm4168, %vm4169
        %v4171 = vrot.slane %v4166, 7
        %v4172 = vrot.slane %v4171, 4
        %v4173 = vrot.slane %v4167, 7
        %v4174 = vsel %vm4170, %v4172, %v4173
        %4176 = vst [vmem:[%s466] sm:$0x77] %v4174
        %s4177 = smul.u32 2, %s25
        %p4178 = scmp.lt.s32.totalorder %s24, 1
        %s4179 = scalar_select %p4178, %s24, 1
        %p4180 = scmp.lt.s32.totalorder %s4177, 1
        %s4181 = scalar_select %p4180, %s4177, 1
        %s4182 = smul.addr %s4179, 2
        %s4183 = sadd.s32 %s4181, %s4182
        %s4184 = smul.addr %s4183, 4
        %s4185 = scalar_lea.vmem %s5, %s4184
        %s4186 = smul.u32 2, %s25
        %p4187 = scmp.lt.s32.totalorder %s24, 1
        %s4188 = scalar_select %p4187, %s24, 1
        %p4189 = scmp.lt.s32.totalorder %s4186, 1
        %s4190 = scalar_select %p4189, %s4186, 1
        %s4191 = smul.addr %s4188, 2
        %s4192 = sadd.s32 %s4190, %s4191
        %s4193 = smul.addr %s4192, 4
        %s4194 = scalar_lea.vmem %s6, %s4193
        %s4195 = smul.u32 2, %s25
        %p4196 = scmp.lt.s32.totalorder %s24, 1
        %s4197 = scalar_select %p4196, %s24, 1
        %p4198 = scmp.lt.s32.totalorder %s4195, 1
        %s4199 = scalar_select %p4198, %s4195, 1
        %s4200 = smul.addr %s4197, 2
        %s4201 = sadd.s32 %s4199, %s4200
        %s4202 = smul.addr %s4201, 4
        %s4203 = scalar_lea.vmem %s7, %s4202
        // Predicated region
        $region45: #{tpu_custom_call.1} parent=39 // pred_check
          %p4204 = pneg %p183
        $region46: #{tpu_custom_call.1} parent=39 // pred_check_branch
          %4206 = sbr.rel (%p4204) target = $region48
        $region47: #{tpu_custom_call.1} parent=39 // pred_region
          %s4207 = smul.u32 2, %s25
        $region48: #{tpu_custom_call.1} parent=39 // pred_fallthru
          _
        // Predicated region
        $region49: #{tpu_custom_call.1} parent=39 // pred_check
          %p4208 = pneg %p211
        $region50: #{tpu_custom_call.1} parent=39 // pred_check_branch
          %4210 = sbr.rel (%p4208) target = $region52
        $region51: #{tpu_custom_call.1} parent=39 // pred_region
          %s4211 = smul.u32 2, %s25
        $region52: #{tpu_custom_call.1} parent=39 // pred_fallthru
          _
        // Predicated region
        $region53: #{tpu_custom_call.1} parent=39 // pred_check
          %p4212 = pneg %p239
        $region54: #{tpu_custom_call.1} parent=39 // pred_check_branch
          %4214 = sbr.rel (%p4212) target = $region56
        $region55: #{tpu_custom_call.1} parent=39 // pred_region
          %s4215 = smul.u32 2, %s25
        $region56: #{tpu_custom_call.1} parent=39 // pred_fallthru
          _
      $region40: #{tpu_custom_call.1} parent=5 // pred_fallthru
        _
      %p4216 = scmp.le.s32.totalorder 2, %s15
      // Predicated region
      $region57: #{tpu_custom_call.1} parent=5 // pred_check
        %p4217 = pneg %p4216
      $region58: #{tpu_custom_call.1} parent=5 // pred_check_branch
        %4219 = sbr.rel (%p4217) target = $region60
      $region59: #{tpu_custom_call.1} parent=5 // pred_region
        %s4220 = ssub.s32 %s15, 2
        // Predicated region
        $region61: #{tpu_custom_call.1} parent=59 // pred_check
          %p4221 = pneg %p189
        $region62: #{tpu_custom_call.1} parent=59 // pred_check_branch
          %4223 = sbr.rel (%p4221) target = $region64
        $region63: #{tpu_custom_call.1} parent=59 // pred_region
          %s4224 = smul.u32 2, %s27
          %p4225 = scmp.lt.s32.totalorder %s26, 1
          %s4226 = scalar_select %p4225, %s26, 1
          %p4227 = scmp.lt.s32.totalorder %s4224, 1
          %s4228 = scalar_select %p4227, %s4224, 1
          %s4229 = smul.addr %s4226, 2
          %s4230 = sadd.s32 %s4228, %s4229
          %s4231 = smul.addr %s4230, 4
          %s4232 = scalar_lea.vmem %s5, %s4231
        $region64: #{tpu_custom_call.1} parent=59 // pred_fallthru
          _
        // Predicated region
        $region65: #{tpu_custom_call.1} parent=59 // pred_check
          %p4233 = pneg %p217
        $region66: #{tpu_custom_call.1} parent=59 // pred_check_branch
          %4235 = sbr.rel (%p4233) target = $region68
        $region67: #{tpu_custom_call.1} parent=59 // pred_region
          %s4236 = smul.u32 2, %s27
          %p4237 = scmp.lt.s32.totalorder %s26, 1
          %s4238 = scalar_select %p4237, %s26, 1
          %p4239 = scmp.lt.s32.totalorder %s4236, 1
          %s4240 = scalar_select %p4239, %s4236, 1
          %s4241 = smul.addr %s4238, 2
          %s4242 = sadd.s32 %s4240, %s4241
          %s4243 = smul.addr %s4242, 4
          %s4244 = scalar_lea.vmem %s6, %s4243
        $region68: #{tpu_custom_call.1} parent=59 // pred_fallthru
          _
        // Predicated region
        $region69: #{tpu_custom_call.1} parent=59 // pred_check
          %p4245 = pneg %p245
        $region70: #{tpu_custom_call.1} parent=59 // pred_check_branch
          %4247 = sbr.rel (%p4245) target = $region72
        $region71: #{tpu_custom_call.1} parent=59 // pred_region
          %s4248 = smul.u32 2, %s27
          %p4249 = scmp.lt.s32.totalorder %s26, 1
          %s4250 = scalar_select %p4249, %s26, 1
          %p4251 = scmp.lt.s32.totalorder %s4248, 1
          %s4252 = scalar_select %p4251, %s4248, 1
          %s4253 = smul.addr %s4250, 2
          %s4254 = sadd.s32 %s4252, %s4253
          %s4255 = smul.addr %s4254, 4
          %s4256 = scalar_lea.vmem %s7, %s4255
        $region72: #{tpu_custom_call.1} parent=59 // pred_fallthru
          _
      $region60: #{tpu_custom_call.1} parent=5 // pred_fallthru
        _
    $region6: #{tpu_custom_call.1} parent=1 // loop_footer
      %s19 = sadd.s32 1, %s15
    $region7: #{tpu_custom_call.1} parent=1 // loop_footer_branch
      %14 = sbr.rel target = $region3
    $region8: #{tpu_custom_call.1} parent=1 // loop_exit
      _
    %4257 = vsyncpa [#allocation3], 1
    %s4258 = scalar_lea.sflag [#allocation3], 1
    %4259 = vsyncpa %s4258, 1

</llo_original>
